<compile_context>
chip_gen: v6e
topology: v6e:2x2x1
jax: 0.10.0
libtpu: 0.0.40
codegen_flags: <defaults>
</compile_context>

<pallas_src>
import math

import numpy as np

import jax
import jax.numpy as jnp
from jax.experimental import pallas as pl
from jax.experimental.pallas import tpu as pltpu


# ---------------------------------------------------------------------------
# Fused LeNet kernel (single pallas_call, everything resident in VMEM/vregs)
# ---------------------------------------------------------------------------
def _lenet_kernel(xeo_ref, w1e_ref, w1o_ref, b1_ref, w2e_ref, w2o_ref, b2_ref,
                  w3_ref, b3_ref, w4_ref, b4_ref, out_ref):
    f32, bf16 = jnp.float32, jnp.bfloat16
    tb = xeo_ref.shape[1]                       # batch tile

    # (2, tb, 18, 28) f32: plane 0 = even input rows, plane 1 = odd input rows,
    # rows v >= 14 are zero padding (their conv outputs are never consumed).
    x = xeo_ref[...]

    # ---- conv1 + ReLU + pool1: 4 pooling-phase GEMMs (K=140), streamed max ----
    def conv1_lhs(p):                           # p = output-row parity of the pool window
        parts = []
        for i in range(5):                      # filter row tap: input row = 2Y + p + i
            src = (p + i) % 2                   # even/odd input-row plane
            off = (p + i) // 2
            parts.append(x[src, :, off:off + 16, :])          # (tb, 16, 28)
        # rows (b, Y) with Y in 0..15 (Y >= 12 junk); lanes (i, w_in) = 5*28
        return jnp.concatenate(parts, axis=-1).reshape(tb * 16, 140).astype(bf16)

    acc1 = None
    for p in range(2):                          # output-row parity
        lhs = conv1_lhs(p)
        for w_ref in (w1e_ref, w1o_ref):        # output-column parity
            a = jnp.dot(lhs, w_ref[...], preferred_element_type=f32)
            acc1 = a if acc1 is None else jnp.maximum(acc1, a)
    # acc1: (tb*16, 240) f32 = max over the 2x2 pool window of raw conv1;
    # rows (b, Y), lanes (x, c) with x in 0..11, c in 0..19.
    pooled1 = jnp.maximum(acc1 + b1_ref[...], 0.0).reshape(tb, 16, 240)

    # ---- conv2 + ReLU + width-pool: lane-concatenated slab, 2 GEMMs (K=1200) ----
    # slab rows (b, oh in 0..7); lanes (i, x, c).  Row windows i..i+7 <= 11, so
    # the junk rows Y >= 12 of pooled1 are never read.
    lhs2 = jnp.concatenate([pooled1[:, i:i + 8, :] for i in range(5)], axis=-1)
    lhs2 = lhs2.reshape(tb * 8, 1200).astype(bf16)
    a2e = jnp.dot(lhs2, w2e_ref[...], preferred_element_type=f32)
    a2o = jnp.dot(lhs2, w2o_ref[...], preferred_element_type=f32)
    # max over output-column parity = width half of pool2; lanes (x2, oc).
    wp2 = jnp.maximum(jnp.maximum(a2e, a2o) + b2_ref[...], 0.0).reshape(tb, 8, 200)

    # ---- height half of pool2 + fc1 as ONE (tb,800)x(800,500) GEMM ----
    pcat = jnp.concatenate(
        [jnp.maximum(wp2[:, 2 * k, :], wp2[:, 2 * k + 1, :]) for k in range(4)],
        axis=-1)                                               # (tb, 800), lanes (y2, x2, oc)
    h = jnp.maximum(
        jnp.dot(pcat.astype(bf16), w3_ref[...], preferred_element_type=f32)
        + b3_ref[...], 0.0)                                    # (tb, 500)

    # ---- fc2 ----
    out_ref[...] = (jnp.dot(h.astype(bf16), w4_ref[...], preferred_element_type=f32)
                    + b4_ref[...])


# ---------------------------------------------------------------------------
# One-time parameter re-layout (kernel-friendly, bf16 MXU operands)
# ---------------------------------------------------------------------------
def prepare_params(params):
    w1 = np.asarray(params["conv1_w"], np.float32)   # (20, 1, 5, 5)
    b1 = np.asarray(params["conv1_b"], np.float32)   # (20,)
    w2 = np.asarray(params["conv2_w"], np.float32)   # (50, 20, 5, 5)
    b2 = np.asarray(params["conv2_b"], np.float32)   # (50,)
    w3 = np.asarray(params["fc1_w"], np.float32)     # (500, 800)
    b3 = np.asarray(params["fc1_b"], np.float32)     # (500,)
    w4 = np.asarray(params["fc2_w"], np.float32)     # (10, 500)
    b4 = np.asarray(params["fc2_b"], np.float32)     # (10,)

    # conv1 as a width-structured GEMM, one weight matrix per pooled output
    # column parity q: rows = (filter row i, input column w_in) = 5*28,
    # columns = (pooled output column x in 0..11, out channel c) = 12*20.
    W1 = np.zeros((2, 140, 240), np.float32)
    for q in range(2):
        for xx in range(12):
            ow = 2 * xx + q
            for i in range(5):
                for j in range(5):
                    W1[q, i * 28 + ow + j, xx * 20:(xx + 1) * 20] = w1[:, 0, i, j]

    # conv2 slab weights: rows = (filter row i, pooled1 column xin, in chan cin)
    # = 5*12*20 = 1200, columns = (pooled2 column x2 in 0..3, out chan oc) = 200.
    W2 = np.zeros((2, 1200, 200), np.float32)
    for q in range(2):
        for x2 in range(4):
            ow = 2 * x2 + q
            for i in range(5):
                for j in range(5):
                    r0 = i * 240 + (ow + j) * 20
                    W2[q, r0:r0 + 20, x2 * 50:(x2 + 1) * 50] = w2[:, :, i, j].T

    # fc1: rows reordered to (y2, x2, cin) to match the kernel's pool2 concat.
    W3 = w3.reshape(500, 50, 4, 4).transpose(2, 3, 1, 0).reshape(800, 500)

    bf = jnp.bfloat16
    return {
        "w1e": jnp.asarray(W1[0], bf), "w1o": jnp.asarray(W1[1], bf),
        "b1": jnp.asarray(np.tile(b1, 12).reshape(1, 240), jnp.float32),
        "w2e": jnp.asarray(W2[0], bf), "w2o": jnp.asarray(W2[1], bf),
        "b2": jnp.asarray(np.tile(b2, 4).reshape(1, 200), jnp.float32),
        "w3": jnp.asarray(W3, bf),
        "b3": jnp.asarray(b3.reshape(1, 500), jnp.float32),
        "w4": jnp.asarray(w4.T, bf),
        "b4": jnp.asarray(b4.reshape(1, 10), jnp.float32),
    }


# ---------------------------------------------------------------------------
# Forward pass
# ---------------------------------------------------------------------------
def _pick_batch_tile(b):
    if b <= 8:
        return b
    for t in (256, 128, 64, 32, 16, 8):   # tiles > 8 must be sublane-friendly
        if b % t == 0:
            return t
    return b


def lenet_forward(x, prep):
    """x: (B, 1, 28, 28) float32 -> logits (B, 10) float32."""
    B, C, H, W = x.shape
    assert (C, H, W) == (1, 28, 28)
    tb = _pick_batch_tile(B)
    assert B % tb == 0
    nb = B // tb

    # Cheap, non-redundant input relayout: de-interleave even/odd rows so every
    # conv1 pooling-phase LHS is built in-kernel from CONTIGUOUS row windows
    # (no stride-2 access).  Pad 14 -> 18 rows (zeros) so all in-kernel row
    # blocks are 16 rows (sublane-tile aligned); padded-row outputs are junk
    # and never consumed downstream.
    xeo = x[:, 0].reshape(B, 14, 2, 28).transpose(2, 0, 1, 3)   # (2, B, 14, 28)
    xeo = jnp.pad(xeo, ((0, 0), (0, 0), (0, 4), (0, 0)))        # (2, B, 18, 28)

    args = (xeo, prep["w1e"], prep["w1o"], prep["b1"],
            prep["w2e"], prep["w2o"], prep["b2"],
            prep["w3"], prep["b3"], prep["w4"], prep["b4"])

    def full(a):  # parameters: same block every grid step -> not re-fetched
        nd = a.ndim
        return pl.BlockSpec(a.shape, lambda ib, nd=nd: (0,) * nd)

    in_specs = [pl.BlockSpec((2, tb, 18, 28), lambda ib: (0, ib, 0, 0))]
    in_specs += [full(a) for a in args[1:]]

    return pl.pallas_call(
        _lenet_kernel,
        out_shape=jax.ShapeDtypeStruct((B, 10), jnp.float32),
        grid=(nb,),
        in_specs=in_specs,
        out_specs=pl.BlockSpec((tb, 10), lambda ib: (ib, 0)),
        compiler_params=pltpu.CompilerParams(
            dimension_semantics=("parallel",)),
    )(*args)


# ---------------------------------------------------------------------------
# Pure-JAX reference (matches the PyTorch module) for a correctness check
# ---------------------------------------------------------------------------
def lenet_reference(x, params):
    dn = ("NCHW", "OIHW", "NCHW")
    hp = jax.lax.Precision.HIGHEST
    y = jax.lax.conv_general_dilated(x, params["conv1_w"], (1, 1), "VALID",
                                     dimension_numbers=dn, precision=hp)
    y = jnp.maximum(y + params["conv1_b"].reshape(1, 20, 1, 1), 0.0)
    y = jax.lax.reduce_window(y, -jnp.inf, jax.lax.max,
                              (1, 1, 2, 2), (1, 1, 2, 2), "VALID")
    y = jax.lax.conv_general_dilated(y, params["conv2_w"], (1, 1), "VALID",
                                     dimension_numbers=dn, precision=hp)
    y = jnp.maximum(y + params["conv2_b"].reshape(1, 50, 1, 1), 0.0)
    y = jax.lax.reduce_window(y, -jnp.inf, jax.lax.max,
                              (1, 1, 2, 2), (1, 1, 2, 2), "VALID")
    y = y.reshape(y.shape[0], -1)                                # (B, 800), (c,y,x) order
    y = jnp.maximum(jnp.dot(y, params["fc1_w"].T, precision=hp)
                    + params["fc1_b"], 0.0)
    return jnp.dot(y, params["fc2_w"].T, precision=hp) + params["fc2_b"]


# ---------------------------------------------------------------------------
# Deterministic parameter init (shapes / init scheme match the PyTorch module)
# ---------------------------------------------------------------------------
def init_params(key):
    gain = 10.0
    ks = jax.random.split(key, 8)

    def xavier_uniform(k, shape, fan_in, fan_out, g):
        bound = g * math.sqrt(6.0 / (fan_in + fan_out))
        return jax.random.uniform(k, shape, jnp.float32, -bound, bound)

    def default_uniform(k, shape, fan_in):
        bound = 1.0 / math.sqrt(fan_in)
        return jax.random.uniform(k, shape, jnp.float32, -bound, bound)

    return {
        "conv1_w": xavier_uniform(ks[0], (20, 1, 5, 5), 1 * 25, 20 * 25, gain),
        "conv1_b": default_uniform(ks[1], (20,), 1 * 25),
        "conv2_w": default_uniform(ks[2], (50, 20, 5, 5), 20 * 25),
        "conv2_b": default_uniform(ks[3], (50,), 20 * 25),
        "fc1_w": default_uniform(ks[4], (500, 800), 800),
        "fc1_b": default_uniform(ks[5], (500,), 800),
        "fc2_w": default_uniform(ks[6], (10, 500), 500),
        "fc2_b": default_uniform(ks[7], (10,), 500),
    }


# ---------------------------------------------------------------------------
if __name__ == "__main__":
    key = jax.random.PRNGKey(0)
    k_param, k_x = jax.random.split(key)

    params = init_params(k_param)
    prep = prepare_params(params)                  # one-time weight re-layout
    # MNIST-style input: batch=2, 1 channel, 28x28 (required by fc1 = 4*4*50)
    x = jax.random.normal(k_x, (2, 1, 28, 28), jnp.float32)

    fwd = jax.jit(lenet_forward)
    out = jax.block_until_ready(fwd(x, prep))
    assert out.shape == (2, 10) and out.dtype == jnp.float32
    assert bool(jnp.all(jnp.isfinite(out)))

    # bf16 MXU operands -> ~1e-2 relative vs the f32 reference (intentional).
    ref = lenet_reference(x, params)
    assert bool(jnp.allclose(out, ref, rtol=1e-1, atol=2e-1)), (
        "max abs err %.4f" % float(jnp.max(jnp.abs(out - ref))))

    print("KERNEL_OK")
</pallas_src>

<mosaic_0001>
module attributes {stable_mosaic.version = 11 : i64} {
  func.func @_lenet_kernel(%arg0: i32, %arg1: memref<2x2x18x28xf32, #tpu.memory_space<vmem>>, %arg2: memref<140x240xbf16, #tpu.memory_space<vmem>>, %arg3: memref<140x240xbf16, #tpu.memory_space<vmem>>, %arg4: memref<1x240xf32, #tpu.memory_space<vmem>>, %arg5: memref<1200x200xbf16, #tpu.memory_space<vmem>>, %arg6: memref<1200x200xbf16, #tpu.memory_space<vmem>>, %arg7: memref<1x200xf32, #tpu.memory_space<vmem>>, %arg8: memref<800x500xbf16, #tpu.memory_space<vmem>>, %arg9: memref<1x500xf32, #tpu.memory_space<vmem>>, %arg10: memref<500x10xbf16, #tpu.memory_space<vmem>>, %arg11: memref<1x10xf32, #tpu.memory_space<vmem>>, %arg12: memref<2x10xf32, #tpu.memory_space<vmem>>) attributes {dimension_semantics = [#tpu.dimension_semantics<parallel>], iteration_bounds = array<i64: 1>, scalar_prefetch = 0 : i64, scratch_operands = 0 : i64, tpu.core_type = #tpu.core_type<tc>, window_params = [{transform_indices = @transform_0, window_bounds = array<i64: 2, 2, 18, 28>}, {pipeline_mode = #tpu.pipeline_mode<synchronous>, transform_indices = @transform_1, window_bounds = array<i64: 140, 240>}, {pipeline_mode = #tpu.pipeline_mode<synchronous>, transform_indices = @transform_2, window_bounds = array<i64: 140, 240>}, {pipeline_mode = #tpu.pipeline_mode<synchronous>, transform_indices = @transform_3, window_bounds = array<i64: 1, 240>}, {pipeline_mode = #tpu.pipeline_mode<synchronous>, transform_indices = @transform_4, window_bounds = array<i64: 1200, 200>}, {pipeline_mode = #tpu.pipeline_mode<synchronous>, transform_indices = @transform_5, window_bounds = array<i64: 1200, 200>}, {pipeline_mode = #tpu.pipeline_mode<synchronous>, transform_indices = @transform_6, window_bounds = array<i64: 1, 200>}, {pipeline_mode = #tpu.pipeline_mode<synchronous>, transform_indices = @transform_7, window_bounds = array<i64: 800, 500>}, {pipeline_mode = #tpu.pipeline_mode<synchronous>, transform_indices = @transform_8, window_bounds = array<i64: 1, 500>}, {pipeline_mode = #tpu.pipeline_mode<synchronous>, transform_indices = @transform_9, window_bounds = array<i64: 500, 10>}, {pipeline_mode = #tpu.pipeline_mode<synchronous>, transform_indices = @transform_10, window_bounds = array<i64: 1, 10>}, {transform_indices = @transform_11, window_bounds = array<i64: 2, 10>}]} {
    %c0 = arith.constant 0 : index
    %c0_0 = arith.constant 0 : index
    %c0_1 = arith.constant 0 : index
    %c0_2 = arith.constant 0 : index
    %0 = vector.load %arg1[%c0, %c0_0, %c0_1, %c0_2] : memref<2x2x18x28xf32, #tpu.memory_space<vmem>>, vector<2x2x18x28xf32>
    %1 = vector.extract_strided_slice %0 {offsets = [0, 0, 0, 0], sizes = [1, 2, 16, 28], strides = [1, 1, 1, 1]} : vector<2x2x18x28xf32> to vector<1x2x16x28xf32>
    %2 = vector.shape_cast %1 : vector<1x2x16x28xf32> to vector<2x16x28xf32>
    %3 = vector.extract_strided_slice %0 {offsets = [1, 0, 0, 0], sizes = [1, 2, 16, 28], strides = [1, 1, 1, 1]} : vector<2x2x18x28xf32> to vector<1x2x16x28xf32>
    %4 = vector.shape_cast %3 : vector<1x2x16x28xf32> to vector<2x16x28xf32>
    %5 = vector.extract_strided_slice %0 {offsets = [0, 0, 1, 0], sizes = [1, 2, 16, 28], strides = [1, 1, 1, 1]} : vector<2x2x18x28xf32> to vector<1x2x16x28xf32>
    %6 = vector.shape_cast %5 : vector<1x2x16x28xf32> to vector<2x16x28xf32>
    %7 = vector.extract_strided_slice %0 {offsets = [1, 0, 1, 0], sizes = [1, 2, 16, 28], strides = [1, 1, 1, 1]} : vector<2x2x18x28xf32> to vector<1x2x16x28xf32>
    %8 = vector.shape_cast %7 : vector<1x2x16x28xf32> to vector<2x16x28xf32>
    %9 = vector.extract_strided_slice %0 {offsets = [0, 0, 2, 0], sizes = [1, 2, 16, 28], strides = [1, 1, 1, 1]} : vector<2x2x18x28xf32> to vector<1x2x16x28xf32>
    %10 = vector.shape_cast %9 : vector<1x2x16x28xf32> to vector<2x16x28xf32>
    %11 = tpu.concatenate %2, %4, %6, %8, %10 in 2 : vector<2x16x28xf32>, vector<2x16x28xf32>, vector<2x16x28xf32>, vector<2x16x28xf32>, vector<2x16x28xf32> -> vector<2x16x140xf32>
    %12 = vector.shape_cast %11 : vector<2x16x140xf32> to vector<32x140xf32>
    %13 = arith.truncf %12 : vector<32x140xf32> to vector<32x140xbf16>
    %c0_3 = arith.constant 0 : index
    %c0_4 = arith.constant 0 : index
    %14 = vector.load %arg2[%c0_3, %c0_4] : memref<140x240xbf16, #tpu.memory_space<vmem>>, vector<140x240xbf16>
    %cst = arith.constant dense<0.000000e+00> : vector<32x240xf32>
    %15 = tpu.matmul %13, %14, %cst {dimension_numbers = #tpu.dot_dimension_numbers<[1], [0], [0], [1], [0, 0, 1, 1], [], []>} : vector<32x140xbf16>, vector<140x240xbf16>, vector<32x240xf32> -> vector<32x240xf32>
    %c0_5 = arith.constant 0 : index
    %c0_6 = arith.constant 0 : index
    %16 = vector.load %arg3[%c0_5, %c0_6] : memref<140x240xbf16, #tpu.memory_space<vmem>>, vector<140x240xbf16>
    %cst_7 = arith.constant dense<0.000000e+00> : vector<32x240xf32>
    %17 = tpu.matmul %13, %16, %cst_7 {dimension_numbers = #tpu.dot_dimension_numbers<[1], [0], [0], [1], [0, 0, 1, 1], [], []>} : vector<32x140xbf16>, vector<140x240xbf16>, vector<32x240xf32> -> vector<32x240xf32>
    %18 = arith.maximumf %15, %17 : vector<32x240xf32>
    %19 = vector.extract_strided_slice %0 {offsets = [1, 0, 0, 0], sizes = [1, 2, 16, 28], strides = [1, 1, 1, 1]} : vector<2x2x18x28xf32> to vector<1x2x16x28xf32>
    %20 = vector.shape_cast %19 : vector<1x2x16x28xf32> to vector<2x16x28xf32>
    %21 = vector.extract_strided_slice %0 {offsets = [0, 0, 1, 0], sizes = [1, 2, 16, 28], strides = [1, 1, 1, 1]} : vector<2x2x18x28xf32> to vector<1x2x16x28xf32>
    %22 = vector.shape_cast %21 : vector<1x2x16x28xf32> to vector<2x16x28xf32>
    %23 = vector.extract_strided_slice %0 {offsets = [1, 0, 1, 0], sizes = [1, 2, 16, 28], strides = [1, 1, 1, 1]} : vector<2x2x18x28xf32> to vector<1x2x16x28xf32>
    %24 = vector.shape_cast %23 : vector<1x2x16x28xf32> to vector<2x16x28xf32>
    %25 = vector.extract_strided_slice %0 {offsets = [0, 0, 2, 0], sizes = [1, 2, 16, 28], strides = [1, 1, 1, 1]} : vector<2x2x18x28xf32> to vector<1x2x16x28xf32>
    %26 = vector.shape_cast %25 : vector<1x2x16x28xf32> to vector<2x16x28xf32>
    %27 = vector.extract_strided_slice %0 {offsets = [1, 0, 2, 0], sizes = [1, 2, 16, 28], strides = [1, 1, 1, 1]} : vector<2x2x18x28xf32> to vector<1x2x16x28xf32>
    %28 = vector.shape_cast %27 : vector<1x2x16x28xf32> to vector<2x16x28xf32>
    %29 = tpu.concatenate %20, %22, %24, %26, %28 in 2 : vector<2x16x28xf32>, vector<2x16x28xf32>, vector<2x16x28xf32>, vector<2x16x28xf32>, vector<2x16x28xf32> -> vector<2x16x140xf32>
    %30 = vector.shape_cast %29 : vector<2x16x140xf32> to vector<32x140xf32>
    %31 = arith.truncf %30 : vector<32x140xf32> to vector<32x140xbf16>
    %c0_8 = arith.constant 0 : index
    %c0_9 = arith.constant 0 : index
    %32 = vector.load %arg2[%c0_8, %c0_9] : memref<140x240xbf16, #tpu.memory_space<vmem>>, vector<140x240xbf16>
    %cst_10 = arith.constant dense<0.000000e+00> : vector<32x240xf32>
    %33 = tpu.matmul %31, %32, %cst_10 {dimension_numbers = #tpu.dot_dimension_numbers<[1], [0], [0], [1], [0, 0, 1, 1], [], []>} : vector<32x140xbf16>, vector<140x240xbf16>, vector<32x240xf32> -> vector<32x240xf32>
    %34 = arith.maximumf %18, %33 : vector<32x240xf32>
    %c0_11 = arith.constant 0 : index
    %c0_12 = arith.constant 0 : index
    %35 = vector.load %arg3[%c0_11, %c0_12] : memref<140x240xbf16, #tpu.memory_space<vmem>>, vector<140x240xbf16>
    %cst_13 = arith.constant dense<0.000000e+00> : vector<32x240xf32>
    %36 = tpu.matmul %31, %35, %cst_13 {dimension_numbers = #tpu.dot_dimension_numbers<[1], [0], [0], [1], [0, 0, 1, 1], [], []>} : vector<32x140xbf16>, vector<140x240xbf16>, vector<32x240xf32> -> vector<32x240xf32>
    %37 = arith.maximumf %34, %36 : vector<32x240xf32>
    %c0_14 = arith.constant 0 : index
    %c0_15 = arith.constant 0 : index
    %38 = vector.load %arg4[%c0_14, %c0_15] : memref<1x240xf32, #tpu.memory_space<vmem>>, vector<1x240xf32>
    %39 = vector.broadcast %38 : vector<1x240xf32> to vector<32x240xf32>
    %40 = arith.addf %37, %39 : vector<32x240xf32>
    %cst_16 = arith.constant 0.000000e+00 : f32
    %41 = vector.broadcast %cst_16 : f32 to vector<32x240xf32>
    %42 = arith.maximumf %40, %41 : vector<32x240xf32>
    %43 = vector.shape_cast %42 : vector<32x240xf32> to vector<2x16x240xf32>
    %44 = vector.extract_strided_slice %43 {offsets = [0, 0, 0], sizes = [2, 8, 240], strides = [1, 1, 1]} : vector<2x16x240xf32> to vector<2x8x240xf32>
    %45 = vector.extract_strided_slice %43 {offsets = [0, 1, 0], sizes = [2, 8, 240], strides = [1, 1, 1]} : vector<2x16x240xf32> to vector<2x8x240xf32>
    %46 = vector.extract_strided_slice %43 {offsets = [0, 2, 0], sizes = [2, 8, 240], strides = [1, 1, 1]} : vector<2x16x240xf32> to vector<2x8x240xf32>
    %47 = vector.extract_strided_slice %43 {offsets = [0, 3, 0], sizes = [2, 8, 240], strides = [1, 1, 1]} : vector<2x16x240xf32> to vector<2x8x240xf32>
    %48 = vector.extract_strided_slice %43 {offsets = [0, 4, 0], sizes = [2, 8, 240], strides = [1, 1, 1]} : vector<2x16x240xf32> to vector<2x8x240xf32>
    %49 = tpu.concatenate %44, %45, %46, %47, %48 in 2 : vector<2x8x240xf32>, vector<2x8x240xf32>, vector<2x8x240xf32>, vector<2x8x240xf32>, vector<2x8x240xf32> -> vector<2x8x1200xf32>
    %50 = vector.shape_cast %49 : vector<2x8x1200xf32> to vector<16x1200xf32>
    %51 = arith.truncf %50 : vector<16x1200xf32> to vector<16x1200xbf16>
    %c0_17 = arith.constant 0 : index
    %c0_18 = arith.constant 0 : index
    %52 = vector.load %arg5[%c0_17, %c0_18] : memref<1200x200xbf16, #tpu.memory_space<vmem>>, vector<1200x200xbf16>
    %cst_19 = arith.constant dense<0.000000e+00> : vector<16x200xf32>
    %53 = tpu.matmul %51, %52, %cst_19 {dimension_numbers = #tpu.dot_dimension_numbers<[1], [0], [0], [1], [0, 0, 1, 1], [], []>} : vector<16x1200xbf16>, vector<1200x200xbf16>, vector<16x200xf32> -> vector<16x200xf32>
    %c0_20 = arith.constant 0 : index
    %c0_21 = arith.constant 0 : index
    %54 = vector.load %arg6[%c0_20, %c0_21] : memref<1200x200xbf16, #tpu.memory_space<vmem>>, vector<1200x200xbf16>
    %cst_22 = arith.constant dense<0.000000e+00> : vector<16x200xf32>
    %55 = tpu.matmul %51, %54, %cst_22 {dimension_numbers = #tpu.dot_dimension_numbers<[1], [0], [0], [1], [0, 0, 1, 1], [], []>} : vector<16x1200xbf16>, vector<1200x200xbf16>, vector<16x200xf32> -> vector<16x200xf32>
    %56 = arith.maximumf %53, %55 : vector<16x200xf32>
    %c0_23 = arith.constant 0 : index
    %c0_24 = arith.constant 0 : index
    %57 = vector.load %arg7[%c0_23, %c0_24] : memref<1x200xf32, #tpu.memory_space<vmem>>, vector<1x200xf32>
    %58 = vector.broadcast %57 : vector<1x200xf32> to vector<16x200xf32>
    %59 = arith.addf %56, %58 : vector<16x200xf32>
    %cst_25 = arith.constant 0.000000e+00 : f32
    %60 = vector.broadcast %cst_25 : f32 to vector<16x200xf32>
    %61 = arith.maximumf %59, %60 : vector<16x200xf32>
    %62 = vector.shape_cast %61 : vector<16x200xf32> to vector<2x8x200xf32>
    %63 = vector.extract_strided_slice %62 {offsets = [0, 0, 0], sizes = [2, 1, 200], strides = [1, 1, 1]} : vector<2x8x200xf32> to vector<2x1x200xf32>
    %64 = vector.shape_cast %63 : vector<2x1x200xf32> to vector<2x200xf32>
    %65 = vector.extract_strided_slice %62 {offsets = [0, 1, 0], sizes = [2, 1, 200], strides = [1, 1, 1]} : vector<2x8x200xf32> to vector<2x1x200xf32>
    %66 = vector.shape_cast %65 : vector<2x1x200xf32> to vector<2x200xf32>
    %67 = arith.maximumf %64, %66 : vector<2x200xf32>
    %68 = vector.extract_strided_slice %62 {offsets = [0, 2, 0], sizes = [2, 1, 200], strides = [1, 1, 1]} : vector<2x8x200xf32> to vector<2x1x200xf32>
    %69 = vector.shape_cast %68 : vector<2x1x200xf32> to vector<2x200xf32>
    %70 = vector.extract_strided_slice %62 {offsets = [0, 3, 0], sizes = [2, 1, 200], strides = [1, 1, 1]} : vector<2x8x200xf32> to vector<2x1x200xf32>
    %71 = vector.shape_cast %70 : vector<2x1x200xf32> to vector<2x200xf32>
    %72 = arith.maximumf %69, %71 : vector<2x200xf32>
    %73 = vector.extract_strided_slice %62 {offsets = [0, 4, 0], sizes = [2, 1, 200], strides = [1, 1, 1]} : vector<2x8x200xf32> to vector<2x1x200xf32>
    %74 = vector.shape_cast %73 : vector<2x1x200xf32> to vector<2x200xf32>
    %75 = vector.extract_strided_slice %62 {offsets = [0, 5, 0], sizes = [2, 1, 200], strides = [1, 1, 1]} : vector<2x8x200xf32> to vector<2x1x200xf32>
    %76 = vector.shape_cast %75 : vector<2x1x200xf32> to vector<2x200xf32>
    %77 = arith.maximumf %74, %76 : vector<2x200xf32>
    %78 = vector.extract_strided_slice %62 {offsets = [0, 6, 0], sizes = [2, 1, 200], strides = [1, 1, 1]} : vector<2x8x200xf32> to vector<2x1x200xf32>
    %79 = vector.shape_cast %78 : vector<2x1x200xf32> to vector<2x200xf32>
    %80 = vector.extract_strided_slice %62 {offsets = [0, 7, 0], sizes = [2, 1, 200], strides = [1, 1, 1]} : vector<2x8x200xf32> to vector<2x1x200xf32>
    %81 = vector.shape_cast %80 : vector<2x1x200xf32> to vector<2x200xf32>
    %82 = arith.maximumf %79, %81 : vector<2x200xf32>
    %83 = tpu.concatenate %67, %72, %77, %82 in 1 : vector<2x200xf32>, vector<2x200xf32>, vector<2x200xf32>, vector<2x200xf32> -> vector<2x800xf32>
    %84 = arith.truncf %83 : vector<2x800xf32> to vector<2x800xbf16>
    %c0_26 = arith.constant 0 : index
    %c0_27 = arith.constant 0 : index
    %85 = vector.load %arg8[%c0_26, %c0_27] : memref<800x500xbf16, #tpu.memory_space<vmem>>, vector<800x500xbf16>
    %cst_28 = arith.constant dense<0.000000e+00> : vector<2x500xf32>
    %86 = tpu.matmul %84, %85, %cst_28 {dimension_numbers = #tpu.dot_dimension_numbers<[1], [0], [0], [1], [0, 0, 1, 1], [], []>} : vector<2x800xbf16>, vector<800x500xbf16>, vector<2x500xf32> -> vector<2x500xf32>
    %c0_29 = arith.constant 0 : index
    %c0_30 = arith.constant 0 : index
    %87 = vector.load %arg9[%c0_29, %c0_30] : memref<1x500xf32, #tpu.memory_space<vmem>>, vector<1x500xf32>
    %88 = vector.broadcast %87 : vector<1x500xf32> to vector<2x500xf32>
    %89 = arith.addf %86, %88 : vector<2x500xf32>
    %cst_31 = arith.constant 0.000000e+00 : f32
    %90 = vector.broadcast %cst_31 : f32 to vector<2x500xf32>
    %91 = arith.maximumf %89, %90 : vector<2x500xf32>
    %92 = arith.truncf %91 : vector<2x500xf32> to vector<2x500xbf16>
    %c0_32 = arith.constant 0 : index
    %c0_33 = arith.constant 0 : index
    %93 = vector.load %arg10[%c0_32, %c0_33] : memref<500x10xbf16, #tpu.memory_space<vmem>>, vector<500x10xbf16>
    %cst_34 = arith.constant dense<0.000000e+00> : vector<2x10xf32>
    %94 = tpu.matmul %92, %93, %cst_34 {dimension_numbers = #tpu.dot_dimension_numbers<[1], [0], [0], [1], [0, 0, 1, 1], [], []>} : vector<2x500xbf16>, vector<500x10xbf16>, vector<2x10xf32> -> vector<2x10xf32>
    %c0_35 = arith.constant 0 : index
    %c0_36 = arith.constant 0 : index
    %95 = vector.load %arg11[%c0_35, %c0_36] : memref<1x10xf32, #tpu.memory_space<vmem>>, vector<1x10xf32>
    %96 = vector.broadcast %95 : vector<1x10xf32> to vector<2x10xf32>
    %97 = arith.addf %94, %96 : vector<2x10xf32>
    %c0_37 = arith.constant 0 : index
    %c0_38 = arith.constant 0 : index
    %98 = vector.load %arg12[%c0_37, %c0_38] : memref<2x10xf32, #tpu.memory_space<vmem>>, vector<2x10xf32>
    tpu.vector_store %arg12[%c0_37, %c0_38], %97 {strides = array<i32>} : memref<2x10xf32, #tpu.memory_space<vmem>>, vector<2x10xf32>,
    return
  }
  func.func @transform_0(%arg0: i32) -> (i32, i32, i32, i32) {
    %c0_i32 = arith.constant 0 : i32
    %c0_i32_0 = arith.constant 0 : i32
    %c0_i32_1 = arith.constant 0 : i32
    %c0_i32_2 = arith.constant 0 : i32
    return %c0_i32, %arg0, %c0_i32_0, %c0_i32_1 : i32, i32, i32, i32
  }
  func.func @transform_1(%arg0: i32) -> (i32, i32) {
    %c0_i32 = arith.constant 0 : i32
    %c0_i32_0 = arith.constant 0 : i32
    %c0_i32_1 = arith.constant 0 : i32
    return %c0_i32, %c0_i32_0 : i32, i32
  }
  func.func @transform_2(%arg0: i32) -> (i32, i32) {
    %c0_i32 = arith.constant 0 : i32
    %c0_i32_0 = arith.constant 0 : i32
    %c0_i32_1 = arith.constant 0 : i32
    return %c0_i32, %c0_i32_0 : i32, i32
  }
  func.func @transform_3(%arg0: i32) -> (i32, i32) {
    %c0_i32 = arith.constant 0 : i32
    %c0_i32_0 = arith.constant 0 : i32
    %c0_i32_1 = arith.constant 0 : i32
    return %c0_i32, %c0_i32_0 : i32, i32
  }
  func.func @transform_4(%arg0: i32) -> (i32, i32) {
    %c0_i32 = arith.constant 0 : i32
    %c0_i32_0 = arith.constant 0 : i32
    %c0_i32_1 = arith.constant 0 : i32
    return %c0_i32, %c0_i32_0 : i32, i32
  }
  func.func @transform_5(%arg0: i32) -> (i32, i32) {
    %c0_i32 = arith.constant 0 : i32
    %c0_i32_0 = arith.constant 0 : i32
    %c0_i32_1 = arith.constant 0 : i32
    return %c0_i32, %c0_i32_0 : i32, i32
  }
  func.func @transform_6(%arg0: i32) -> (i32, i32) {
    %c0_i32 = arith.constant 0 : i32
    %c0_i32_0 = arith.constant 0 : i32
    %c0_i32_1 = arith.constant 0 : i32
    return %c0_i32, %c0_i32_0 : i32, i32
  }
  func.func @transform_7(%arg0: i32) -> (i32, i32) {
    %c0_i32 = arith.constant 0 : i32
    %c0_i32_0 = arith.constant 0 : i32
    %c0_i32_1 = arith.constant 0 : i32
    return %c0_i32, %c0_i32_0 : i32, i32
  }
  func.func @transform_8(%arg0: i32) -> (i32, i32) {
    %c0_i32 = arith.constant 0 : i32
    %c0_i32_0 = arith.constant 0 : i32
    %c0_i32_1 = arith.constant 0 : i32
    return %c0_i32, %c0_i32_0 : i32, i32
  }
  func.func @transform_9(%arg0: i32) -> (i32, i32) {
    %c0_i32 = arith.constant 0 : i32
    %c0_i32_0 = arith.constant 0 : i32
    %c0_i32_1 = arith.constant 0 : i32
    return %c0_i32, %c0_i32_0 : i32, i32
  }
  func.func @transform_10(%arg0: i32) -> (i32, i32) {
    %c0_i32 = arith.constant 0 : i32
    %c0_i32_0 = arith.constant 0 : i32
    %c0_i32_1 = arith.constant 0 : i32
    return %c0_i32, %c0_i32_0 : i32, i32
  }
  func.func @transform_11(%arg0: i32) -> (i32, i32) {
    %c0_i32 = arith.constant 0 : i32
    %c0_i32_0 = arith.constant 0 : i32
    return %arg0, %c0_i32 : i32, i32
  }
}

</mosaic_0001>

<llo_original>
// kernel: lenet_forward.1
$region0: #{lenet_forward.1}
  #allocation0 [shape = 'u32[]', space=smem, size = 0x4, offset = 0x4, fixed_abs, tag = 'smem constant byte address 0x4 - core index']
  #allocation1 [shape = 'u32[144,128]{1,0:T(1,128)}', space=vmem, size = 0x12000, scoped, tag = 'internal scratch']
  %s0 = inlined_call_operand.vmem [shape: f32[2,2,18,28], index: 0, kind: input, shape index: {}]
  %s1 = inlined_call_operand.vmem [shape: bf16[140,240], index: 1, kind: input, shape index: {}]
  %s2 = inlined_call_operand.vmem [shape: bf16[140,240], index: 2, kind: input, shape index: {}]
  %s3 = inlined_call_operand.vmem [shape: f32[1,240], index: 3, kind: input, shape index: {}]
  %s4 = inlined_call_operand.vmem [shape: bf16[1200,200], index: 4, kind: input, shape index: {}]
  %s5 = inlined_call_operand.vmem [shape: bf16[1200,200], index: 5, kind: input, shape index: {}]
  %s6 = inlined_call_operand.vmem [shape: f32[1,200], index: 6, kind: input, shape index: {}]
  %s7 = inlined_call_operand.vmem [shape: bf16[800,500], index: 7, kind: input, shape index: {}]
  %s8 = inlined_call_operand.vmem [shape: f32[1,500], index: 8, kind: input, shape index: {}]
  %s9 = inlined_call_operand.vmem [shape: bf16[500,10], index: 9, kind: input, shape index: {}]
  %s10 = inlined_call_operand.vmem [shape: f32[1,10], index: 10, kind: input, shape index: {}]
  %s11 = inlined_call_operand.hbm [shape: f32[2,10], index: 11, kind: output, shape index: {}]
  %s12 = sld [smem:[#allocation0]]
  $region54: #{lenet_forward.1} parent=0
    _
  %s14 = ssub.s32 1, %s12
  %s15 = scalar_select 0, %s14, %s12
  $region1: #{lenet_forward.1} parent=0
    #allocation2 [shape = 'u8[1024]{0}', space=vmem, size = 0x400, scoped, tag = 'output window, operand 0, single buffered']
    #allocation3 [shape = 's32[1]{0}', space=sflag, size = 0x4, scoped, tag = 'scoped memory for lenet_forward.1']
    %16 = vsyncpa [#allocation3], 0
    // Predicated region
    $region2: #{lenet_forward.1} parent=1 // pred_check
      _
    $region3: #{lenet_forward.1} parent=1 // pred_check_branch
      %18 = sbr.rel (0) target = $region5
    $region4: #{lenet_forward.1} parent=1 // pred_region
      _
    $region5: #{lenet_forward.1} parent=1 // pred_fallthru
      _
    // Predicated region
    $region6: #{lenet_forward.1} parent=1 // pred_check
      _
    $region7: #{lenet_forward.1} parent=1 // pred_check_branch
      %20 = sbr.rel (0) target = $region9
    $region8: #{lenet_forward.1} parent=1 // pred_region
      _
    $region9: #{lenet_forward.1} parent=1 // pred_fallthru
      _
    // Predicated region
    $region10: #{lenet_forward.1} parent=1 // pred_check
      _
    $region11: #{lenet_forward.1} parent=1 // pred_check_branch
      %22 = sbr.rel (0) target = $region13
    $region12: #{lenet_forward.1} parent=1 // pred_region
      _
    $region13: #{lenet_forward.1} parent=1 // pred_fallthru
      _
    // Predicated region
    $region14: #{lenet_forward.1} parent=1 // pred_check
      _
    $region15: #{lenet_forward.1} parent=1 // pred_check_branch
      %24 = sbr.rel (0) target = $region17
    $region16: #{lenet_forward.1} parent=1 // pred_region
      _
    $region17: #{lenet_forward.1} parent=1 // pred_fallthru
      _
    // Predicated region
    $region18: #{lenet_forward.1} parent=1 // pred_check
      _
    $region19: #{lenet_forward.1} parent=1 // pred_check_branch
      %26 = sbr.rel (0) target = $region21
    $region20: #{lenet_forward.1} parent=1 // pred_region
      _
    $region21: #{lenet_forward.1} parent=1 // pred_fallthru
      _
    // Predicated region
    $region22: #{lenet_forward.1} parent=1 // pred_check
      _
    $region23: #{lenet_forward.1} parent=1 // pred_check_branch
      %28 = sbr.rel (0) target = $region25
    $region24: #{lenet_forward.1} parent=1 // pred_region
      _
    $region25: #{lenet_forward.1} parent=1 // pred_fallthru
      _
    // Predicated region
    $region26: #{lenet_forward.1} parent=1 // pred_check
      _
    $region27: #{lenet_forward.1} parent=1 // pred_check_branch
      %30 = sbr.rel (0) target = $region29
    $region28: #{lenet_forward.1} parent=1 // pred_region
      _
    $region29: #{lenet_forward.1} parent=1 // pred_fallthru
      _
    // Predicated region
    $region30: #{lenet_forward.1} parent=1 // pred_check
      _
    $region31: #{lenet_forward.1} parent=1 // pred_check_branch
      %32 = sbr.rel (0) target = $region33
    $region32: #{lenet_forward.1} parent=1 // pred_region
      _
    $region33: #{lenet_forward.1} parent=1 // pred_fallthru
      _
    // Predicated region
    $region34: #{lenet_forward.1} parent=1 // pred_check
      _
    $region35: #{lenet_forward.1} parent=1 // pred_check_branch
      %34 = sbr.rel (0) target = $region37
    $region36: #{lenet_forward.1} parent=1 // pred_region
      _
    $region37: #{lenet_forward.1} parent=1 // pred_fallthru
      _
    // Predicated region
    $region38: #{lenet_forward.1} parent=1 // pred_check
      _
    $region39: #{lenet_forward.1} parent=1 // pred_check_branch
      %36 = sbr.rel (0) target = $region41
    $region40: #{lenet_forward.1} parent=1 // pred_region
      _
    $region41: #{lenet_forward.1} parent=1 // pred_fallthru
      _
    // Predicated region
    $region42: #{lenet_forward.1} parent=1 // pred_check
      _
    $region43: #{lenet_forward.1} parent=1 // pred_check_branch
      %38 = sbr.rel (0) target = $region45
    $region44: #{lenet_forward.1} parent=1 // pred_region
      _
    $region45: #{lenet_forward.1} parent=1 // pred_fallthru
      _
    %v40 = vld [vmem:[%s0] sm:$0xff]
    %v41 = vld [vmem:[%s0 + $0x8] sm:$0xff]
    %v42 = vld [vmem:[%s0 + $0x10] sm:$0x3]
    %v43 = vld [vmem:[%s0 + $0x18] sm:$0xff]
    %v44 = vld [vmem:[%s0 + $0x20] sm:$0xff]
    %v45 = vld [vmem:[%s0 + $0x28] sm:$0x3]
    %v46 = vld [vmem:[%s0 + $0x30] sm:$0xff]
    %v47 = vld [vmem:[%s0 + $0x38] sm:$0xff]
    %v48 = vld [vmem:[%s0 + $0x40] sm:$0x3]
    %v49 = vld [vmem:[%s0 + $0x48] sm:$0xff]
    %v50 = vld [vmem:[%s0 + $0x50] sm:$0xff]
    %v51 = vld [vmem:[%s0 + $0x58] sm:$0x3]
    %56 = vrot.lane.b32.xlu0 %v46, 28
    %v57 = vpop.permute.xlu0 %56
    %58 = vrot.lane.b32.xlu0 %v47, 28
    %v59 = vpop.permute.xlu0 %58
    %60 = vrot.lane.b32.xlu0 %v49, 28
    %v61 = vpop.permute.xlu0 %60
    %62 = vrot.lane.b32.xlu0 %v50, 28
    %v63 = vpop.permute.xlu0 %62
    %vm74 = vcmask 1046528
    %v75 = vrot.slane %v40, 1
    %v76 = vrot.slane %v41, 1
    %v77 = vsel %vm74, %v75, %v76
    %v78 = vrot.slane %v42, 1
    %v79 = vsel %vm74, %v76, %v78
    %v80 = vrot.slane %v43, 1
    %v81 = vrot.slane %v44, 1
    %v82 = vsel %vm74, %v80, %v81
    %v83 = vrot.slane %v45, 1
    %v84 = vsel %vm74, %v81, %v83
    %85 = vrot.lane.b32.xlu0 %v77, 56
    %v86 = vpop.permute.xlu0 %85
    %87 = vrot.lane.b32.xlu0 %v79, 56
    %v88 = vpop.permute.xlu0 %87
    %89 = vrot.lane.b32.xlu0 %v82, 56
    %v90 = vpop.permute.xlu0 %89
    %91 = vrot.lane.b32.xlu0 %v84, 56
    %v92 = vpop.permute.xlu0 %91
    %v99 = vrot.slane %v46, 1
    %v100 = vrot.slane %v47, 1
    %v101 = vsel %vm74, %v99, %v100
    %v102 = vrot.slane %v48, 1
    %v103 = vsel %vm74, %v100, %v102
    %v104 = vrot.slane %v49, 1
    %v105 = vrot.slane %v50, 1
    %v106 = vsel %vm74, %v104, %v105
    %v107 = vrot.slane %v51, 1
    %v108 = vsel %vm74, %v105, %v107
    %109 = vrot.lane.b32.xlu0 %v101, 84
    %v110 = vpop.permute.xlu0 %109
    %111 = vrot.lane.b32.xlu0 %v103, 84
    %v112 = vpop.permute.xlu0 %111
    %113 = vrot.lane.b32.xlu0 %v106, 84
    %v114 = vpop.permute.xlu0 %113
    %115 = vrot.lane.b32.xlu0 %v108, 84
    %v116 = vpop.permute.xlu0 %115
    %vm121 = vcmask 1045504
    %v122 = vrot.slane %v40, 2
    %v123 = vrot.slane %v41, 2
    %v124 = vsel %vm121, %v122, %v123
    %v125 = vrot.slane %v42, 2
    %v126 = vsel %vm121, %v123, %v125
    %v127 = vrot.slane %v43, 2
    %v128 = vrot.slane %v44, 2
    %v129 = vsel %vm121, %v127, %v128
    %v130 = vrot.slane %v45, 2
    %v131 = vsel %vm121, %v128, %v130
    %132 = vrot.lane.b32.xlu0 %v124, 112
    %v133 = vpop.permute.xlu0 %132
    %134 = vrot.lane.b32.xlu0 %v126, 112
    %v135 = vpop.permute.xlu0 %134
    %136 = vrot.lane.b32.xlu0 %v129, 112
    %v137 = vpop.permute.xlu0 %136
    %138 = vrot.lane.b32.xlu0 %v131, 112
    %v139 = vpop.permute.xlu0 %138
    %vm144 = vcmask 228352
    %v145 = vsel %vm144, %v40, %v57
    %v146 = vsel %vm144, %v41, %v59
    %v147 = vsel %vm144, %v43, %v61
    %v148 = vsel %vm144, %v44, %v63
    %vm149 = vcmask 457728
    %v150 = vsel %vm149, %v145, %v86
    %v151 = vsel %vm149, %v146, %v88
    %v152 = vsel %vm149, %v147, %v90
    %v153 = vsel %vm149, %v148, %v92
    %vm154 = vcmask 687104
    %v155 = vsel %vm154, %v150, %v110
    %v156 = vsel %vm154, %v151, %v112
    %v157 = vsel %vm154, %v152, %v114
    %v158 = vsel %vm154, %v153, %v116
    %vm159 = vcmask 916480
    %v160 = vsel %vm159, %v155, %v133
    %v161 = vsel %vm159, %v156, %v135
    %v162 = vsel %vm159, %v157, %v137
    %v163 = vsel %vm159, %v158, %v139
    %v164 = vpack.c.bf16 %v161, %v160
    %v165 = vpack.c.bf16 %v135, %v133
    %v166 = vpack.c.bf16 %v163, %v162
    %v167 = vpack.c.bf16 %v139, %v137
    %v168 = vld [vmem:[%s1] sm:$0xff]
    %v169 = vld [vmem:[%s1 + $0x8] sm:$0xff]
    %v170 = vld [vmem:[%s1 + $0x10] sm:$0xff]
    %v171 = vld [vmem:[%s1 + $0x18] sm:$0xff]
    %v172 = vld [vmem:[%s1 + $0x20] sm:$0xff]
    %v173 = vld [vmem:[%s1 + $0x28] sm:$0xff]
    %v174 = vld [vmem:[%s1 + $0x30] sm:$0xff]
    %v175 = vld [vmem:[%s1 + $0x38] sm:$0xff]
    %v176 = vld [vmem:[%s1 + $0x40] sm:$0xff]
    %v177 = vld [vmem:[%s1 + $0x48] sm:$0xff]
    %v178 = vld [vmem:[%s1 + $0x50] sm:$0xff]
    %v179 = vld [vmem:[%s1 + $0x58] sm:$0xff]
    %v180 = vld [vmem:[%s1 + $0x60] sm:$0xff]
    %v181 = vld [vmem:[%s1 + $0x68] sm:$0xff]
    %v182 = vld [vmem:[%s1 + $0x70] sm:$0xff]
    %v183 = vld [vmem:[%s1 + $0x78] sm:$0xff]
    %v184 = vld [vmem:[%s1 + $0x80] sm:$0xff]
    %v185 = vld [vmem:[%s1 + $0x88] sm:$0x33]
    %v204 = vunpack.c.l.b16 %v168
    %v205 = vunpack.c.h.b16 %v168
    %v206 = vunpack.c.l.b16 %v169
    %v207 = vunpack.c.h.b16 %v169
    %v208 = vunpack.c.l.b16 %v170
    %v209 = vunpack.c.h.b16 %v170
    %v210 = vunpack.c.l.b16 %v171
    %v211 = vunpack.c.h.b16 %v171
    %v212 = vunpack.c.l.b16 %v172
    %v213 = vunpack.c.h.b16 %v172
    %v214 = vunpack.c.l.b16 %v173
    %v215 = vunpack.c.h.b16 %v173
    %v216 = vunpack.c.l.b16 %v174
    %v217 = vunpack.c.h.b16 %v174
    %v218 = vunpack.c.l.b16 %v175
    %v219 = vunpack.c.h.b16 %v175
    %v220 = vunpack.c.l.b16 %v176
    %v221 = vunpack.c.h.b16 %v176
    %v222 = vunpack.c.l.b16 %v177
    %v223 = vunpack.c.h.b16 %v177
    %v224 = vunpack.c.l.b16 %v178
    %v225 = vunpack.c.h.b16 %v178
    %v226 = vunpack.c.l.b16 %v179
    %v227 = vunpack.c.h.b16 %v179
    %v228 = vunpack.c.l.b16 %v180
    %v229 = vunpack.c.h.b16 %v180
    %v230 = vunpack.c.l.b16 %v181
    %v231 = vunpack.c.h.b16 %v181
    %v232 = vunpack.c.l.b16 %v182
    %v233 = vunpack.c.h.b16 %v182
    %v234 = vunpack.c.l.b16 %v183
    %v235 = vunpack.c.h.b16 %v183
    %v236 = vunpack.c.l.b16 %v184
    %v237 = vunpack.c.h.b16 %v184
    %v238 = vunpack.c.l.b16 %v185
    %v239 = vunpack.c.h.b16 %v185
    %v240 = vpack.c.b16 %v206, %v204
    %v241 = vpack.c.b16 %v207, %v205
    %v242 = vpack.c.b16 %v210, %v208
    %v243 = vpack.c.b16 %v211, %v209
    %v244 = vpack.c.b16 %v214, %v212
    %v245 = vpack.c.b16 %v215, %v213
    %v246 = vpack.c.b16 %v218, %v216
    %v247 = vpack.c.b16 %v219, %v217
    %v248 = vpack.c.b16 %v222, %v220
    %v249 = vpack.c.b16 %v223, %v221
    %v250 = vpack.c.b16 %v226, %v224
    %v251 = vpack.c.b16 %v227, %v225
    %v252 = vpack.c.b16 %v230, %v228
    %v253 = vpack.c.b16 %v231, %v229
    %v254 = vpack.c.b16 %v234, %v232
    %v255 = vpack.c.b16 %v235, %v233
    %v256 = vpack.c.b16 %v238, %v236
    %v257 = vpack.c.b16 %v239, %v237
    %vm274 = vcmask 97280
    %v276 = vsel %vm274, %v165, 0
    %v279 = vsel %vm274, %v167, 0
    %v282 = vsel %vm121, %v256, 0
    %v285 = vsel %vm121, %v257, 0
    %287 = vmatprep.subr.bf16.mxu0 %v255
    %288 = vmatpush1.bf16.msra.mxu0 %v254
    %289 = vmatprep.subr.bf16.mxu0 %v253
    %290 = vmatpush1.bf16.msra.mxu0 %v252
    %291 = vmatprep.subr.bf16.mxu0 %v251
    %292 = vmatpush1.bf16.msra.mxu0 %v250
    %293 = vmatprep.subr.bf16.mxu0 %v249
    %294 = vmatpush1.bf16.msra.mxu0 %v248
    %295 = vmatprep.subr.bf16.mxu0 %v247
    %296 = vmatpush1.bf16.msra.mxu0 %v246
    %297 = vmatprep.subr.bf16.mxu0 %v245
    %298 = vmatpush1.bf16.msra.mxu0 %v244
    %299 = vmatprep.subr.bf16.mxu0 %v243
    %300 = vmatpush1.bf16.msra.mxu0 %v242
    %301 = vmatprep.subr.bf16.mxu0 %v241
    %302 = vmatpush1.bf16.msra.mxu0 %v240
    %303 = vmatprep.subr.bf16.mxu0 0
    %304 = vmatpush2.bf16.msra.mxu0 0
    %305 = vmatprep.subr.bf16.mxu0 0
    %306 = vmatpush2.bf16.msra.mxu0 0
    %307 = vmatprep.subr.bf16.mxu0 0
    %308 = vmatpush2.bf16.msra.mxu0 0
    %309 = vmatprep.subr.bf16.mxu0 0
    %310 = vmatpush2.bf16.msra.mxu0 0
    %311 = vmatprep.subr.bf16.mxu0 0
    %312 = vmatpush2.bf16.msra.mxu0 0
    %313 = vmatprep.subr.bf16.mxu0 0
    %314 = vmatpush2.bf16.msra.mxu0 0
    %315 = vmatprep.subr.bf16.mxu0 0
    %316 = vmatpush2.bf16.msra.mxu0 0
    %317 = vmatprep.subr.bf16.mxu0 %v285
    %318 = vmatpush2.bf16.msra.mxu0 %v282
    %319 = vmatprep.mubr.bf16.mxu0 %v276
    %320 = vmatmul.mubr.bf16.gmra.mxu0 %v164
    %v321 = vpop.f32.mrf.mxu0
    %v322 = vadd.f32 0.0, %v321
    %v323 = vpop.f32.mrf.mxu0
    %v324 = vadd.f32 0.0, %v323
    %v325 = vpop.f32.mrf.mxu0
    %v326 = vadd.f32 0.0, %v325
    %v327 = vpop.f32.mrf.mxu0
    %v328 = vadd.f32 0.0, %v327
    %329 = vmatprep.mubr.bf16.mxu0 %v279
    %330 = vmatmul.mubr.bf16.gmra.mxu0 %v166
    %v331 = vpop.f32.mrf.mxu0
    %v332 = vadd.f32 0.0, %v331
    %v333 = vpop.f32.mrf.mxu0
    %v334 = vadd.f32 0.0, %v333
    %v335 = vpop.f32.mrf.mxu0
    %v336 = vadd.f32 0.0, %v335
    %v337 = vpop.f32.mrf.mxu0
    %v338 = vadd.f32 0.0, %v337
    %339 = vdwg.mxu0
    %v340 = vld [vmem:[%s2] sm:$0xff]
    %v341 = vld [vmem:[%s2 + $0x8] sm:$0xff]
    %v342 = vld [vmem:[%s2 + $0x10] sm:$0xff]
    %v343 = vld [vmem:[%s2 + $0x18] sm:$0xff]
    %v344 = vld [vmem:[%s2 + $0x20] sm:$0xff]
    %v345 = vld [vmem:[%s2 + $0x28] sm:$0xff]
    %v346 = vld [vmem:[%s2 + $0x30] sm:$0xff]
    %v347 = vld [vmem:[%s2 + $0x38] sm:$0xff]
    %v348 = vld [vmem:[%s2 + $0x40] sm:$0xff]
    %v349 = vld [vmem:[%s2 + $0x48] sm:$0xff]
    %v350 = vld [vmem:[%s2 + $0x50] sm:$0xff]
    %v351 = vld [vmem:[%s2 + $0x58] sm:$0xff]
    %v352 = vld [vmem:[%s2 + $0x60] sm:$0xff]
    %v353 = vld [vmem:[%s2 + $0x68] sm:$0xff]
    %v354 = vld [vmem:[%s2 + $0x70] sm:$0xff]
    %v355 = vld [vmem:[%s2 + $0x78] sm:$0xff]
    %v356 = vld [vmem:[%s2 + $0x80] sm:$0xff]
    %v357 = vld [vmem:[%s2 + $0x88] sm:$0x33]
    %v376 = vunpack.c.l.b16 %v340
    %v377 = vunpack.c.h.b16 %v340
    %v378 = vunpack.c.l.b16 %v341
    %v379 = vunpack.c.h.b16 %v341
    %v380 = vunpack.c.l.b16 %v342
    %v381 = vunpack.c.h.b16 %v342
    %v382 = vunpack.c.l.b16 %v343
    %v383 = vunpack.c.h.b16 %v343
    %v384 = vunpack.c.l.b16 %v344
    %v385 = vunpack.c.h.b16 %v344
    %v386 = vunpack.c.l.b16 %v345
    %v387 = vunpack.c.h.b16 %v345
    %v388 = vunpack.c.l.b16 %v346
    %v389 = vunpack.c.h.b16 %v346
    %v390 = vunpack.c.l.b16 %v347
    %v391 = vunpack.c.h.b16 %v347
    %v392 = vunpack.c.l.b16 %v348
    %v393 = vunpack.c.h.b16 %v348
    %v394 = vunpack.c.l.b16 %v349
    %v395 = vunpack.c.h.b16 %v349
    %v396 = vunpack.c.l.b16 %v350
    %v397 = vunpack.c.h.b16 %v350
    %v398 = vunpack.c.l.b16 %v351
    %v399 = vunpack.c.h.b16 %v351
    %v400 = vunpack.c.l.b16 %v352
    %v401 = vunpack.c.h.b16 %v352
    %v402 = vunpack.c.l.b16 %v353
    %v403 = vunpack.c.h.b16 %v353
    %v404 = vunpack.c.l.b16 %v354
    %v405 = vunpack.c.h.b16 %v354
    %v406 = vunpack.c.l.b16 %v355
    %v407 = vunpack.c.h.b16 %v355
    %v408 = vunpack.c.l.b16 %v356
    %v409 = vunpack.c.h.b16 %v356
    %v410 = vunpack.c.l.b16 %v357
    %v411 = vunpack.c.h.b16 %v357
    %v412 = vpack.c.b16 %v378, %v376
    %v413 = vpack.c.b16 %v379, %v377
    %v414 = vpack.c.b16 %v382, %v380
    %v415 = vpack.c.b16 %v383, %v381
    %v416 = vpack.c.b16 %v386, %v384
    %v417 = vpack.c.b16 %v387, %v385
    %v418 = vpack.c.b16 %v390, %v388
    %v419 = vpack.c.b16 %v391, %v389
    %v420 = vpack.c.b16 %v394, %v392
    %v421 = vpack.c.b16 %v395, %v393
    %v422 = vpack.c.b16 %v398, %v396
    %v423 = vpack.c.b16 %v399, %v397
    %v424 = vpack.c.b16 %v402, %v400
    %v425 = vpack.c.b16 %v403, %v401
    %v426 = vpack.c.b16 %v406, %v404
    %v427 = vpack.c.b16 %v407, %v405
    %v428 = vpack.c.b16 %v410, %v408
    %v429 = vpack.c.b16 %v411, %v409
    %v447 = vsel %vm121, %v428, 0
    %v450 = vsel %vm121, %v429, 0
    %452 = vmatprep.subr.bf16.mxu0 %v427
    %453 = vmatpush1.bf16.msra.mxu0 %v426
    %454 = vmatprep.subr.bf16.mxu0 %v425
    %455 = vmatpush1.bf16.msra.mxu0 %v424
    %456 = vmatprep.subr.bf16.mxu0 %v423
    %457 = vmatpush1.bf16.msra.mxu0 %v422
    %458 = vmatprep.subr.bf16.mxu0 %v421
    %459 = vmatpush1.bf16.msra.mxu0 %v420
    %460 = vmatprep.subr.bf16.mxu0 %v419
    %461 = vmatpush1.bf16.msra.mxu0 %v418
    %462 = vmatprep.subr.bf16.mxu0 %v417
    %463 = vmatpush1.bf16.msra.mxu0 %v416
    %464 = vmatprep.subr.bf16.mxu0 %v415
    %465 = vmatpush1.bf16.msra.mxu0 %v414
    %466 = vmatprep.subr.bf16.mxu0 %v413
    %467 = vmatpush1.bf16.msra.mxu0 %v412
    %468 = vmatprep.subr.bf16.mxu0 0
    %469 = vmatpush2.bf16.msra.mxu0 0
    %470 = vmatprep.subr.bf16.mxu0 0
    %471 = vmatpush2.bf16.msra.mxu0 0
    %472 = vmatprep.subr.bf16.mxu0 0
    %473 = vmatpush2.bf16.msra.mxu0 0
    %474 = vmatprep.subr.bf16.mxu0 0
    %475 = vmatpush2.bf16.msra.mxu0 0
    %476 = vmatprep.subr.bf16.mxu0 0
    %477 = vmatpush2.bf16.msra.mxu0 0
    %478 = vmatprep.subr.bf16.mxu0 0
    %479 = vmatpush2.bf16.msra.mxu0 0
    %480 = vmatprep.subr.bf16.mxu0 0
    %481 = vmatpush2.bf16.msra.mxu0 0
    %482 = vmatprep.subr.bf16.mxu0 %v450
    %483 = vmatpush2.bf16.msra.mxu0 %v447
    %484 = vmatprep.mubr.bf16.mxu0 %v276
    %485 = vmatmul.mubr.bf16.gmra.mxu0 %v164
    %v486 = vpop.f32.mrf.mxu0
    %v487 = vadd.f32 0.0, %v486
    %v488 = vpop.f32.mrf.mxu0
    %v489 = vadd.f32 0.0, %v488
    %v490 = vpop.f32.mrf.mxu0
    %v491 = vadd.f32 0.0, %v490
    %v492 = vpop.f32.mrf.mxu0
    %v493 = vadd.f32 0.0, %v492
    %494 = vmatprep.mubr.bf16.mxu0 %v279
    %495 = vmatmul.mubr.bf16.gmra.mxu0 %v166
    %v496 = vpop.f32.mrf.mxu0
    %v497 = vadd.f32 0.0, %v496
    %v498 = vpop.f32.mrf.mxu0
    %v499 = vadd.f32 0.0, %v498
    %v500 = vpop.f32.mrf.mxu0
    %v501 = vadd.f32 0.0, %v500
    %v502 = vpop.f32.mrf.mxu0
    %v503 = vadd.f32 0.0, %v502
    %504 = vdwg.mxu0
    %v505 = vmax.f32 %v322, %v487
    %v506 = vmax.f32 %v324, %v489
    %v507 = vmax.f32 %v326, %v491
    %v508 = vmax.f32 %v328, %v493
    %v509 = vmax.f32 %v332, %v497
    %v510 = vmax.f32 %v334, %v499
    %v511 = vmax.f32 %v336, %v501
    %v512 = vmax.f32 %v338, %v503
    %513 = vrot.lane.b32.xlu0 %v77, 28
    %v514 = vpop.permute.xlu0 %513
    %515 = vrot.lane.b32.xlu0 %v79, 28
    %v516 = vpop.permute.xlu0 %515
    %517 = vrot.lane.b32.xlu0 %v82, 28
    %v518 = vpop.permute.xlu0 %517
    %519 = vrot.lane.b32.xlu0 %v84, 28
    %v520 = vpop.permute.xlu0 %519
    %525 = vrot.lane.b32.xlu0 %v101, 56
    %v526 = vpop.permute.xlu0 %525
    %527 = vrot.lane.b32.xlu0 %v103, 56
    %v528 = vpop.permute.xlu0 %527
    %529 = vrot.lane.b32.xlu0 %v106, 56
    %v530 = vpop.permute.xlu0 %529
    %531 = vrot.lane.b32.xlu0 %v108, 56
    %v532 = vpop.permute.xlu0 %531
    %537 = vrot.lane.b32.xlu0 %v124, 84
    %v538 = vpop.permute.xlu0 %537
    %539 = vrot.lane.b32.xlu0 %v126, 84
    %v540 = vpop.permute.xlu0 %539
    %541 = vrot.lane.b32.xlu0 %v129, 84
    %v542 = vpop.permute.xlu0 %541
    %543 = vrot.lane.b32.xlu0 %v131, 84
    %v544 = vpop.permute.xlu0 %543
    %v549 = vrot.slane %v46, 2
    %v550 = vrot.slane %v47, 2
    %v551 = vsel %vm121, %v549, %v550
    %v552 = vrot.slane %v48, 2
    %v553 = vsel %vm121, %v550, %v552
    %v554 = vrot.slane %v49, 2
    %v555 = vrot.slane %v50, 2
    %v556 = vsel %vm121, %v554, %v555
    %v557 = vrot.slane %v51, 2
    %v558 = vsel %vm121, %v555, %v557
    %559 = vrot.lane.b32.xlu0 %v551, 112
    %v560 = vpop.permute.xlu0 %559
    %561 = vrot.lane.b32.xlu0 %v553, 112
    %v562 = vpop.permute.xlu0 %561
    %563 = vrot.lane.b32.xlu0 %v556, 112
    %v564 = vpop.permute.xlu0 %563
    %565 = vrot.lane.b32.xlu0 %v558, 112
    %v566 = vpop.permute.xlu0 %565
    %v571 = vsel %vm144, %v46, %v514
    %v572 = vsel %vm144, %v47, %v516
    %v573 = vsel %vm144, %v49, %v518
    %v574 = vsel %vm144, %v50, %v520
    %v575 = vsel %vm149, %v571, %v526
    %v576 = vsel %vm149, %v572, %v528
    %v577 = vsel %vm149, %v573, %v530
    %v578 = vsel %vm149, %v574, %v532
    %v579 = vsel %vm154, %v575, %v538
    %v580 = vsel %vm154, %v576, %v540
    %v581 = vsel %vm154, %v577, %v542
    %v582 = vsel %vm154, %v578, %v544
    %v583 = vsel %vm159, %v579, %v560
    %v584 = vsel %vm159, %v580, %v562
    %v585 = vsel %vm159, %v581, %v564
    %v586 = vsel %vm159, %v582, %v566
    %v587 = vpack.c.bf16 %v584, %v583
    %v588 = vpack.c.bf16 %v562, %v560
    %v589 = vpack.c.bf16 %v586, %v585
    %v590 = vpack.c.bf16 %v566, %v564
    %v592 = vsel %vm274, %v588, 0
    %v595 = vsel %vm274, %v590, 0
    %597 = vmatprep.subr.bf16.mxu0 %v255
    %598 = vmatpush1.bf16.msra.mxu0 %v254
    %599 = vmatprep.subr.bf16.mxu0 %v253
    %600 = vmatpush1.bf16.msra.mxu0 %v252
    %601 = vmatprep.subr.bf16.mxu0 %v251
    %602 = vmatpush1.bf16.msra.mxu0 %v250
    %603 = vmatprep.subr.bf16.mxu0 %v249
    %604 = vmatpush1.bf16.msra.mxu0 %v248
    %605 = vmatprep.subr.bf16.mxu0 %v247
    %606 = vmatpush1.bf16.msra.mxu0 %v246
    %607 = vmatprep.subr.bf16.mxu0 %v245
    %608 = vmatpush1.bf16.msra.mxu0 %v244
    %609 = vmatprep.subr.bf16.mxu0 %v243
    %610 = vmatpush1.bf16.msra.mxu0 %v242
    %611 = vmatprep.subr.bf16.mxu0 %v241
    %612 = vmatpush1.bf16.msra.mxu0 %v240
    %613 = vmatprep.subr.bf16.mxu0 0
    %614 = vmatpush2.bf16.msra.mxu0 0
    %615 = vmatprep.subr.bf16.mxu0 0
    %616 = vmatpush2.bf16.msra.mxu0 0
    %617 = vmatprep.subr.bf16.mxu0 0
    %618 = vmatpush2.bf16.msra.mxu0 0
    %619 = vmatprep.subr.bf16.mxu0 0
    %620 = vmatpush2.bf16.msra.mxu0 0
    %621 = vmatprep.subr.bf16.mxu0 0
    %622 = vmatpush2.bf16.msra.mxu0 0
    %623 = vmatprep.subr.bf16.mxu0 0
    %624 = vmatpush2.bf16.msra.mxu0 0
    %625 = vmatprep.subr.bf16.mxu0 0
    %626 = vmatpush2.bf16.msra.mxu0 0
    %627 = vmatprep.subr.bf16.mxu0 %v285
    %628 = vmatpush2.bf16.msra.mxu0 %v282
    %629 = vmatprep.mubr.bf16.mxu0 %v592
    %630 = vmatmul.mubr.bf16.gmra.mxu0 %v587
    %v631 = vpop.f32.mrf.mxu0
    %v632 = vadd.f32 0.0, %v631
    %v633 = vpop.f32.mrf.mxu0
    %v634 = vadd.f32 0.0, %v633
    %v635 = vpop.f32.mrf.mxu0
    %v636 = vadd.f32 0.0, %v635
    %v637 = vpop.f32.mrf.mxu0
    %v638 = vadd.f32 0.0, %v637
    %639 = vmatprep.mubr.bf16.mxu0 %v595
    %640 = vmatmul.mubr.bf16.gmra.mxu0 %v589
    %v641 = vpop.f32.mrf.mxu0
    %v642 = vadd.f32 0.0, %v641
    %v643 = vpop.f32.mrf.mxu0
    %v644 = vadd.f32 0.0, %v643
    %v645 = vpop.f32.mrf.mxu0
    %v646 = vadd.f32 0.0, %v645
    %v647 = vpop.f32.mrf.mxu0
    %v648 = vadd.f32 0.0, %v647
    %649 = vdwg.mxu0
    %v650 = vmax.f32 %v505, %v632
    %v651 = vmax.f32 %v506, %v634
    %v652 = vmax.f32 %v507, %v636
    %v653 = vmax.f32 %v508, %v638
    %v654 = vmax.f32 %v509, %v642
    %v655 = vmax.f32 %v510, %v644
    %v656 = vmax.f32 %v511, %v646
    %v657 = vmax.f32 %v512, %v648
    %658 = vmatprep.subr.bf16.mxu0 %v427
    %659 = vmatpush1.bf16.msra.mxu0 %v426
    %660 = vmatprep.subr.bf16.mxu0 %v425
    %661 = vmatpush1.bf16.msra.mxu0 %v424
    %662 = vmatprep.subr.bf16.mxu0 %v423
    %663 = vmatpush1.bf16.msra.mxu0 %v422
    %664 = vmatprep.subr.bf16.mxu0 %v421
    %665 = vmatpush1.bf16.msra.mxu0 %v420
    %666 = vmatprep.subr.bf16.mxu0 %v419
    %667 = vmatpush1.bf16.msra.mxu0 %v418
    %668 = vmatprep.subr.bf16.mxu0 %v417
    %669 = vmatpush1.bf16.msra.mxu0 %v416
    %670 = vmatprep.subr.bf16.mxu0 %v415
    %671 = vmatpush1.bf16.msra.mxu0 %v414
    %672 = vmatprep.subr.bf16.mxu0 %v413
    %673 = vmatpush1.bf16.msra.mxu0 %v412
    %674 = vmatprep.subr.bf16.mxu0 0
    %675 = vmatpush2.bf16.msra.mxu0 0
    %676 = vmatprep.subr.bf16.mxu0 0
    %677 = vmatpush2.bf16.msra.mxu0 0
    %678 = vmatprep.subr.bf16.mxu0 0
    %679 = vmatpush2.bf16.msra.mxu0 0
    %680 = vmatprep.subr.bf16.mxu0 0
    %681 = vmatpush2.bf16.msra.mxu0 0
    %682 = vmatprep.subr.bf16.mxu0 0
    %683 = vmatpush2.bf16.msra.mxu0 0
    %684 = vmatprep.subr.bf16.mxu0 0
    %685 = vmatpush2.bf16.msra.mxu0 0
    %686 = vmatprep.subr.bf16.mxu0 0
    %687 = vmatpush2.bf16.msra.mxu0 0
    %688 = vmatprep.subr.bf16.mxu0 %v450
    %689 = vmatpush2.bf16.msra.mxu0 %v447
    %690 = vmatprep.mubr.bf16.mxu0 %v592
    %691 = vmatmul.mubr.bf16.gmra.mxu0 %v587
    %v692 = vpop.f32.mrf.mxu0
    %v693 = vadd.f32 0.0, %v692
    %v694 = vpop.f32.mrf.mxu0
    %v695 = vadd.f32 0.0, %v694
    %v696 = vpop.f32.mrf.mxu0
    %v697 = vadd.f32 0.0, %v696
    %v698 = vpop.f32.mrf.mxu0
    %v699 = vadd.f32 0.0, %v698
    %700 = vmatprep.mubr.bf16.mxu0 %v595
    %701 = vmatmul.mubr.bf16.gmra.mxu0 %v589
    %v702 = vpop.f32.mrf.mxu0
    %v703 = vadd.f32 0.0, %v702
    %v704 = vpop.f32.mrf.mxu0
    %v705 = vadd.f32 0.0, %v704
    %v706 = vpop.f32.mrf.mxu0
    %v707 = vadd.f32 0.0, %v706
    %v708 = vpop.f32.mrf.mxu0
    %v709 = vadd.f32 0.0, %v708
    %710 = vdwg.mxu0
    %v711 = vmax.f32 %v650, %v693
    %v712 = vmax.f32 %v651, %v695
    %v713 = vmax.f32 %v652, %v697
    %v714 = vmax.f32 %v653, %v699
    %v715 = vmax.f32 %v654, %v703
    %v716 = vmax.f32 %v655, %v705
    %v717 = vmax.f32 %v656, %v707
    %v718 = vmax.f32 %v657, %v709
    %v719 = vld [vmem:[%s3] sm:$0x3]
    %v721 = vlaneseq
    %v722 = vshrl.u32 %v721, 7
    %v723 = vsub.s32 0, %v722
    %v724 = vrot.slane %v719, %v723
    %v725 = vlaneseq
    %v726 = vshrl.u32 %v725, 7
    %v727 = vsub.s32 1, %v726
    %v728 = vrot.slane %v719, %v727
    %v731 = vadd.f32 %v711, %v724
    %v732 = vadd.f32 %v712, %v728
    %v733 = vadd.f32 %v713, %v724
    %v734 = vadd.f32 %v714, %v728
    %v735 = vadd.f32 %v715, %v724
    %v736 = vadd.f32 %v716, %v728
    %v737 = vadd.f32 %v717, %v724
    %v738 = vadd.f32 %v718, %v728
    %v739 = vmax.f32 %v731, 0.0
    %v740 = vmax.f32 %v732, 0.0
    %v741 = vmax.f32 %v733, 0.0
    %v742 = vmax.f32 %v734, 0.0
    %v743 = vmax.f32 %v735, 0.0
    %v744 = vmax.f32 %v736, 0.0
    %v745 = vmax.f32 %v737, 0.0
    %v746 = vmax.f32 %v738, 0.0
    %v755 = vrot.slane %v739, 1
    %v756 = vrot.slane %v741, 1
    %v757 = vsel %vm74, %v755, %v756
    %v758 = vrot.slane %v740, 1
    %v759 = vrot.slane %v742, 1
    %v760 = vsel %vm74, %v758, %v759
    %v761 = vrot.slane %v743, 1
    %v762 = vrot.slane %v745, 1
    %v763 = vsel %vm74, %v761, %v762
    %v764 = vrot.slane %v744, 1
    %v765 = vrot.slane %v746, 1
    %v766 = vsel %vm74, %v764, %v765
    %767 = vrot.lane.b32.xlu0 %v757, 112
    %v768 = vpop.permute.xlu0 %767
    %769 = vrot.lane.b32.xlu0 %v760, 112
    %v770 = vpop.permute.xlu0 %769
    %771 = vrot.lane.b32.xlu0 %v763, 112
    %v772 = vpop.permute.xlu0 %771
    %773 = vrot.lane.b32.xlu0 %v766, 112
    %v774 = vpop.permute.xlu0 %773
    %v775 = vsel %vm159, %v768, %v770
    %v776 = vsel %vm159, %v772, %v774
    %v783 = vrot.slane %v739, 2
    %v784 = vrot.slane %v741, 2
    %v785 = vsel %vm121, %v783, %v784
    %v786 = vrot.slane %v740, 2
    %v787 = vrot.slane %v742, 2
    %v788 = vsel %vm121, %v786, %v787
    %v789 = vrot.slane %v743, 2
    %v790 = vrot.slane %v745, 2
    %v791 = vsel %vm121, %v789, %v790
    %v792 = vrot.slane %v744, 2
    %v793 = vrot.slane %v746, 2
    %v794 = vsel %vm121, %v792, %v793
    %795 = vrot.lane.b32.xlu0 %v785, 96
    %v796 = vpop.permute.xlu0 %795
    %797 = vrot.lane.b32.xlu0 %v788, 96
    %v798 = vpop.permute.xlu0 %797
    %799 = vrot.lane.b32.xlu0 %v791, 96
    %v800 = vpop.permute.xlu0 %799
    %801 = vrot.lane.b32.xlu0 %v794, 96
    %v802 = vpop.permute.xlu0 %801
    %vm803 = vcmask 785408
    %v804 = vsel %vm803, %v796, %v798
    %v805 = vsel %vm803, %v800, %v802
    %vm812 = vcmask 1044480
    %v813 = vrot.slane %v739, 3
    %v814 = vrot.slane %v741, 3
    %v815 = vsel %vm812, %v813, %v814
    %v816 = vrot.slane %v740, 3
    %v817 = vrot.slane %v742, 3
    %v818 = vsel %vm812, %v816, %v817
    %v819 = vrot.slane %v743, 3
    %v820 = vrot.slane %v745, 3
    %v821 = vsel %vm812, %v819, %v820
    %v822 = vrot.slane %v744, 3
    %v823 = vrot.slane %v746, 3
    %v824 = vsel %vm812, %v822, %v823
    %825 = vrot.lane.b32.xlu0 %v815, 80
    %v826 = vpop.permute.xlu0 %825
    %827 = vrot.lane.b32.xlu0 %v818, 80
    %v828 = vpop.permute.xlu0 %827
    %829 = vrot.lane.b32.xlu0 %v821, 80
    %v830 = vpop.permute.xlu0 %829
    %831 = vrot.lane.b32.xlu0 %v824, 80
    %v832 = vpop.permute.xlu0 %831
    %vm833 = vcmask 654336
    %v834 = vsel %vm833, %v826, %v828
    %v835 = vsel %vm833, %v830, %v832
    %vm842 = vcmask 1043456
    %v843 = vrot.slane %v739, 4
    %v844 = vrot.slane %v741, 4
    %v845 = vsel %vm842, %v843, %v844
    %v846 = vrot.slane %v740, 4
    %v847 = vrot.slane %v742, 4
    %v848 = vsel %vm842, %v846, %v847
    %v849 = vrot.slane %v743, 4
    %v850 = vrot.slane %v745, 4
    %v851 = vsel %vm842, %v849, %v850
    %v852 = vrot.slane %v744, 4
    %v853 = vrot.slane %v746, 4
    %v854 = vsel %vm842, %v852, %v853
    %855 = vrot.lane.b32.xlu0 %v845, 64
    %v856 = vpop.permute.xlu0 %855
    %857 = vrot.lane.b32.xlu0 %v848, 64
    %v858 = vpop.permute.xlu0 %857
    %859 = vrot.lane.b32.xlu0 %v851, 64
    %v860 = vpop.permute.xlu0 %859
    %861 = vrot.lane.b32.xlu0 %v854, 64
    %v862 = vpop.permute.xlu0 %861
    %vm863 = vcmask 523264
    %v864 = vsel %vm863, %v856, %v858
    %v865 = vsel %vm863, %v860, %v862
    %v872 = vsel %vm159, %v740, %v768
    %v873 = vsel %vm159, %v744, %v772
    %v874 = vsel %vm803, %v770, %v796
    %v875 = vsel %vm803, %v774, %v800
    %v876 = vsel %vm833, %v798, %v826
    %v877 = vsel %vm833, %v802, %v830
    %v878 = vsel %vm863, %v828, %v856
    %v879 = vsel %vm863, %v832, %v860
    %v880 = vpack.c.bf16 %v743, %v739
    %v881 = vpack.c.bf16 %v873, %v872
    %v882 = vpack.c.bf16 %v776, %v775
    %v883 = vpack.c.bf16 %v875, %v874
    %v884 = vpack.c.bf16 %v805, %v804
    %v885 = vpack.c.bf16 %v877, %v876
    %v886 = vpack.c.bf16 %v835, %v834
    %v887 = vpack.c.bf16 %v879, %v878
    %v888 = vpack.c.bf16 %v865, %v864
    %v889 = vpack.c.bf16 %v862, %v858
    %v890 = vld [vmem:[%s4] sm:$0xff]
    %v891 = vld [vmem:[%s4 + $0x8] sm:$0xff]
    %v892 = vld [vmem:[%s4 + $0x10] sm:$0xff]
    %v893 = vld [vmem:[%s4 + $0x18] sm:$0xff]
    %v894 = vld [vmem:[%s4 + $0x20] sm:$0xff]
    %v895 = vld [vmem:[%s4 + $0x28] sm:$0xff]
    %v896 = vld [vmem:[%s4 + $0x30] sm:$0xff]
    %v897 = vld [vmem:[%s4 + $0x38] sm:$0xff]
    %v898 = vld [vmem:[%s4 + $0x40] sm:$0xff]
    %v899 = vld [vmem:[%s4 + $0x48] sm:$0xff]
    %v900 = vld [vmem:[%s4 + $0x50] sm:$0xff]
    %v901 = vld [vmem:[%s4 + $0x58] sm:$0xff]
    %v902 = vld [vmem:[%s4 + $0x60] sm:$0xff]
    %v903 = vld [vmem:[%s4 + $0x68] sm:$0xff]
    %v904 = vld [vmem:[%s4 + $0x70] sm:$0xff]
    %v905 = vld [vmem:[%s4 + $0x78] sm:$0xff]
    %v906 = vld [vmem:[%s4 + $0x80] sm:$0xff]
    %v907 = vld [vmem:[%s4 + $0x88] sm:$0xff]
    %v908 = vld [vmem:[%s4 + $0x90] sm:$0xff]
    %v909 = vld [vmem:[%s4 + $0x98] sm:$0xff]
    %v910 = vld [vmem:[%s4 + $0xa0] sm:$0xff]
    %v911 = vld [vmem:[%s4 + $0xa8] sm:$0xff]
    %v912 = vld [vmem:[%s4 + $0xb0] sm:$0xff]
    %v913 = vld [vmem:[%s4 + $0xb8] sm:$0xff]
    %v914 = vld [vmem:[%s4 + $0xc0] sm:$0xff]
    %v915 = vld [vmem:[%s4 + $0xc8] sm:$0xff]
    %v916 = vld [vmem:[%s4 + $0xd0] sm:$0xff]
    %v917 = vld [vmem:[%s4 + $0xd8] sm:$0xff]
    %v918 = vld [vmem:[%s4 + $0xe0] sm:$0xff]
    %v919 = vld [vmem:[%s4 + $0xe8] sm:$0xff]
    %v920 = vld [vmem:[%s4 + $0xf0] sm:$0xff]
    %v921 = vld [vmem:[%s4 + $0xf8] sm:$0xff]
    %v922 = vld [vmem:[%s4 + $0x100] sm:$0xff]
    %v923 = vld [vmem:[%s4 + $0x108] sm:$0xff]
    %v924 = vld [vmem:[%s4 + $0x110] sm:$0xff]
    %v925 = vld [vmem:[%s4 + $0x118] sm:$0xff]
    %v926 = vld [vmem:[%s4 + $0x120] sm:$0xff]
    %v927 = vld [vmem:[%s4 + $0x128] sm:$0xff]
    %v928 = vld [vmem:[%s4 + $0x130] sm:$0xff]
    %v929 = vld [vmem:[%s4 + $0x138] sm:$0xff]
    %v930 = vld [vmem:[%s4 + $0x140] sm:$0xff]
    %v931 = vld [vmem:[%s4 + $0x148] sm:$0xff]
    %v932 = vld [vmem:[%s4 + $0x150] sm:$0xff]
    %v933 = vld [vmem:[%s4 + $0x158] sm:$0xff]
    %v934 = vld [vmem:[%s4 + $0x160] sm:$0xff]
    %v935 = vld [vmem:[%s4 + $0x168] sm:$0xff]
    %v936 = vld [vmem:[%s4 + $0x170] sm:$0xff]
    %v937 = vld [vmem:[%s4 + $0x178] sm:$0xff]
    %v938 = vld [vmem:[%s4 + $0x180] sm:$0xff]
    %v939 = vld [vmem:[%s4 + $0x188] sm:$0xff]
    %v940 = vld [vmem:[%s4 + $0x190] sm:$0xff]
    %v941 = vld [vmem:[%s4 + $0x198] sm:$0xff]
    %v942 = vld [vmem:[%s4 + $0x1a0] sm:$0xff]
    %v943 = vld [vmem:[%s4 + $0x1a8] sm:$0xff]
    %v944 = vld [vmem:[%s4 + $0x1b0] sm:$0xff]
    %v945 = vld [vmem:[%s4 + $0x1b8] sm:$0xff]
    %v946 = vld [vmem:[%s4 + $0x1c0] sm:$0xff]
    %v947 = vld [vmem:[%s4 + $0x1c8] sm:$0xff]
    %v948 = vld [vmem:[%s4 + $0x1d0] sm:$0xff]
    %v949 = vld [vmem:[%s4 + $0x1d8] sm:$0xff]
    %v950 = vld [vmem:[%s4 + $0x1e0] sm:$0xff]
    %v951 = vld [vmem:[%s4 + $0x1e8] sm:$0xff]
    %v952 = vld [vmem:[%s4 + $0x1f0] sm:$0xff]
    %v953 = vld [vmem:[%s4 + $0x1f8] sm:$0xff]
    %v954 = vld [vmem:[%s4 + $0x200] sm:$0xff]
    %v955 = vld [vmem:[%s4 + $0x208] sm:$0xff]
    %v956 = vld [vmem:[%s4 + $0x210] sm:$0xff]
    %v957 = vld [vmem:[%s4 + $0x218] sm:$0xff]
    %v958 = vld [vmem:[%s4 + $0x220] sm:$0xff]
    %v959 = vld [vmem:[%s4 + $0x228] sm:$0xff]
    %v960 = vld [vmem:[%s4 + $0x230] sm:$0xff]
    %v961 = vld [vmem:[%s4 + $0x238] sm:$0xff]
    %v962 = vld [vmem:[%s4 + $0x240] sm:$0xff]
    %v963 = vld [vmem:[%s4 + $0x248] sm:$0xff]
    %v964 = vld [vmem:[%s4 + $0x250] sm:$0xff]
    %v965 = vld [vmem:[%s4 + $0x258] sm:$0xff]
    %v966 = vld [vmem:[%s4 + $0x260] sm:$0xff]
    %v967 = vld [vmem:[%s4 + $0x268] sm:$0xff]
    %v968 = vld [vmem:[%s4 + $0x270] sm:$0xff]
    %v969 = vld [vmem:[%s4 + $0x278] sm:$0xff]
    %v970 = vld [vmem:[%s4 + $0x280] sm:$0xff]
    %v971 = vld [vmem:[%s4 + $0x288] sm:$0xff]
    %v972 = vld [vmem:[%s4 + $0x290] sm:$0xff]
    %v973 = vld [vmem:[%s4 + $0x298] sm:$0xff]
    %v974 = vld [vmem:[%s4 + $0x2a0] sm:$0xff]
    %v975 = vld [vmem:[%s4 + $0x2a8] sm:$0xff]
    %v976 = vld [vmem:[%s4 + $0x2b0] sm:$0xff]
    %v977 = vld [vmem:[%s4 + $0x2b8] sm:$0xff]
    %v978 = vld [vmem:[%s4 + $0x2c0] sm:$0xff]
    %v979 = vld [vmem:[%s4 + $0x2c8] sm:$0xff]
    %v980 = vld [vmem:[%s4 + $0x2d0] sm:$0xff]
    %v981 = vld [vmem:[%s4 + $0x2d8] sm:$0xff]
    %v982 = vld [vmem:[%s4 + $0x2e0] sm:$0xff]
    %v983 = vld [vmem:[%s4 + $0x2e8] sm:$0xff]
    %v984 = vld [vmem:[%s4 + $0x2f0] sm:$0xff]
    %v985 = vld [vmem:[%s4 + $0x2f8] sm:$0xff]
    %v986 = vld [vmem:[%s4 + $0x300] sm:$0xff]
    %v987 = vld [vmem:[%s4 + $0x308] sm:$0xff]
    %v988 = vld [vmem:[%s4 + $0x310] sm:$0xff]
    %v989 = vld [vmem:[%s4 + $0x318] sm:$0xff]
    %v990 = vld [vmem:[%s4 + $0x320] sm:$0xff]
    %v991 = vld [vmem:[%s4 + $0x328] sm:$0xff]
    %v992 = vld [vmem:[%s4 + $0x330] sm:$0xff]
    %v993 = vld [vmem:[%s4 + $0x338] sm:$0xff]
    %v994 = vld [vmem:[%s4 + $0x340] sm:$0xff]
    %v995 = vld [vmem:[%s4 + $0x348] sm:$0xff]
    %v996 = vld [vmem:[%s4 + $0x350] sm:$0xff]
    %v997 = vld [vmem:[%s4 + $0x358] sm:$0xff]
    %v998 = vld [vmem:[%s4 + $0x360] sm:$0xff]
    %v999 = vld [vmem:[%s4 + $0x368] sm:$0xff]
    %v1000 = vld [vmem:[%s4 + $0x370] sm:$0xff]
    %v1001 = vld [vmem:[%s4 + $0x378] sm:$0xff]
    %v1002 = vld [vmem:[%s4 + $0x380] sm:$0xff]
    %v1003 = vld [vmem:[%s4 + $0x388] sm:$0xff]
    %v1004 = vld [vmem:[%s4 + $0x390] sm:$0xff]
    %v1005 = vld [vmem:[%s4 + $0x398] sm:$0xff]
    %v1006 = vld [vmem:[%s4 + $0x3a0] sm:$0xff]
    %v1007 = vld [vmem:[%s4 + $0x3a8] sm:$0xff]
    %v1008 = vld [vmem:[%s4 + $0x3b0] sm:$0xff]
    %v1009 = vld [vmem:[%s4 + $0x3b8] sm:$0xff]
    %v1010 = vld [vmem:[%s4 + $0x3c0] sm:$0xff]
    %v1011 = vld [vmem:[%s4 + $0x3c8] sm:$0xff]
    %v1012 = vld [vmem:[%s4 + $0x3d0] sm:$0xff]
    %v1013 = vld [vmem:[%s4 + $0x3d8] sm:$0xff]
    %v1014 = vld [vmem:[%s4 + $0x3e0] sm:$0xff]
    %v1015 = vld [vmem:[%s4 + $0x3e8] sm:$0xff]
    %v1016 = vld [vmem:[%s4 + $0x3f0] sm:$0xff]
    %v1017 = vld [vmem:[%s4 + $0x3f8] sm:$0xff]
    %v1018 = vld [vmem:[%s4 + $0x400] sm:$0xff]
    %v1019 = vld [vmem:[%s4 + $0x408] sm:$0xff]
    %v1020 = vld [vmem:[%s4 + $0x410] sm:$0xff]
    %v1021 = vld [vmem:[%s4 + $0x418] sm:$0xff]
    %v1022 = vld [vmem:[%s4 + $0x420] sm:$0xff]
    %v1023 = vld [vmem:[%s4 + $0x428] sm:$0xff]
    %v1024 = vld [vmem:[%s4 + $0x430] sm:$0xff]
    %v1025 = vld [vmem:[%s4 + $0x438] sm:$0xff]
    %v1026 = vld [vmem:[%s4 + $0x440] sm:$0xff]
    %v1027 = vld [vmem:[%s4 + $0x448] sm:$0xff]
    %v1028 = vld [vmem:[%s4 + $0x450] sm:$0xff]
    %v1029 = vld [vmem:[%s4 + $0x458] sm:$0xff]
    %v1030 = vld [vmem:[%s4 + $0x460] sm:$0xff]
    %v1031 = vld [vmem:[%s4 + $0x468] sm:$0xff]
    %v1032 = vld [vmem:[%s4 + $0x470] sm:$0xff]
    %v1033 = vld [vmem:[%s4 + $0x478] sm:$0xff]
    %v1034 = vld [vmem:[%s4 + $0x480] sm:$0xff]
    %v1035 = vld [vmem:[%s4 + $0x488] sm:$0xff]
    %v1036 = vld [vmem:[%s4 + $0x490] sm:$0xff]
    %v1037 = vld [vmem:[%s4 + $0x498] sm:$0xff]
    %v1038 = vld [vmem:[%s4 + $0x4a0] sm:$0xff]
    %v1039 = vld [vmem:[%s4 + $0x4a8] sm:$0xff]
    %v1190 = vunpack.c.l.b16 %v890
    %v1191 = vunpack.c.h.b16 %v890
    %v1192 = vunpack.c.l.b16 %v891
    %v1193 = vunpack.c.h.b16 %v891
    %v1194 = vunpack.c.l.b16 %v892
    %v1195 = vunpack.c.h.b16 %v892
    %v1196 = vunpack.c.l.b16 %v893
    %v1197 = vunpack.c.h.b16 %v893
    %v1198 = vunpack.c.l.b16 %v894
    %v1199 = vunpack.c.h.b16 %v894
    %v1200 = vunpack.c.l.b16 %v895
    %v1201 = vunpack.c.h.b16 %v895
    %v1202 = vunpack.c.l.b16 %v896
    %v1203 = vunpack.c.h.b16 %v896
    %v1204 = vunpack.c.l.b16 %v897
    %v1205 = vunpack.c.h.b16 %v897
    %v1206 = vunpack.c.l.b16 %v898
    %v1207 = vunpack.c.h.b16 %v898
    %v1208 = vunpack.c.l.b16 %v899
    %v1209 = vunpack.c.h.b16 %v899
    %v1210 = vunpack.c.l.b16 %v900
    %v1211 = vunpack.c.h.b16 %v900
    %v1212 = vunpack.c.l.b16 %v901
    %v1213 = vunpack.c.h.b16 %v901
    %v1214 = vunpack.c.l.b16 %v902
    %v1215 = vunpack.c.h.b16 %v902
    %v1216 = vunpack.c.l.b16 %v903
    %v1217 = vunpack.c.h.b16 %v903
    %v1218 = vunpack.c.l.b16 %v904
    %v1219 = vunpack.c.h.b16 %v904
    %v1220 = vunpack.c.l.b16 %v905
    %v1221 = vunpack.c.h.b16 %v905
    %v1222 = vunpack.c.l.b16 %v906
    %v1223 = vunpack.c.h.b16 %v906
    %v1224 = vunpack.c.l.b16 %v907
    %v1225 = vunpack.c.h.b16 %v907
    %v1226 = vunpack.c.l.b16 %v908
    %v1227 = vunpack.c.h.b16 %v908
    %v1228 = vunpack.c.l.b16 %v909
    %v1229 = vunpack.c.h.b16 %v909
    %v1230 = vunpack.c.l.b16 %v910
    %v1231 = vunpack.c.h.b16 %v910
    %v1232 = vunpack.c.l.b16 %v911
    %v1233 = vunpack.c.h.b16 %v911
    %v1234 = vunpack.c.l.b16 %v912
    %v1235 = vunpack.c.h.b16 %v912
    %v1236 = vunpack.c.l.b16 %v913
    %v1237 = vunpack.c.h.b16 %v913
    %v1238 = vunpack.c.l.b16 %v914
    %v1239 = vunpack.c.h.b16 %v914
    %v1240 = vunpack.c.l.b16 %v915
    %v1241 = vunpack.c.h.b16 %v915
    %v1242 = vunpack.c.l.b16 %v916
    %v1243 = vunpack.c.h.b16 %v916
    %v1244 = vunpack.c.l.b16 %v917
    %v1245 = vunpack.c.h.b16 %v917
    %v1246 = vunpack.c.l.b16 %v918
    %v1247 = vunpack.c.h.b16 %v918
    %v1248 = vunpack.c.l.b16 %v919
    %v1249 = vunpack.c.h.b16 %v919
    %v1250 = vunpack.c.l.b16 %v920
    %v1251 = vunpack.c.h.b16 %v920
    %v1252 = vunpack.c.l.b16 %v921
    %v1253 = vunpack.c.h.b16 %v921
    %v1254 = vunpack.c.l.b16 %v922
    %v1255 = vunpack.c.h.b16 %v922
    %v1256 = vunpack.c.l.b16 %v923
    %v1257 = vunpack.c.h.b16 %v923
    %v1258 = vunpack.c.l.b16 %v924
    %v1259 = vunpack.c.h.b16 %v924
    %v1260 = vunpack.c.l.b16 %v925
    %v1261 = vunpack.c.h.b16 %v925
    %v1262 = vunpack.c.l.b16 %v926
    %v1263 = vunpack.c.h.b16 %v926
    %v1264 = vunpack.c.l.b16 %v927
    %v1265 = vunpack.c.h.b16 %v927
    %v1266 = vunpack.c.l.b16 %v928
    %v1267 = vunpack.c.h.b16 %v928
    %v1268 = vunpack.c.l.b16 %v929
    %v1269 = vunpack.c.h.b16 %v929
    %v1270 = vunpack.c.l.b16 %v930
    %v1271 = vunpack.c.h.b16 %v930
    %v1272 = vunpack.c.l.b16 %v931
    %v1273 = vunpack.c.h.b16 %v931
    %v1274 = vunpack.c.l.b16 %v932
    %v1275 = vunpack.c.h.b16 %v932
    %v1276 = vunpack.c.l.b16 %v933
    %v1277 = vunpack.c.h.b16 %v933
    %v1278 = vunpack.c.l.b16 %v934
    %v1279 = vunpack.c.h.b16 %v934
    %v1280 = vunpack.c.l.b16 %v935
    %v1281 = vunpack.c.h.b16 %v935
    %v1282 = vunpack.c.l.b16 %v936
    %v1283 = vunpack.c.h.b16 %v936
    %v1284 = vunpack.c.l.b16 %v937
    %v1285 = vunpack.c.h.b16 %v937
    %v1286 = vunpack.c.l.b16 %v938
    %v1287 = vunpack.c.h.b16 %v938
    %v1288 = vunpack.c.l.b16 %v939
    %v1289 = vunpack.c.h.b16 %v939
    %v1290 = vunpack.c.l.b16 %v940
    %v1291 = vunpack.c.h.b16 %v940
    %v1292 = vunpack.c.l.b16 %v941
    %v1293 = vunpack.c.h.b16 %v941
    %v1294 = vunpack.c.l.b16 %v942
    %v1295 = vunpack.c.h.b16 %v942
    %v1296 = vunpack.c.l.b16 %v943
    %v1297 = vunpack.c.h.b16 %v943
    %v1298 = vunpack.c.l.b16 %v944
    %v1299 = vunpack.c.h.b16 %v944
    %v1300 = vunpack.c.l.b16 %v945
    %v1301 = vunpack.c.h.b16 %v945
    %v1302 = vunpack.c.l.b16 %v946
    %v1303 = vunpack.c.h.b16 %v946
    %v1304 = vunpack.c.l.b16 %v947
    %v1305 = vunpack.c.h.b16 %v947
    %v1306 = vunpack.c.l.b16 %v948
    %v1307 = vunpack.c.h.b16 %v948
    %v1308 = vunpack.c.l.b16 %v949
    %v1309 = vunpack.c.h.b16 %v949
    %v1310 = vunpack.c.l.b16 %v950
    %v1311 = vunpack.c.h.b16 %v950
    %v1312 = vunpack.c.l.b16 %v951
    %v1313 = vunpack.c.h.b16 %v951
    %v1314 = vunpack.c.l.b16 %v952
    %v1315 = vunpack.c.h.b16 %v952
    %v1316 = vunpack.c.l.b16 %v953
    %v1317 = vunpack.c.h.b16 %v953
    %v1318 = vunpack.c.l.b16 %v954
    %v1319 = vunpack.c.h.b16 %v954
    %v1320 = vunpack.c.l.b16 %v955
    %v1321 = vunpack.c.h.b16 %v955
    %v1322 = vunpack.c.l.b16 %v956
    %v1323 = vunpack.c.h.b16 %v956
    %v1324 = vunpack.c.l.b16 %v957
    %v1325 = vunpack.c.h.b16 %v957
    %v1326 = vunpack.c.l.b16 %v958
    %v1327 = vunpack.c.h.b16 %v958
    %v1328 = vunpack.c.l.b16 %v959
    %v1329 = vunpack.c.h.b16 %v959
    %v1330 = vunpack.c.l.b16 %v960
    %v1331 = vunpack.c.h.b16 %v960
    %v1332 = vunpack.c.l.b16 %v961
    %v1333 = vunpack.c.h.b16 %v961
    %v1334 = vunpack.c.l.b16 %v962
    %v1335 = vunpack.c.h.b16 %v962
    %v1336 = vunpack.c.l.b16 %v963
    %v1337 = vunpack.c.h.b16 %v963
    %v1338 = vunpack.c.l.b16 %v964
    %v1339 = vunpack.c.h.b16 %v964
    %v1340 = vunpack.c.l.b16 %v965
    %v1341 = vunpack.c.h.b16 %v965
    %v1342 = vunpack.c.l.b16 %v966
    %v1343 = vunpack.c.h.b16 %v966
    %v1344 = vunpack.c.l.b16 %v967
    %v1345 = vunpack.c.h.b16 %v967
    %v1346 = vunpack.c.l.b16 %v968
    %v1347 = vunpack.c.h.b16 %v968
    %v1348 = vunpack.c.l.b16 %v969
    %v1349 = vunpack.c.h.b16 %v969
    %v1350 = vunpack.c.l.b16 %v970
    %v1351 = vunpack.c.h.b16 %v970
    %v1352 = vunpack.c.l.b16 %v971
    %v1353 = vunpack.c.h.b16 %v971
    %v1354 = vunpack.c.l.b16 %v972
    %v1355 = vunpack.c.h.b16 %v972
    %v1356 = vunpack.c.l.b16 %v973
    %v1357 = vunpack.c.h.b16 %v973
    %v1358 = vunpack.c.l.b16 %v974
    %v1359 = vunpack.c.h.b16 %v974
    %v1360 = vunpack.c.l.b16 %v975
    %v1361 = vunpack.c.h.b16 %v975
    %v1362 = vunpack.c.l.b16 %v976
    %v1363 = vunpack.c.h.b16 %v976
    %v1364 = vunpack.c.l.b16 %v977
    %v1365 = vunpack.c.h.b16 %v977
    %v1366 = vunpack.c.l.b16 %v978
    %v1367 = vunpack.c.h.b16 %v978
    %v1368 = vunpack.c.l.b16 %v979
    %v1369 = vunpack.c.h.b16 %v979
    %v1370 = vunpack.c.l.b16 %v980
    %v1371 = vunpack.c.h.b16 %v980
    %v1372 = vunpack.c.l.b16 %v981
    %v1373 = vunpack.c.h.b16 %v981
    %v1374 = vunpack.c.l.b16 %v982
    %v1375 = vunpack.c.h.b16 %v982
    %v1376 = vunpack.c.l.b16 %v983
    %v1377 = vunpack.c.h.b16 %v983
    %v1378 = vunpack.c.l.b16 %v984
    %v1379 = vunpack.c.h.b16 %v984
    %v1380 = vunpack.c.l.b16 %v985
    %v1381 = vunpack.c.h.b16 %v985
    %v1382 = vunpack.c.l.b16 %v986
    %v1383 = vunpack.c.h.b16 %v986
    %v1384 = vunpack.c.l.b16 %v987
    %v1385 = vunpack.c.h.b16 %v987
    %v1386 = vunpack.c.l.b16 %v988
    %v1387 = vunpack.c.h.b16 %v988
    %v1388 = vunpack.c.l.b16 %v989
    %v1389 = vunpack.c.h.b16 %v989
    %v1390 = vunpack.c.l.b16 %v990
    %v1391 = vunpack.c.h.b16 %v990
    %v1392 = vunpack.c.l.b16 %v991
    %v1393 = vunpack.c.h.b16 %v991
    %v1394 = vunpack.c.l.b16 %v992
    %v1395 = vunpack.c.h.b16 %v992
    %v1396 = vunpack.c.l.b16 %v993
    %v1397 = vunpack.c.h.b16 %v993
    %v1398 = vunpack.c.l.b16 %v994
    %v1399 = vunpack.c.h.b16 %v994
    %v1400 = vunpack.c.l.b16 %v995
    %v1401 = vunpack.c.h.b16 %v995
    %v1402 = vunpack.c.l.b16 %v996
    %v1403 = vunpack.c.h.b16 %v996
    %v1404 = vunpack.c.l.b16 %v997
    %v1405 = vunpack.c.h.b16 %v997
    %v1406 = vunpack.c.l.b16 %v998
    %v1407 = vunpack.c.h.b16 %v998
    %v1408 = vunpack.c.l.b16 %v999
    %v1409 = vunpack.c.h.b16 %v999
    %v1410 = vunpack.c.l.b16 %v1000
    %v1411 = vunpack.c.h.b16 %v1000
    %v1412 = vunpack.c.l.b16 %v1001
    %v1413 = vunpack.c.h.b16 %v1001
    %v1414 = vunpack.c.l.b16 %v1002
    %v1415 = vunpack.c.h.b16 %v1002
    %v1416 = vunpack.c.l.b16 %v1003
    %v1417 = vunpack.c.h.b16 %v1003
    %v1418 = vunpack.c.l.b16 %v1004
    %v1419 = vunpack.c.h.b16 %v1004
    %v1420 = vunpack.c.l.b16 %v1005
    %v1421 = vunpack.c.h.b16 %v1005
    %v1422 = vunpack.c.l.b16 %v1006
    %v1423 = vunpack.c.h.b16 %v1006
    %v1424 = vunpack.c.l.b16 %v1007
    %v1425 = vunpack.c.h.b16 %v1007
    %v1426 = vunpack.c.l.b16 %v1008
    %v1427 = vunpack.c.h.b16 %v1008
    %v1428 = vunpack.c.l.b16 %v1009
    %v1429 = vunpack.c.h.b16 %v1009
    %v1430 = vunpack.c.l.b16 %v1010
    %v1431 = vunpack.c.h.b16 %v1010
    %v1432 = vunpack.c.l.b16 %v1011
    %v1433 = vunpack.c.h.b16 %v1011
    %v1434 = vunpack.c.l.b16 %v1012
    %v1435 = vunpack.c.h.b16 %v1012
    %v1436 = vunpack.c.l.b16 %v1013
    %v1437 = vunpack.c.h.b16 %v1013
    %v1438 = vunpack.c.l.b16 %v1014
    %v1439 = vunpack.c.h.b16 %v1014
    %v1440 = vunpack.c.l.b16 %v1015
    %v1441 = vunpack.c.h.b16 %v1015
    %v1442 = vunpack.c.l.b16 %v1016
    %v1443 = vunpack.c.h.b16 %v1016
    %v1444 = vunpack.c.l.b16 %v1017
    %v1445 = vunpack.c.h.b16 %v1017
    %v1446 = vunpack.c.l.b16 %v1018
    %v1447 = vunpack.c.h.b16 %v1018
    %v1448 = vunpack.c.l.b16 %v1019
    %v1449 = vunpack.c.h.b16 %v1019
    %v1450 = vunpack.c.l.b16 %v1020
    %v1451 = vunpack.c.h.b16 %v1020
    %v1452 = vunpack.c.l.b16 %v1021
    %v1453 = vunpack.c.h.b16 %v1021
    %v1454 = vunpack.c.l.b16 %v1022
    %v1455 = vunpack.c.h.b16 %v1022
    %v1456 = vunpack.c.l.b16 %v1023
    %v1457 = vunpack.c.h.b16 %v1023
    %v1458 = vunpack.c.l.b16 %v1024
    %v1459 = vunpack.c.h.b16 %v1024
    %v1460 = vunpack.c.l.b16 %v1025
    %v1461 = vunpack.c.h.b16 %v1025
    %v1462 = vunpack.c.l.b16 %v1026
    %v1463 = vunpack.c.h.b16 %v1026
    %v1464 = vunpack.c.l.b16 %v1027
    %v1465 = vunpack.c.h.b16 %v1027
    %v1466 = vunpack.c.l.b16 %v1028
    %v1467 = vunpack.c.h.b16 %v1028
    %v1468 = vunpack.c.l.b16 %v1029
    %v1469 = vunpack.c.h.b16 %v1029
    %v1470 = vunpack.c.l.b16 %v1030
    %v1471 = vunpack.c.h.b16 %v1030
    %v1472 = vunpack.c.l.b16 %v1031
    %v1473 = vunpack.c.h.b16 %v1031
    %v1474 = vunpack.c.l.b16 %v1032
    %v1475 = vunpack.c.h.b16 %v1032
    %v1476 = vunpack.c.l.b16 %v1033
    %v1477 = vunpack.c.h.b16 %v1033
    %v1478 = vunpack.c.l.b16 %v1034
    %v1479 = vunpack.c.h.b16 %v1034
    %v1480 = vunpack.c.l.b16 %v1035
    %v1481 = vunpack.c.h.b16 %v1035
    %v1482 = vunpack.c.l.b16 %v1036
    %v1483 = vunpack.c.h.b16 %v1036
    %v1484 = vunpack.c.l.b16 %v1037
    %v1485 = vunpack.c.h.b16 %v1037
    %v1486 = vunpack.c.l.b16 %v1038
    %v1487 = vunpack.c.h.b16 %v1038
    %v1488 = vunpack.c.l.b16 %v1039
    %v1489 = vunpack.c.h.b16 %v1039
    %v1490 = vpack.c.b16 %v1192, %v1190
    %v1491 = vpack.c.b16 %v1193, %v1191
    %v1492 = vpack.c.b16 %v1196, %v1194
    %v1493 = vpack.c.b16 %v1197, %v1195
    %v1494 = vpack.c.b16 %v1200, %v1198
    %v1495 = vpack.c.b16 %v1201, %v1199
    %v1496 = vpack.c.b16 %v1204, %v1202
    %v1497 = vpack.c.b16 %v1205, %v1203
    %v1498 = vpack.c.b16 %v1208, %v1206
    %v1499 = vpack.c.b16 %v1209, %v1207
    %v1500 = vpack.c.b16 %v1212, %v1210
    %v1501 = vpack.c.b16 %v1213, %v1211
    %v1502 = vpack.c.b16 %v1216, %v1214
    %v1503 = vpack.c.b16 %v1217, %v1215
    %v1504 = vpack.c.b16 %v1220, %v1218
    %v1505 = vpack.c.b16 %v1221, %v1219
    %v1506 = vpack.c.b16 %v1224, %v1222
    %v1507 = vpack.c.b16 %v1225, %v1223
    %v1508 = vpack.c.b16 %v1228, %v1226
    %v1509 = vpack.c.b16 %v1229, %v1227
    %v1510 = vpack.c.b16 %v1232, %v1230
    %v1511 = vpack.c.b16 %v1233, %v1231
    %v1512 = vpack.c.b16 %v1236, %v1234
    %v1513 = vpack.c.b16 %v1237, %v1235
    %v1514 = vpack.c.b16 %v1240, %v1238
    %v1515 = vpack.c.b16 %v1241, %v1239
    %v1516 = vpack.c.b16 %v1244, %v1242
    %v1517 = vpack.c.b16 %v1245, %v1243
    %v1518 = vpack.c.b16 %v1248, %v1246
    %v1519 = vpack.c.b16 %v1249, %v1247
    %v1520 = vpack.c.b16 %v1252, %v1250
    %v1521 = vpack.c.b16 %v1253, %v1251
    %v1522 = vpack.c.b16 %v1256, %v1254
    %v1523 = vpack.c.b16 %v1257, %v1255
    %v1524 = vpack.c.b16 %v1260, %v1258
    %v1525 = vpack.c.b16 %v1261, %v1259
    %v1526 = vpack.c.b16 %v1264, %v1262
    %v1527 = vpack.c.b16 %v1265, %v1263
    %v1528 = vpack.c.b16 %v1268, %v1266
    %v1529 = vpack.c.b16 %v1269, %v1267
    %v1530 = vpack.c.b16 %v1272, %v1270
    %v1531 = vpack.c.b16 %v1273, %v1271
    %v1532 = vpack.c.b16 %v1276, %v1274
    %v1533 = vpack.c.b16 %v1277, %v1275
    %v1534 = vpack.c.b16 %v1280, %v1278
    %v1535 = vpack.c.b16 %v1281, %v1279
    %v1536 = vpack.c.b16 %v1284, %v1282
    %v1537 = vpack.c.b16 %v1285, %v1283
    %v1538 = vpack.c.b16 %v1288, %v1286
    %v1539 = vpack.c.b16 %v1289, %v1287
    %v1540 = vpack.c.b16 %v1292, %v1290
    %v1541 = vpack.c.b16 %v1293, %v1291
    %v1542 = vpack.c.b16 %v1296, %v1294
    %v1543 = vpack.c.b16 %v1297, %v1295
    %v1544 = vpack.c.b16 %v1300, %v1298
    %v1545 = vpack.c.b16 %v1301, %v1299
    %v1546 = vpack.c.b16 %v1304, %v1302
    %v1547 = vpack.c.b16 %v1305, %v1303
    %v1548 = vpack.c.b16 %v1308, %v1306
    %v1549 = vpack.c.b16 %v1309, %v1307
    %v1550 = vpack.c.b16 %v1312, %v1310
    %v1551 = vpack.c.b16 %v1313, %v1311
    %v1552 = vpack.c.b16 %v1316, %v1314
    %v1553 = vpack.c.b16 %v1317, %v1315
    %v1554 = vpack.c.b16 %v1320, %v1318
    %v1555 = vpack.c.b16 %v1321, %v1319
    %v1556 = vpack.c.b16 %v1324, %v1322
    %v1557 = vpack.c.b16 %v1325, %v1323
    %v1558 = vpack.c.b16 %v1328, %v1326
    %v1559 = vpack.c.b16 %v1329, %v1327
    %v1560 = vpack.c.b16 %v1332, %v1330
    %v1561 = vpack.c.b16 %v1333, %v1331
    %v1562 = vpack.c.b16 %v1336, %v1334
    %v1563 = vpack.c.b16 %v1337, %v1335
    %v1564 = vpack.c.b16 %v1340, %v1338
    %v1565 = vpack.c.b16 %v1341, %v1339
    %v1566 = vpack.c.b16 %v1344, %v1342
    %v1567 = vpack.c.b16 %v1345, %v1343
    %v1568 = vpack.c.b16 %v1348, %v1346
    %v1569 = vpack.c.b16 %v1349, %v1347
    %v1570 = vpack.c.b16 %v1352, %v1350
    %v1571 = vpack.c.b16 %v1353, %v1351
    %v1572 = vpack.c.b16 %v1356, %v1354
    %v1573 = vpack.c.b16 %v1357, %v1355
    %v1574 = vpack.c.b16 %v1360, %v1358
    %v1575 = vpack.c.b16 %v1361, %v1359
    %v1576 = vpack.c.b16 %v1364, %v1362
    %v1577 = vpack.c.b16 %v1365, %v1363
    %v1578 = vpack.c.b16 %v1368, %v1366
    %v1579 = vpack.c.b16 %v1369, %v1367
    %v1580 = vpack.c.b16 %v1372, %v1370
    %v1581 = vpack.c.b16 %v1373, %v1371
    %v1582 = vpack.c.b16 %v1376, %v1374
    %v1583 = vpack.c.b16 %v1377, %v1375
    %v1584 = vpack.c.b16 %v1380, %v1378
    %v1585 = vpack.c.b16 %v1381, %v1379
    %v1586 = vpack.c.b16 %v1384, %v1382
    %v1587 = vpack.c.b16 %v1385, %v1383
    %v1588 = vpack.c.b16 %v1388, %v1386
    %v1589 = vpack.c.b16 %v1389, %v1387
    %v1590 = vpack.c.b16 %v1392, %v1390
    %v1591 = vpack.c.b16 %v1393, %v1391
    %v1592 = vpack.c.b16 %v1396, %v1394
    %v1593 = vpack.c.b16 %v1397, %v1395
    %v1594 = vpack.c.b16 %v1400, %v1398
    %v1595 = vpack.c.b16 %v1401, %v1399
    %v1596 = vpack.c.b16 %v1404, %v1402
    %v1597 = vpack.c.b16 %v1405, %v1403
    %v1598 = vpack.c.b16 %v1408, %v1406
    %v1599 = vpack.c.b16 %v1409, %v1407
    %v1600 = vpack.c.b16 %v1412, %v1410
    %v1601 = vpack.c.b16 %v1413, %v1411
    %v1602 = vpack.c.b16 %v1416, %v1414
    %v1603 = vpack.c.b16 %v1417, %v1415
    %v1604 = vpack.c.b16 %v1420, %v1418
    %v1605 = vpack.c.b16 %v1421, %v1419
    %v1606 = vpack.c.b16 %v1424, %v1422
    %v1607 = vpack.c.b16 %v1425, %v1423
    %v1608 = vpack.c.b16 %v1428, %v1426
    %v1609 = vpack.c.b16 %v1429, %v1427
    %v1610 = vpack.c.b16 %v1432, %v1430
    %v1611 = vpack.c.b16 %v1433, %v1431
    %v1612 = vpack.c.b16 %v1436, %v1434
    %v1613 = vpack.c.b16 %v1437, %v1435
    %v1614 = vpack.c.b16 %v1440, %v1438
    %v1615 = vpack.c.b16 %v1441, %v1439
    %v1616 = vpack.c.b16 %v1444, %v1442
    %v1617 = vpack.c.b16 %v1445, %v1443
    %v1618 = vpack.c.b16 %v1448, %v1446
    %v1619 = vpack.c.b16 %v1449, %v1447
    %v1620 = vpack.c.b16 %v1452, %v1450
    %v1621 = vpack.c.b16 %v1453, %v1451
    %v1622 = vpack.c.b16 %v1456, %v1454
    %v1623 = vpack.c.b16 %v1457, %v1455
    %v1624 = vpack.c.b16 %v1460, %v1458
    %v1625 = vpack.c.b16 %v1461, %v1459
    %v1626 = vpack.c.b16 %v1464, %v1462
    %v1627 = vpack.c.b16 %v1465, %v1463
    %v1628 = vpack.c.b16 %v1468, %v1466
    %v1629 = vpack.c.b16 %v1469, %v1467
    %v1630 = vpack.c.b16 %v1472, %v1470
    %v1631 = vpack.c.b16 %v1473, %v1471
    %v1632 = vpack.c.b16 %v1476, %v1474
    %v1633 = vpack.c.b16 %v1477, %v1475
    %v1634 = vpack.c.b16 %v1480, %v1478
    %v1635 = vpack.c.b16 %v1481, %v1479
    %v1636 = vpack.c.b16 %v1484, %v1482
    %v1637 = vpack.c.b16 %v1485, %v1483
    %v1638 = vpack.c.b16 %v1488, %v1486
    %v1639 = vpack.c.b16 %v1489, %v1487
    %vm1790 = vcmask 392192
    %v1792 = vsel %vm1790, %v889, 0
    %1794 = vmatprep.subr.bf16.mxu0 %v1505
    %1795 = vmatpush1.bf16.msra.mxu0 %v1504
    %1796 = vmatprep.subr.bf16.mxu0 %v1503
    %1797 = vmatpush1.bf16.msra.mxu0 %v1502
    %1798 = vmatprep.subr.bf16.mxu0 %v1501
    %1799 = vmatpush1.bf16.msra.mxu0 %v1500
    %1800 = vmatprep.subr.bf16.mxu0 %v1499
    %1801 = vmatpush1.bf16.msra.mxu0 %v1498
    %1802 = vmatprep.subr.bf16.mxu0 %v1497
    %1803 = vmatpush1.bf16.msra.mxu0 %v1496
    %1804 = vmatprep.subr.bf16.mxu0 %v1495
    %1805 = vmatpush1.bf16.msra.mxu0 %v1494
    %1806 = vmatprep.subr.bf16.mxu0 %v1493
    %1807 = vmatpush1.bf16.msra.mxu0 %v1492
    %1808 = vmatprep.subr.bf16.mxu0 %v1491
    %1809 = vmatpush1.bf16.msra.mxu0 %v1490
    %1810 = vmatprep.subr.bf16.mxu0 %v1521
    %1811 = vmatpush2.bf16.msra.mxu0 %v1520
    %1812 = vmatprep.subr.bf16.mxu0 %v1519
    %1813 = vmatpush2.bf16.msra.mxu0 %v1518
    %1814 = vmatprep.subr.bf16.mxu0 %v1517
    %1815 = vmatpush2.bf16.msra.mxu0 %v1516
    %1816 = vmatprep.subr.bf16.mxu0 %v1515
    %1817 = vmatpush2.bf16.msra.mxu0 %v1514
    %1818 = vmatprep.subr.bf16.mxu0 %v1513
    %1819 = vmatpush2.bf16.msra.mxu0 %v1512
    %1820 = vmatprep.subr.bf16.mxu0 %v1511
    %1821 = vmatpush2.bf16.msra.mxu0 %v1510
    %1822 = vmatprep.subr.bf16.mxu0 %v1509
    %1823 = vmatpush2.bf16.msra.mxu0 %v1508
    %1824 = vmatprep.subr.bf16.mxu0 %v1507
    %1825 = vmatpush2.bf16.msra.mxu0 %v1506
    %1826 = vmatprep.mubr.bf16.mxu0 %v881
    %1827 = vmatmul.mubr.bf16.gmra.mxu0 %v880
    %v1828 = vpop.f32.mrf.mxu0
    %v1829 = vadd.f32 0.0, %v1828
    %v1830 = vpop.f32.mrf.mxu0
    %v1831 = vadd.f32 0.0, %v1830
    %v1832 = vpop.f32.mrf.mxu0
    %v1833 = vadd.f32 0.0, %v1832
    %v1834 = vpop.f32.mrf.mxu0
    %v1835 = vadd.f32 0.0, %v1834
    %1836 = vdwg.mxu0
    %1837 = vmatprep.subr.bf16.mxu0 %v1537
    %1838 = vmatpush1.bf16.msra.mxu0 %v1536
    %1839 = vmatprep.subr.bf16.mxu0 %v1535
    %1840 = vmatpush1.bf16.msra.mxu0 %v1534
    %1841 = vmatprep.subr.bf16.mxu0 %v1533
    %1842 = vmatpush1.bf16.msra.mxu0 %v1532
    %1843 = vmatprep.subr.bf16.mxu0 %v1531
    %1844 = vmatpush1.bf16.msra.mxu0 %v1530
    %1845 = vmatprep.subr.bf16.mxu0 %v1529
    %1846 = vmatpush1.bf16.msra.mxu0 %v1528
    %1847 = vmatprep.subr.bf16.mxu0 %v1527
    %1848 = vmatpush1.bf16.msra.mxu0 %v1526
    %1849 = vmatprep.subr.bf16.mxu0 %v1525
    %1850 = vmatpush1.bf16.msra.mxu0 %v1524
    %1851 = vmatprep.subr.bf16.mxu0 %v1523
    %1852 = vmatpush1.bf16.msra.mxu0 %v1522
    %1853 = vmatprep.subr.bf16.mxu0 %v1553
    %1854 = vmatpush2.bf16.msra.mxu0 %v1552
    %1855 = vmatprep.subr.bf16.mxu0 %v1551
    %1856 = vmatpush2.bf16.msra.mxu0 %v1550
    %1857 = vmatprep.subr.bf16.mxu0 %v1549
    %1858 = vmatpush2.bf16.msra.mxu0 %v1548
    %1859 = vmatprep.subr.bf16.mxu0 %v1547
    %1860 = vmatpush2.bf16.msra.mxu0 %v1546
    %1861 = vmatprep.subr.bf16.mxu0 %v1545
    %1862 = vmatpush2.bf16.msra.mxu0 %v1544
    %1863 = vmatprep.subr.bf16.mxu0 %v1543
    %1864 = vmatpush2.bf16.msra.mxu0 %v1542
    %1865 = vmatprep.subr.bf16.mxu0 %v1541
    %1866 = vmatpush2.bf16.msra.mxu0 %v1540
    %1867 = vmatprep.subr.bf16.mxu0 %v1539
    %1868 = vmatpush2.bf16.msra.mxu0 %v1538
    %1869 = vmatprep.mubr.bf16.mxu0 %v883
    %1870 = vmatmul.mubr.bf16.gmra.mxu0 %v882
    %v1871 = vpop.f32.mrf.mxu0
    %v1872 = vadd.f32 %v1829, %v1871
    %v1873 = vpop.f32.mrf.mxu0
    %v1874 = vadd.f32 %v1831, %v1873
    %v1875 = vpop.f32.mrf.mxu0
    %v1876 = vadd.f32 %v1833, %v1875
    %v1877 = vpop.f32.mrf.mxu0
    %v1878 = vadd.f32 %v1835, %v1877
    %1879 = vdwg.mxu0
    %1880 = vmatprep.subr.bf16.mxu0 %v1569
    %1881 = vmatpush1.bf16.msra.mxu0 %v1568
    %1882 = vmatprep.subr.bf16.mxu0 %v1567
    %1883 = vmatpush1.bf16.msra.mxu0 %v1566
    %1884 = vmatprep.subr.bf16.mxu0 %v1565
    %1885 = vmatpush1.bf16.msra.mxu0 %v1564
    %1886 = vmatprep.subr.bf16.mxu0 %v1563
    %1887 = vmatpush1.bf16.msra.mxu0 %v1562
    %1888 = vmatprep.subr.bf16.mxu0 %v1561
    %1889 = vmatpush1.bf16.msra.mxu0 %v1560
    %1890 = vmatprep.subr.bf16.mxu0 %v1559
    %1891 = vmatpush1.bf16.msra.mxu0 %v1558
    %1892 = vmatprep.subr.bf16.mxu0 %v1557
    %1893 = vmatpush1.bf16.msra.mxu0 %v1556
    %1894 = vmatprep.subr.bf16.mxu0 %v1555
    %1895 = vmatpush1.bf16.msra.mxu0 %v1554
    %1896 = vmatprep.subr.bf16.mxu0 %v1585
    %1897 = vmatpush2.bf16.msra.mxu0 %v1584
    %1898 = vmatprep.subr.bf16.mxu0 %v1583
    %1899 = vmatpush2.bf16.msra.mxu0 %v1582
    %1900 = vmatprep.subr.bf16.mxu0 %v1581
    %1901 = vmatpush2.bf16.msra.mxu0 %v1580
    %1902 = vmatprep.subr.bf16.mxu0 %v1579
    %1903 = vmatpush2.bf16.msra.mxu0 %v1578
    %1904 = vmatprep.subr.bf16.mxu0 %v1577
    %1905 = vmatpush2.bf16.msra.mxu0 %v1576
    %1906 = vmatprep.subr.bf16.mxu0 %v1575
    %1907 = vmatpush2.bf16.msra.mxu0 %v1574
    %1908 = vmatprep.subr.bf16.mxu0 %v1573
    %1909 = vmatpush2.bf16.msra.mxu0 %v1572
    %1910 = vmatprep.subr.bf16.mxu0 %v1571
    %1911 = vmatpush2.bf16.msra.mxu0 %v1570
    %1912 = vmatprep.mubr.bf16.mxu0 %v885
    %1913 = vmatmul.mubr.bf16.gmra.mxu0 %v884
    %v1914 = vpop.f32.mrf.mxu0
    %v1915 = vadd.f32 %v1872, %v1914
    %v1916 = vpop.f32.mrf.mxu0
    %v1917 = vadd.f32 %v1874, %v1916
    %v1918 = vpop.f32.mrf.mxu0
    %v1919 = vadd.f32 %v1876, %v1918
    %v1920 = vpop.f32.mrf.mxu0
    %v1921 = vadd.f32 %v1878, %v1920
    %1922 = vdwg.mxu0
    %1923 = vmatprep.subr.bf16.mxu0 %v1601
    %1924 = vmatpush1.bf16.msra.mxu0 %v1600
    %1925 = vmatprep.subr.bf16.mxu0 %v1599
    %1926 = vmatpush1.bf16.msra.mxu0 %v1598
    %1927 = vmatprep.subr.bf16.mxu0 %v1597
    %1928 = vmatpush1.bf16.msra.mxu0 %v1596
    %1929 = vmatprep.subr.bf16.mxu0 %v1595
    %1930 = vmatpush1.bf16.msra.mxu0 %v1594
    %1931 = vmatprep.subr.bf16.mxu0 %v1593
    %1932 = vmatpush1.bf16.msra.mxu0 %v1592
    %1933 = vmatprep.subr.bf16.mxu0 %v1591
    %1934 = vmatpush1.bf16.msra.mxu0 %v1590
    %1935 = vmatprep.subr.bf16.mxu0 %v1589
    %1936 = vmatpush1.bf16.msra.mxu0 %v1588
    %1937 = vmatprep.subr.bf16.mxu0 %v1587
    %1938 = vmatpush1.bf16.msra.mxu0 %v1586
    %1939 = vmatprep.subr.bf16.mxu0 %v1617
    %1940 = vmatpush2.bf16.msra.mxu0 %v1616
    %1941 = vmatprep.subr.bf16.mxu0 %v1615
    %1942 = vmatpush2.bf16.msra.mxu0 %v1614
    %1943 = vmatprep.subr.bf16.mxu0 %v1613
    %1944 = vmatpush2.bf16.msra.mxu0 %v1612
    %1945 = vmatprep.subr.bf16.mxu0 %v1611
    %1946 = vmatpush2.bf16.msra.mxu0 %v1610
    %1947 = vmatprep.subr.bf16.mxu0 %v1609
    %1948 = vmatpush2.bf16.msra.mxu0 %v1608
    %1949 = vmatprep.subr.bf16.mxu0 %v1607
    %1950 = vmatpush2.bf16.msra.mxu0 %v1606
    %1951 = vmatprep.subr.bf16.mxu0 %v1605
    %1952 = vmatpush2.bf16.msra.mxu0 %v1604
    %1953 = vmatprep.subr.bf16.mxu0 %v1603
    %1954 = vmatpush2.bf16.msra.mxu0 %v1602
    %1955 = vmatprep.mubr.bf16.mxu0 %v887
    %1956 = vmatmul.mubr.bf16.gmra.mxu0 %v886
    %v1957 = vpop.f32.mrf.mxu0
    %v1958 = vadd.f32 %v1915, %v1957
    %v1959 = vpop.f32.mrf.mxu0
    %v1960 = vadd.f32 %v1917, %v1959
    %v1961 = vpop.f32.mrf.mxu0
    %v1962 = vadd.f32 %v1919, %v1961
    %v1963 = vpop.f32.mrf.mxu0
    %v1964 = vadd.f32 %v1921, %v1963
    %1965 = vdwg.mxu0
    %1966 = vmatprep.subr.bf16.mxu0 %v1633
    %1967 = vmatpush1.bf16.msra.mxu0 %v1632
    %1968 = vmatprep.subr.bf16.mxu0 %v1631
    %1969 = vmatpush1.bf16.msra.mxu0 %v1630
    %1970 = vmatprep.subr.bf16.mxu0 %v1629
    %1971 = vmatpush1.bf16.msra.mxu0 %v1628
    %1972 = vmatprep.subr.bf16.mxu0 %v1627
    %1973 = vmatpush1.bf16.msra.mxu0 %v1626
    %1974 = vmatprep.subr.bf16.mxu0 %v1625
    %1975 = vmatpush1.bf16.msra.mxu0 %v1624
    %1976 = vmatprep.subr.bf16.mxu0 %v1623
    %1977 = vmatpush1.bf16.msra.mxu0 %v1622
    %1978 = vmatprep.subr.bf16.mxu0 %v1621
    %1979 = vmatpush1.bf16.msra.mxu0 %v1620
    %1980 = vmatprep.subr.bf16.mxu0 %v1619
    %1981 = vmatpush1.bf16.msra.mxu0 %v1618
    %1982 = vmatprep.subr.bf16.mxu0 0
    %1983 = vmatpush2.bf16.msra.mxu0 0
    %1984 = vmatprep.subr.bf16.mxu0 0
    %1985 = vmatpush2.bf16.msra.mxu0 0
    %1986 = vmatprep.subr.bf16.mxu0 0
    %1987 = vmatpush2.bf16.msra.mxu0 0
    %1988 = vmatprep.subr.bf16.mxu0 0
    %1989 = vmatpush2.bf16.msra.mxu0 0
    %1990 = vmatprep.subr.bf16.mxu0 0
    %1991 = vmatpush2.bf16.msra.mxu0 0
    %1992 = vmatprep.subr.bf16.mxu0 %v1639
    %1993 = vmatpush2.bf16.msra.mxu0 %v1638
    %1994 = vmatprep.subr.bf16.mxu0 %v1637
    %1995 = vmatpush2.bf16.msra.mxu0 %v1636
    %1996 = vmatprep.subr.bf16.mxu0 %v1635
    %1997 = vmatpush2.bf16.msra.mxu0 %v1634
    %1998 = vmatprep.mubr.bf16.mxu0 %v1792
    %1999 = vmatmul.mubr.bf16.gmra.mxu0 %v888
    %v2000 = vpop.f32.mrf.mxu0
    %v2001 = vadd.f32 %v1958, %v2000
    %v2002 = vpop.f32.mrf.mxu0
    %v2003 = vadd.f32 %v1960, %v2002
    %v2004 = vpop.f32.mrf.mxu0
    %v2005 = vadd.f32 %v1962, %v2004
    %v2006 = vpop.f32.mrf.mxu0
    %v2007 = vadd.f32 %v1964, %v2006
    %2008 = vdwg.mxu0
    %v2009 = vld [vmem:[%s5] sm:$0xff]
    %v2010 = vld [vmem:[%s5 + $0x8] sm:$0xff]
    %v2011 = vld [vmem:[%s5 + $0x10] sm:$0xff]
    %v2012 = vld [vmem:[%s5 + $0x18] sm:$0xff]
    %v2013 = vld [vmem:[%s5 + $0x20] sm:$0xff]
    %v2014 = vld [vmem:[%s5 + $0x28] sm:$0xff]
    %v2015 = vld [vmem:[%s5 + $0x30] sm:$0xff]
    %v2016 = vld [vmem:[%s5 + $0x38] sm:$0xff]
    %v2017 = vld [vmem:[%s5 + $0x40] sm:$0xff]
    %v2018 = vld [vmem:[%s5 + $0x48] sm:$0xff]
    %v2019 = vld [vmem:[%s5 + $0x50] sm:$0xff]
    %v2020 = vld [vmem:[%s5 + $0x58] sm:$0xff]
    %v2021 = vld [vmem:[%s5 + $0x60] sm:$0xff]
    %v2022 = vld [vmem:[%s5 + $0x68] sm:$0xff]
    %v2023 = vld [vmem:[%s5 + $0x70] sm:$0xff]
    %v2024 = vld [vmem:[%s5 + $0x78] sm:$0xff]
    %v2025 = vld [vmem:[%s5 + $0x80] sm:$0xff]
    %v2026 = vld [vmem:[%s5 + $0x88] sm:$0xff]
    %v2027 = vld [vmem:[%s5 + $0x90] sm:$0xff]
    %v2028 = vld [vmem:[%s5 + $0x98] sm:$0xff]
    %v2029 = vld [vmem:[%s5 + $0xa0] sm:$0xff]
    %v2030 = vld [vmem:[%s5 + $0xa8] sm:$0xff]
    %v2031 = vld [vmem:[%s5 + $0xb0] sm:$0xff]
    %v2032 = vld [vmem:[%s5 + $0xb8] sm:$0xff]
    %v2033 = vld [vmem:[%s5 + $0xc0] sm:$0xff]
    %v2034 = vld [vmem:[%s5 + $0xc8] sm:$0xff]
    %v2035 = vld [vmem:[%s5 + $0xd0] sm:$0xff]
    %v2036 = vld [vmem:[%s5 + $0xd8] sm:$0xff]
    %v2037 = vld [vmem:[%s5 + $0xe0] sm:$0xff]
    %v2038 = vld [vmem:[%s5 + $0xe8] sm:$0xff]
    %v2039 = vld [vmem:[%s5 + $0xf0] sm:$0xff]
    %v2040 = vld [vmem:[%s5 + $0xf8] sm:$0xff]
    %v2041 = vld [vmem:[%s5 + $0x100] sm:$0xff]
    %v2042 = vld [vmem:[%s5 + $0x108] sm:$0xff]
    %v2043 = vld [vmem:[%s5 + $0x110] sm:$0xff]
    %v2044 = vld [vmem:[%s5 + $0x118] sm:$0xff]
    %v2045 = vld [vmem:[%s5 + $0x120] sm:$0xff]
    %v2046 = vld [vmem:[%s5 + $0x128] sm:$0xff]
    %v2047 = vld [vmem:[%s5 + $0x130] sm:$0xff]
    %v2048 = vld [vmem:[%s5 + $0x138] sm:$0xff]
    %v2049 = vld [vmem:[%s5 + $0x140] sm:$0xff]
    %v2050 = vld [vmem:[%s5 + $0x148] sm:$0xff]
    %v2051 = vld [vmem:[%s5 + $0x150] sm:$0xff]
    %v2052 = vld [vmem:[%s5 + $0x158] sm:$0xff]
    %v2053 = vld [vmem:[%s5 + $0x160] sm:$0xff]
    %v2054 = vld [vmem:[%s5 + $0x168] sm:$0xff]
    %v2055 = vld [vmem:[%s5 + $0x170] sm:$0xff]
    %v2056 = vld [vmem:[%s5 + $0x178] sm:$0xff]
    %v2057 = vld [vmem:[%s5 + $0x180] sm:$0xff]
    %v2058 = vld [vmem:[%s5 + $0x188] sm:$0xff]
    %v2059 = vld [vmem:[%s5 + $0x190] sm:$0xff]
    %v2060 = vld [vmem:[%s5 + $0x198] sm:$0xff]
    %v2061 = vld [vmem:[%s5 + $0x1a0] sm:$0xff]
    %v2062 = vld [vmem:[%s5 + $0x1a8] sm:$0xff]
    %v2063 = vld [vmem:[%s5 + $0x1b0] sm:$0xff]
    %v2064 = vld [vmem:[%s5 + $0x1b8] sm:$0xff]
    %v2065 = vld [vmem:[%s5 + $0x1c0] sm:$0xff]
    %v2066 = vld [vmem:[%s5 + $0x1c8] sm:$0xff]
    %v2067 = vld [vmem:[%s5 + $0x1d0] sm:$0xff]
    %v2068 = vld [vmem:[%s5 + $0x1d8] sm:$0xff]
    %v2069 = vld [vmem:[%s5 + $0x1e0] sm:$0xff]
    %v2070 = vld [vmem:[%s5 + $0x1e8] sm:$0xff]
    %v2071 = vld [vmem:[%s5 + $0x1f0] sm:$0xff]
    %v2072 = vld [vmem:[%s5 + $0x1f8] sm:$0xff]
    %v2073 = vld [vmem:[%s5 + $0x200] sm:$0xff]
    %v2074 = vld [vmem:[%s5 + $0x208] sm:$0xff]
    %v2075 = vld [vmem:[%s5 + $0x210] sm:$0xff]
    %v2076 = vld [vmem:[%s5 + $0x218] sm:$0xff]
    %v2077 = vld [vmem:[%s5 + $0x220] sm:$0xff]
    %v2078 = vld [vmem:[%s5 + $0x228] sm:$0xff]
    %v2079 = vld [vmem:[%s5 + $0x230] sm:$0xff]
    %v2080 = vld [vmem:[%s5 + $0x238] sm:$0xff]
    %v2081 = vld [vmem:[%s5 + $0x240] sm:$0xff]
    %v2082 = vld [vmem:[%s5 + $0x248] sm:$0xff]
    %v2083 = vld [vmem:[%s5 + $0x250] sm:$0xff]
    %v2084 = vld [vmem:[%s5 + $0x258] sm:$0xff]
    %v2085 = vld [vmem:[%s5 + $0x260] sm:$0xff]
    %v2086 = vld [vmem:[%s5 + $0x268] sm:$0xff]
    %v2087 = vld [vmem:[%s5 + $0x270] sm:$0xff]
    %v2088 = vld [vmem:[%s5 + $0x278] sm:$0xff]
    %v2089 = vld [vmem:[%s5 + $0x280] sm:$0xff]
    %v2090 = vld [vmem:[%s5 + $0x288] sm:$0xff]
    %v2091 = vld [vmem:[%s5 + $0x290] sm:$0xff]
    %v2092 = vld [vmem:[%s5 + $0x298] sm:$0xff]
    %v2093 = vld [vmem:[%s5 + $0x2a0] sm:$0xff]
    %v2094 = vld [vmem:[%s5 + $0x2a8] sm:$0xff]
    %v2095 = vld [vmem:[%s5 + $0x2b0] sm:$0xff]
    %v2096 = vld [vmem:[%s5 + $0x2b8] sm:$0xff]
    %v2097 = vld [vmem:[%s5 + $0x2c0] sm:$0xff]
    %v2098 = vld [vmem:[%s5 + $0x2c8] sm:$0xff]
    %v2099 = vld [vmem:[%s5 + $0x2d0] sm:$0xff]
    %v2100 = vld [vmem:[%s5 + $0x2d8] sm:$0xff]
    %v2101 = vld [vmem:[%s5 + $0x2e0] sm:$0xff]
    %v2102 = vld [vmem:[%s5 + $0x2e8] sm:$0xff]
    %v2103 = vld [vmem:[%s5 + $0x2f0] sm:$0xff]
    %v2104 = vld [vmem:[%s5 + $0x2f8] sm:$0xff]
    %v2105 = vld [vmem:[%s5 + $0x300] sm:$0xff]
    %v2106 = vld [vmem:[%s5 + $0x308] sm:$0xff]
    %v2107 = vld [vmem:[%s5 + $0x310] sm:$0xff]
    %v2108 = vld [vmem:[%s5 + $0x318] sm:$0xff]
    %v2109 = vld [vmem:[%s5 + $0x320] sm:$0xff]
    %v2110 = vld [vmem:[%s5 + $0x328] sm:$0xff]
    %v2111 = vld [vmem:[%s5 + $0x330] sm:$0xff]
    %v2112 = vld [vmem:[%s5 + $0x338] sm:$0xff]
    %v2113 = vld [vmem:[%s5 + $0x340] sm:$0xff]
    %v2114 = vld [vmem:[%s5 + $0x348] sm:$0xff]
    %v2115 = vld [vmem:[%s5 + $0x350] sm:$0xff]
    %v2116 = vld [vmem:[%s5 + $0x358] sm:$0xff]
    %v2117 = vld [vmem:[%s5 + $0x360] sm:$0xff]
    %v2118 = vld [vmem:[%s5 + $0x368] sm:$0xff]
    %v2119 = vld [vmem:[%s5 + $0x370] sm:$0xff]
    %v2120 = vld [vmem:[%s5 + $0x378] sm:$0xff]
    %v2121 = vld [vmem:[%s5 + $0x380] sm:$0xff]
    %v2122 = vld [vmem:[%s5 + $0x388] sm:$0xff]
    %v2123 = vld [vmem:[%s5 + $0x390] sm:$0xff]
    %v2124 = vld [vmem:[%s5 + $0x398] sm:$0xff]
    %v2125 = vld [vmem:[%s5 + $0x3a0] sm:$0xff]
    %v2126 = vld [vmem:[%s5 + $0x3a8] sm:$0xff]
    %v2127 = vld [vmem:[%s5 + $0x3b0] sm:$0xff]
    %v2128 = vld [vmem:[%s5 + $0x3b8] sm:$0xff]
    %v2129 = vld [vmem:[%s5 + $0x3c0] sm:$0xff]
    %v2130 = vld [vmem:[%s5 + $0x3c8] sm:$0xff]
    %v2131 = vld [vmem:[%s5 + $0x3d0] sm:$0xff]
    %v2132 = vld [vmem:[%s5 + $0x3d8] sm:$0xff]
    %v2133 = vld [vmem:[%s5 + $0x3e0] sm:$0xff]
    %v2134 = vld [vmem:[%s5 + $0x3e8] sm:$0xff]
    %v2135 = vld [vmem:[%s5 + $0x3f0] sm:$0xff]
    %v2136 = vld [vmem:[%s5 + $0x3f8] sm:$0xff]
    %v2137 = vld [vmem:[%s5 + $0x400] sm:$0xff]
    %v2138 = vld [vmem:[%s5 + $0x408] sm:$0xff]
    %v2139 = vld [vmem:[%s5 + $0x410] sm:$0xff]
    %v2140 = vld [vmem:[%s5 + $0x418] sm:$0xff]
    %v2141 = vld [vmem:[%s5 + $0x420] sm:$0xff]
    %v2142 = vld [vmem:[%s5 + $0x428] sm:$0xff]
    %v2143 = vld [vmem:[%s5 + $0x430] sm:$0xff]
    %v2144 = vld [vmem:[%s5 + $0x438] sm:$0xff]
    %v2145 = vld [vmem:[%s5 + $0x440] sm:$0xff]
    %v2146 = vld [vmem:[%s5 + $0x448] sm:$0xff]
    %v2147 = vld [vmem:[%s5 + $0x450] sm:$0xff]
    %v2148 = vld [vmem:[%s5 + $0x458] sm:$0xff]
    %v2149 = vld [vmem:[%s5 + $0x460] sm:$0xff]
    %v2150 = vld [vmem:[%s5 + $0x468] sm:$0xff]
    %v2151 = vld [vmem:[%s5 + $0x470] sm:$0xff]
    %v2152 = vld [vmem:[%s5 + $0x478] sm:$0xff]
    %v2153 = vld [vmem:[%s5 + $0x480] sm:$0xff]
    %v2154 = vld [vmem:[%s5 + $0x488] sm:$0xff]
    %v2155 = vld [vmem:[%s5 + $0x490] sm:$0xff]
    %v2156 = vld [vmem:[%s5 + $0x498] sm:$0xff]
    %v2157 = vld [vmem:[%s5 + $0x4a0] sm:$0xff]
    %v2158 = vld [vmem:[%s5 + $0x4a8] sm:$0xff]
    %v2309 = vunpack.c.l.b16 %v2009
    %v2310 = vunpack.c.h.b16 %v2009
    %v2311 = vunpack.c.l.b16 %v2010
    %v2312 = vunpack.c.h.b16 %v2010
    %v2313 = vunpack.c.l.b16 %v2011
    %v2314 = vunpack.c.h.b16 %v2011
    %v2315 = vunpack.c.l.b16 %v2012
    %v2316 = vunpack.c.h.b16 %v2012
    %v2317 = vunpack.c.l.b16 %v2013
    %v2318 = vunpack.c.h.b16 %v2013
    %v2319 = vunpack.c.l.b16 %v2014
    %v2320 = vunpack.c.h.b16 %v2014
    %v2321 = vunpack.c.l.b16 %v2015
    %v2322 = vunpack.c.h.b16 %v2015
    %v2323 = vunpack.c.l.b16 %v2016
    %v2324 = vunpack.c.h.b16 %v2016
    %v2325 = vunpack.c.l.b16 %v2017
    %v2326 = vunpack.c.h.b16 %v2017
    %v2327 = vunpack.c.l.b16 %v2018
    %v2328 = vunpack.c.h.b16 %v2018
    %v2329 = vunpack.c.l.b16 %v2019
    %v2330 = vunpack.c.h.b16 %v2019
    %v2331 = vunpack.c.l.b16 %v2020
    %v2332 = vunpack.c.h.b16 %v2020
    %v2333 = vunpack.c.l.b16 %v2021
    %v2334 = vunpack.c.h.b16 %v2021
    %v2335 = vunpack.c.l.b16 %v2022
    %v2336 = vunpack.c.h.b16 %v2022
    %v2337 = vunpack.c.l.b16 %v2023
    %v2338 = vunpack.c.h.b16 %v2023
    %v2339 = vunpack.c.l.b16 %v2024
    %v2340 = vunpack.c.h.b16 %v2024
    %v2341 = vunpack.c.l.b16 %v2025
    %v2342 = vunpack.c.h.b16 %v2025
    %v2343 = vunpack.c.l.b16 %v2026
    %v2344 = vunpack.c.h.b16 %v2026
    %v2345 = vunpack.c.l.b16 %v2027
    %v2346 = vunpack.c.h.b16 %v2027
    %v2347 = vunpack.c.l.b16 %v2028
    %v2348 = vunpack.c.h.b16 %v2028
    %v2349 = vunpack.c.l.b16 %v2029
    %v2350 = vunpack.c.h.b16 %v2029
    %v2351 = vunpack.c.l.b16 %v2030
    %v2352 = vunpack.c.h.b16 %v2030
    %v2353 = vunpack.c.l.b16 %v2031
    %v2354 = vunpack.c.h.b16 %v2031
    %v2355 = vunpack.c.l.b16 %v2032
    %v2356 = vunpack.c.h.b16 %v2032
    %v2357 = vunpack.c.l.b16 %v2033
    %v2358 = vunpack.c.h.b16 %v2033
    %v2359 = vunpack.c.l.b16 %v2034
    %v2360 = vunpack.c.h.b16 %v2034
    %v2361 = vunpack.c.l.b16 %v2035
    %v2362 = vunpack.c.h.b16 %v2035
    %v2363 = vunpack.c.l.b16 %v2036
    %v2364 = vunpack.c.h.b16 %v2036
    %v2365 = vunpack.c.l.b16 %v2037
    %v2366 = vunpack.c.h.b16 %v2037
    %v2367 = vunpack.c.l.b16 %v2038
    %v2368 = vunpack.c.h.b16 %v2038
    %v2369 = vunpack.c.l.b16 %v2039
    %v2370 = vunpack.c.h.b16 %v2039
    %v2371 = vunpack.c.l.b16 %v2040
    %v2372 = vunpack.c.h.b16 %v2040
    %v2373 = vunpack.c.l.b16 %v2041
    %v2374 = vunpack.c.h.b16 %v2041
    %v2375 = vunpack.c.l.b16 %v2042
    %v2376 = vunpack.c.h.b16 %v2042
    %v2377 = vunpack.c.l.b16 %v2043
    %v2378 = vunpack.c.h.b16 %v2043
    %v2379 = vunpack.c.l.b16 %v2044
    %v2380 = vunpack.c.h.b16 %v2044
    %v2381 = vunpack.c.l.b16 %v2045
    %v2382 = vunpack.c.h.b16 %v2045
    %v2383 = vunpack.c.l.b16 %v2046
    %v2384 = vunpack.c.h.b16 %v2046
    %v2385 = vunpack.c.l.b16 %v2047
    %v2386 = vunpack.c.h.b16 %v2047
    %v2387 = vunpack.c.l.b16 %v2048
    %v2388 = vunpack.c.h.b16 %v2048
    %v2389 = vunpack.c.l.b16 %v2049
    %v2390 = vunpack.c.h.b16 %v2049
    %v2391 = vunpack.c.l.b16 %v2050
    %v2392 = vunpack.c.h.b16 %v2050
    %v2393 = vunpack.c.l.b16 %v2051
    %v2394 = vunpack.c.h.b16 %v2051
    %v2395 = vunpack.c.l.b16 %v2052
    %v2396 = vunpack.c.h.b16 %v2052
    %v2397 = vunpack.c.l.b16 %v2053
    %v2398 = vunpack.c.h.b16 %v2053
    %v2399 = vunpack.c.l.b16 %v2054
    %v2400 = vunpack.c.h.b16 %v2054
    %v2401 = vunpack.c.l.b16 %v2055
    %v2402 = vunpack.c.h.b16 %v2055
    %v2403 = vunpack.c.l.b16 %v2056
    %v2404 = vunpack.c.h.b16 %v2056
    %v2405 = vunpack.c.l.b16 %v2057
    %v2406 = vunpack.c.h.b16 %v2057
    %v2407 = vunpack.c.l.b16 %v2058
    %v2408 = vunpack.c.h.b16 %v2058
    %v2409 = vunpack.c.l.b16 %v2059
    %v2410 = vunpack.c.h.b16 %v2059
    %v2411 = vunpack.c.l.b16 %v2060
    %v2412 = vunpack.c.h.b16 %v2060
    %v2413 = vunpack.c.l.b16 %v2061
    %v2414 = vunpack.c.h.b16 %v2061
    %v2415 = vunpack.c.l.b16 %v2062
    %v2416 = vunpack.c.h.b16 %v2062
    %v2417 = vunpack.c.l.b16 %v2063
    %v2418 = vunpack.c.h.b16 %v2063
    %v2419 = vunpack.c.l.b16 %v2064
    %v2420 = vunpack.c.h.b16 %v2064
    %v2421 = vunpack.c.l.b16 %v2065
    %v2422 = vunpack.c.h.b16 %v2065
    %v2423 = vunpack.c.l.b16 %v2066
    %v2424 = vunpack.c.h.b16 %v2066
    %v2425 = vunpack.c.l.b16 %v2067
    %v2426 = vunpack.c.h.b16 %v2067
    %v2427 = vunpack.c.l.b16 %v2068
    %v2428 = vunpack.c.h.b16 %v2068
    %v2429 = vunpack.c.l.b16 %v2069
    %v2430 = vunpack.c.h.b16 %v2069
    %v2431 = vunpack.c.l.b16 %v2070
    %v2432 = vunpack.c.h.b16 %v2070
    %v2433 = vunpack.c.l.b16 %v2071
    %v2434 = vunpack.c.h.b16 %v2071
    %v2435 = vunpack.c.l.b16 %v2072
    %v2436 = vunpack.c.h.b16 %v2072
    %v2437 = vunpack.c.l.b16 %v2073
    %v2438 = vunpack.c.h.b16 %v2073
    %v2439 = vunpack.c.l.b16 %v2074
    %v2440 = vunpack.c.h.b16 %v2074
    %v2441 = vunpack.c.l.b16 %v2075
    %v2442 = vunpack.c.h.b16 %v2075
    %v2443 = vunpack.c.l.b16 %v2076
    %v2444 = vunpack.c.h.b16 %v2076
    %v2445 = vunpack.c.l.b16 %v2077
    %v2446 = vunpack.c.h.b16 %v2077
    %v2447 = vunpack.c.l.b16 %v2078
    %v2448 = vunpack.c.h.b16 %v2078
    %v2449 = vunpack.c.l.b16 %v2079
    %v2450 = vunpack.c.h.b16 %v2079
    %v2451 = vunpack.c.l.b16 %v2080
    %v2452 = vunpack.c.h.b16 %v2080
    %v2453 = vunpack.c.l.b16 %v2081
    %v2454 = vunpack.c.h.b16 %v2081
    %v2455 = vunpack.c.l.b16 %v2082
    %v2456 = vunpack.c.h.b16 %v2082
    %v2457 = vunpack.c.l.b16 %v2083
    %v2458 = vunpack.c.h.b16 %v2083
    %v2459 = vunpack.c.l.b16 %v2084
    %v2460 = vunpack.c.h.b16 %v2084
    %v2461 = vunpack.c.l.b16 %v2085
    %v2462 = vunpack.c.h.b16 %v2085
    %v2463 = vunpack.c.l.b16 %v2086
    %v2464 = vunpack.c.h.b16 %v2086
    %v2465 = vunpack.c.l.b16 %v2087
    %v2466 = vunpack.c.h.b16 %v2087
    %v2467 = vunpack.c.l.b16 %v2088
    %v2468 = vunpack.c.h.b16 %v2088
    %v2469 = vunpack.c.l.b16 %v2089
    %v2470 = vunpack.c.h.b16 %v2089
    %v2471 = vunpack.c.l.b16 %v2090
    %v2472 = vunpack.c.h.b16 %v2090
    %v2473 = vunpack.c.l.b16 %v2091
    %v2474 = vunpack.c.h.b16 %v2091
    %v2475 = vunpack.c.l.b16 %v2092
    %v2476 = vunpack.c.h.b16 %v2092
    %v2477 = vunpack.c.l.b16 %v2093
    %v2478 = vunpack.c.h.b16 %v2093
    %v2479 = vunpack.c.l.b16 %v2094
    %v2480 = vunpack.c.h.b16 %v2094
    %v2481 = vunpack.c.l.b16 %v2095
    %v2482 = vunpack.c.h.b16 %v2095
    %v2483 = vunpack.c.l.b16 %v2096
    %v2484 = vunpack.c.h.b16 %v2096
    %v2485 = vunpack.c.l.b16 %v2097
    %v2486 = vunpack.c.h.b16 %v2097
    %v2487 = vunpack.c.l.b16 %v2098
    %v2488 = vunpack.c.h.b16 %v2098
    %v2489 = vunpack.c.l.b16 %v2099
    %v2490 = vunpack.c.h.b16 %v2099
    %v2491 = vunpack.c.l.b16 %v2100
    %v2492 = vunpack.c.h.b16 %v2100
    %v2493 = vunpack.c.l.b16 %v2101
    %v2494 = vunpack.c.h.b16 %v2101
    %v2495 = vunpack.c.l.b16 %v2102
    %v2496 = vunpack.c.h.b16 %v2102
    %v2497 = vunpack.c.l.b16 %v2103
    %v2498 = vunpack.c.h.b16 %v2103
    %v2499 = vunpack.c.l.b16 %v2104
    %v2500 = vunpack.c.h.b16 %v2104
    %v2501 = vunpack.c.l.b16 %v2105
    %v2502 = vunpack.c.h.b16 %v2105
    %v2503 = vunpack.c.l.b16 %v2106
    %v2504 = vunpack.c.h.b16 %v2106
    %v2505 = vunpack.c.l.b16 %v2107
    %v2506 = vunpack.c.h.b16 %v2107
    %v2507 = vunpack.c.l.b16 %v2108
    %v2508 = vunpack.c.h.b16 %v2108
    %v2509 = vunpack.c.l.b16 %v2109
    %v2510 = vunpack.c.h.b16 %v2109
    %v2511 = vunpack.c.l.b16 %v2110
    %v2512 = vunpack.c.h.b16 %v2110
    %v2513 = vunpack.c.l.b16 %v2111
    %v2514 = vunpack.c.h.b16 %v2111
    %v2515 = vunpack.c.l.b16 %v2112
    %v2516 = vunpack.c.h.b16 %v2112
    %v2517 = vunpack.c.l.b16 %v2113
    %v2518 = vunpack.c.h.b16 %v2113
    %v2519 = vunpack.c.l.b16 %v2114
    %v2520 = vunpack.c.h.b16 %v2114
    %v2521 = vunpack.c.l.b16 %v2115
    %v2522 = vunpack.c.h.b16 %v2115
    %v2523 = vunpack.c.l.b16 %v2116
    %v2524 = vunpack.c.h.b16 %v2116
    %v2525 = vunpack.c.l.b16 %v2117
    %v2526 = vunpack.c.h.b16 %v2117
    %v2527 = vunpack.c.l.b16 %v2118
    %v2528 = vunpack.c.h.b16 %v2118
    %v2529 = vunpack.c.l.b16 %v2119
    %v2530 = vunpack.c.h.b16 %v2119
    %v2531 = vunpack.c.l.b16 %v2120
    %v2532 = vunpack.c.h.b16 %v2120
    %v2533 = vunpack.c.l.b16 %v2121
    %v2534 = vunpack.c.h.b16 %v2121
    %v2535 = vunpack.c.l.b16 %v2122
    %v2536 = vunpack.c.h.b16 %v2122
    %v2537 = vunpack.c.l.b16 %v2123
    %v2538 = vunpack.c.h.b16 %v2123
    %v2539 = vunpack.c.l.b16 %v2124
    %v2540 = vunpack.c.h.b16 %v2124
    %v2541 = vunpack.c.l.b16 %v2125
    %v2542 = vunpack.c.h.b16 %v2125
    %v2543 = vunpack.c.l.b16 %v2126
    %v2544 = vunpack.c.h.b16 %v2126
    %v2545 = vunpack.c.l.b16 %v2127
    %v2546 = vunpack.c.h.b16 %v2127
    %v2547 = vunpack.c.l.b16 %v2128
    %v2548 = vunpack.c.h.b16 %v2128
    %v2549 = vunpack.c.l.b16 %v2129
    %v2550 = vunpack.c.h.b16 %v2129
    %v2551 = vunpack.c.l.b16 %v2130
    %v2552 = vunpack.c.h.b16 %v2130
    %v2553 = vunpack.c.l.b16 %v2131
    %v2554 = vunpack.c.h.b16 %v2131
    %v2555 = vunpack.c.l.b16 %v2132
    %v2556 = vunpack.c.h.b16 %v2132
    %v2557 = vunpack.c.l.b16 %v2133
    %v2558 = vunpack.c.h.b16 %v2133
    %v2559 = vunpack.c.l.b16 %v2134
    %v2560 = vunpack.c.h.b16 %v2134
    %v2561 = vunpack.c.l.b16 %v2135
    %v2562 = vunpack.c.h.b16 %v2135
    %v2563 = vunpack.c.l.b16 %v2136
    %v2564 = vunpack.c.h.b16 %v2136
    %v2565 = vunpack.c.l.b16 %v2137
    %v2566 = vunpack.c.h.b16 %v2137
    %v2567 = vunpack.c.l.b16 %v2138
    %v2568 = vunpack.c.h.b16 %v2138
    %v2569 = vunpack.c.l.b16 %v2139
    %v2570 = vunpack.c.h.b16 %v2139
    %v2571 = vunpack.c.l.b16 %v2140
    %v2572 = vunpack.c.h.b16 %v2140
    %v2573 = vunpack.c.l.b16 %v2141
    %v2574 = vunpack.c.h.b16 %v2141
    %v2575 = vunpack.c.l.b16 %v2142
    %v2576 = vunpack.c.h.b16 %v2142
    %v2577 = vunpack.c.l.b16 %v2143
    %v2578 = vunpack.c.h.b16 %v2143
    %v2579 = vunpack.c.l.b16 %v2144
    %v2580 = vunpack.c.h.b16 %v2144
    %v2581 = vunpack.c.l.b16 %v2145
    %v2582 = vunpack.c.h.b16 %v2145
    %v2583 = vunpack.c.l.b16 %v2146
    %v2584 = vunpack.c.h.b16 %v2146
    %v2585 = vunpack.c.l.b16 %v2147
    %v2586 = vunpack.c.h.b16 %v2147
    %v2587 = vunpack.c.l.b16 %v2148
    %v2588 = vunpack.c.h.b16 %v2148
    %v2589 = vunpack.c.l.b16 %v2149
    %v2590 = vunpack.c.h.b16 %v2149
    %v2591 = vunpack.c.l.b16 %v2150
    %v2592 = vunpack.c.h.b16 %v2150
    %v2593 = vunpack.c.l.b16 %v2151
    %v2594 = vunpack.c.h.b16 %v2151
    %v2595 = vunpack.c.l.b16 %v2152
    %v2596 = vunpack.c.h.b16 %v2152
    %v2597 = vunpack.c.l.b16 %v2153
    %v2598 = vunpack.c.h.b16 %v2153
    %v2599 = vunpack.c.l.b16 %v2154
    %v2600 = vunpack.c.h.b16 %v2154
    %v2601 = vunpack.c.l.b16 %v2155
    %v2602 = vunpack.c.h.b16 %v2155
    %v2603 = vunpack.c.l.b16 %v2156
    %v2604 = vunpack.c.h.b16 %v2156
    %v2605 = vunpack.c.l.b16 %v2157
    %v2606 = vunpack.c.h.b16 %v2157
    %v2607 = vunpack.c.l.b16 %v2158
    %v2608 = vunpack.c.h.b16 %v2158
    %v2609 = vpack.c.b16 %v2311, %v2309
    %v2610 = vpack.c.b16 %v2312, %v2310
    %v2611 = vpack.c.b16 %v2315, %v2313
    %v2612 = vpack.c.b16 %v2316, %v2314
    %v2613 = vpack.c.b16 %v2319, %v2317
    %v2614 = vpack.c.b16 %v2320, %v2318
    %v2615 = vpack.c.b16 %v2323, %v2321
    %v2616 = vpack.c.b16 %v2324, %v2322
    %v2617 = vpack.c.b16 %v2327, %v2325
    %v2618 = vpack.c.b16 %v2328, %v2326
    %v2619 = vpack.c.b16 %v2331, %v2329
    %v2620 = vpack.c.b16 %v2332, %v2330
    %v2621 = vpack.c.b16 %v2335, %v2333
    %v2622 = vpack.c.b16 %v2336, %v2334
    %v2623 = vpack.c.b16 %v2339, %v2337
    %v2624 = vpack.c.b16 %v2340, %v2338
    %v2625 = vpack.c.b16 %v2343, %v2341
    %v2626 = vpack.c.b16 %v2344, %v2342
    %v2627 = vpack.c.b16 %v2347, %v2345
    %v2628 = vpack.c.b16 %v2348, %v2346
    %v2629 = vpack.c.b16 %v2351, %v2349
    %v2630 = vpack.c.b16 %v2352, %v2350
    %v2631 = vpack.c.b16 %v2355, %v2353
    %v2632 = vpack.c.b16 %v2356, %v2354
    %v2633 = vpack.c.b16 %v2359, %v2357
    %v2634 = vpack.c.b16 %v2360, %v2358
    %v2635 = vpack.c.b16 %v2363, %v2361
    %v2636 = vpack.c.b16 %v2364, %v2362
    %v2637 = vpack.c.b16 %v2367, %v2365
    %v2638 = vpack.c.b16 %v2368, %v2366
    %v2639 = vpack.c.b16 %v2371, %v2369
    %v2640 = vpack.c.b16 %v2372, %v2370
    %v2641 = vpack.c.b16 %v2375, %v2373
    %v2642 = vpack.c.b16 %v2376, %v2374
    %v2643 = vpack.c.b16 %v2379, %v2377
    %v2644 = vpack.c.b16 %v2380, %v2378
    %v2645 = vpack.c.b16 %v2383, %v2381
    %v2646 = vpack.c.b16 %v2384, %v2382
    %v2647 = vpack.c.b16 %v2387, %v2385
    %v2648 = vpack.c.b16 %v2388, %v2386
    %v2649 = vpack.c.b16 %v2391, %v2389
    %v2650 = vpack.c.b16 %v2392, %v2390
    %v2651 = vpack.c.b16 %v2395, %v2393
    %v2652 = vpack.c.b16 %v2396, %v2394
    %v2653 = vpack.c.b16 %v2399, %v2397
    %v2654 = vpack.c.b16 %v2400, %v2398
    %v2655 = vpack.c.b16 %v2403, %v2401
    %v2656 = vpack.c.b16 %v2404, %v2402
    %v2657 = vpack.c.b16 %v2407, %v2405
    %v2658 = vpack.c.b16 %v2408, %v2406
    %v2659 = vpack.c.b16 %v2411, %v2409
    %v2660 = vpack.c.b16 %v2412, %v2410
    %v2661 = vpack.c.b16 %v2415, %v2413
    %v2662 = vpack.c.b16 %v2416, %v2414
    %v2663 = vpack.c.b16 %v2419, %v2417
    %v2664 = vpack.c.b16 %v2420, %v2418
    %v2665 = vpack.c.b16 %v2423, %v2421
    %v2666 = vpack.c.b16 %v2424, %v2422
    %v2667 = vpack.c.b16 %v2427, %v2425
    %v2668 = vpack.c.b16 %v2428, %v2426
    %v2669 = vpack.c.b16 %v2431, %v2429
    %v2670 = vpack.c.b16 %v2432, %v2430
    %v2671 = vpack.c.b16 %v2435, %v2433
    %v2672 = vpack.c.b16 %v2436, %v2434
    %v2673 = vpack.c.b16 %v2439, %v2437
    %v2674 = vpack.c.b16 %v2440, %v2438
    %v2675 = vpack.c.b16 %v2443, %v2441
    %v2676 = vpack.c.b16 %v2444, %v2442
    %v2677 = vpack.c.b16 %v2447, %v2445
    %v2678 = vpack.c.b16 %v2448, %v2446
    %v2679 = vpack.c.b16 %v2451, %v2449
    %v2680 = vpack.c.b16 %v2452, %v2450
    %v2681 = vpack.c.b16 %v2455, %v2453
    %v2682 = vpack.c.b16 %v2456, %v2454
    %v2683 = vpack.c.b16 %v2459, %v2457
    %v2684 = vpack.c.b16 %v2460, %v2458
    %v2685 = vpack.c.b16 %v2463, %v2461
    %v2686 = vpack.c.b16 %v2464, %v2462
    %v2687 = vpack.c.b16 %v2467, %v2465
    %v2688 = vpack.c.b16 %v2468, %v2466
    %v2689 = vpack.c.b16 %v2471, %v2469
    %v2690 = vpack.c.b16 %v2472, %v2470
    %v2691 = vpack.c.b16 %v2475, %v2473
    %v2692 = vpack.c.b16 %v2476, %v2474
    %v2693 = vpack.c.b16 %v2479, %v2477
    %v2694 = vpack.c.b16 %v2480, %v2478
    %v2695 = vpack.c.b16 %v2483, %v2481
    %v2696 = vpack.c.b16 %v2484, %v2482
    %v2697 = vpack.c.b16 %v2487, %v2485
    %v2698 = vpack.c.b16 %v2488, %v2486
    %v2699 = vpack.c.b16 %v2491, %v2489
    %v2700 = vpack.c.b16 %v2492, %v2490
    %v2701 = vpack.c.b16 %v2495, %v2493
    %v2702 = vpack.c.b16 %v2496, %v2494
    %v2703 = vpack.c.b16 %v2499, %v2497
    %v2704 = vpack.c.b16 %v2500, %v2498
    %v2705 = vpack.c.b16 %v2503, %v2501
    %v2706 = vpack.c.b16 %v2504, %v2502
    %v2707 = vpack.c.b16 %v2507, %v2505
    %v2708 = vpack.c.b16 %v2508, %v2506
    %v2709 = vpack.c.b16 %v2511, %v2509
    %v2710 = vpack.c.b16 %v2512, %v2510
    %v2711 = vpack.c.b16 %v2515, %v2513
    %v2712 = vpack.c.b16 %v2516, %v2514
    %v2713 = vpack.c.b16 %v2519, %v2517
    %v2714 = vpack.c.b16 %v2520, %v2518
    %v2715 = vpack.c.b16 %v2523, %v2521
    %v2716 = vpack.c.b16 %v2524, %v2522
    %v2717 = vpack.c.b16 %v2527, %v2525
    %v2718 = vpack.c.b16 %v2528, %v2526
    %v2719 = vpack.c.b16 %v2531, %v2529
    %v2720 = vpack.c.b16 %v2532, %v2530
    %v2721 = vpack.c.b16 %v2535, %v2533
    %v2722 = vpack.c.b16 %v2536, %v2534
    %v2723 = vpack.c.b16 %v2539, %v2537
    %v2724 = vpack.c.b16 %v2540, %v2538
    %v2725 = vpack.c.b16 %v2543, %v2541
    %v2726 = vpack.c.b16 %v2544, %v2542
    %v2727 = vpack.c.b16 %v2547, %v2545
    %v2728 = vpack.c.b16 %v2548, %v2546
    %v2729 = vpack.c.b16 %v2551, %v2549
    %v2730 = vpack.c.b16 %v2552, %v2550
    %v2731 = vpack.c.b16 %v2555, %v2553
    %v2732 = vpack.c.b16 %v2556, %v2554
    %v2733 = vpack.c.b16 %v2559, %v2557
    %v2734 = vpack.c.b16 %v2560, %v2558
    %v2735 = vpack.c.b16 %v2563, %v2561
    %v2736 = vpack.c.b16 %v2564, %v2562
    %v2737 = vpack.c.b16 %v2567, %v2565
    %v2738 = vpack.c.b16 %v2568, %v2566
    %v2739 = vpack.c.b16 %v2571, %v2569
    %v2740 = vpack.c.b16 %v2572, %v2570
    %v2741 = vpack.c.b16 %v2575, %v2573
    %v2742 = vpack.c.b16 %v2576, %v2574
    %v2743 = vpack.c.b16 %v2579, %v2577
    %v2744 = vpack.c.b16 %v2580, %v2578
    %v2745 = vpack.c.b16 %v2583, %v2581
    %v2746 = vpack.c.b16 %v2584, %v2582
    %v2747 = vpack.c.b16 %v2587, %v2585
    %v2748 = vpack.c.b16 %v2588, %v2586
    %v2749 = vpack.c.b16 %v2591, %v2589
    %v2750 = vpack.c.b16 %v2592, %v2590
    %v2751 = vpack.c.b16 %v2595, %v2593
    %v2752 = vpack.c.b16 %v2596, %v2594
    %v2753 = vpack.c.b16 %v2599, %v2597
    %v2754 = vpack.c.b16 %v2600, %v2598
    %v2755 = vpack.c.b16 %v2603, %v2601
    %v2756 = vpack.c.b16 %v2604, %v2602
    %v2757 = vpack.c.b16 %v2607, %v2605
    %v2758 = vpack.c.b16 %v2608, %v2606
    %2909 = vmatprep.subr.bf16.mxu0 %v2624
    %2910 = vmatpush1.bf16.msra.mxu0 %v2623
    %2911 = vmatprep.subr.bf16.mxu0 %v2622
    %2912 = vmatpush1.bf16.msra.mxu0 %v2621
    %2913 = vmatprep.subr.bf16.mxu0 %v2620
    %2914 = vmatpush1.bf16.msra.mxu0 %v2619
    %2915 = vmatprep.subr.bf16.mxu0 %v2618
    %2916 = vmatpush1.bf16.msra.mxu0 %v2617
    %2917 = vmatprep.subr.bf16.mxu0 %v2616
    %2918 = vmatpush1.bf16.msra.mxu0 %v2615
    %2919 = vmatprep.subr.bf16.mxu0 %v2614
    %2920 = vmatpush1.bf16.msra.mxu0 %v2613
    %2921 = vmatprep.subr.bf16.mxu0 %v2612
    %2922 = vmatpush1.bf16.msra.mxu0 %v2611
    %2923 = vmatprep.subr.bf16.mxu0 %v2610
    %2924 = vmatpush1.bf16.msra.mxu0 %v2609
    %2925 = vmatprep.subr.bf16.mxu0 %v2640
    %2926 = vmatpush2.bf16.msra.mxu0 %v2639
    %2927 = vmatprep.subr.bf16.mxu0 %v2638
    %2928 = vmatpush2.bf16.msra.mxu0 %v2637
    %2929 = vmatprep.subr.bf16.mxu0 %v2636
    %2930 = vmatpush2.bf16.msra.mxu0 %v2635
    %2931 = vmatprep.subr.bf16.mxu0 %v2634
    %2932 = vmatpush2.bf16.msra.mxu0 %v2633
    %2933 = vmatprep.subr.bf16.mxu0 %v2632
    %2934 = vmatpush2.bf16.msra.mxu0 %v2631
    %2935 = vmatprep.subr.bf16.mxu0 %v2630
    %2936 = vmatpush2.bf16.msra.mxu0 %v2629
    %2937 = vmatprep.subr.bf16.mxu0 %v2628
    %2938 = vmatpush2.bf16.msra.mxu0 %v2627
    %2939 = vmatprep.subr.bf16.mxu0 %v2626
    %2940 = vmatpush2.bf16.msra.mxu0 %v2625
    %2941 = vmatprep.mubr.bf16.mxu0 %v881
    %2942 = vmatmul.mubr.bf16.gmra.mxu0 %v880
    %v2943 = vpop.f32.mrf.mxu0
    %v2944 = vadd.f32 0.0, %v2943
    %v2945 = vpop.f32.mrf.mxu0
    %v2946 = vadd.f32 0.0, %v2945
    %v2947 = vpop.f32.mrf.mxu0
    %v2948 = vadd.f32 0.0, %v2947
    %v2949 = vpop.f32.mrf.mxu0
    %v2950 = vadd.f32 0.0, %v2949
    %2951 = vdwg.mxu0
    %2952 = vmatprep.subr.bf16.mxu0 %v2656
    %2953 = vmatpush1.bf16.msra.mxu0 %v2655
    %2954 = vmatprep.subr.bf16.mxu0 %v2654
    %2955 = vmatpush1.bf16.msra.mxu0 %v2653
    %2956 = vmatprep.subr.bf16.mxu0 %v2652
    %2957 = vmatpush1.bf16.msra.mxu0 %v2651
    %2958 = vmatprep.subr.bf16.mxu0 %v2650
    %2959 = vmatpush1.bf16.msra.mxu0 %v2649
    %2960 = vmatprep.subr.bf16.mxu0 %v2648
    %2961 = vmatpush1.bf16.msra.mxu0 %v2647
    %2962 = vmatprep.subr.bf16.mxu0 %v2646
    %2963 = vmatpush1.bf16.msra.mxu0 %v2645
    %2964 = vmatprep.subr.bf16.mxu0 %v2644
    %2965 = vmatpush1.bf16.msra.mxu0 %v2643
    %2966 = vmatprep.subr.bf16.mxu0 %v2642
    %2967 = vmatpush1.bf16.msra.mxu0 %v2641
    %2968 = vmatprep.subr.bf16.mxu0 %v2672
    %2969 = vmatpush2.bf16.msra.mxu0 %v2671
    %2970 = vmatprep.subr.bf16.mxu0 %v2670
    %2971 = vmatpush2.bf16.msra.mxu0 %v2669
    %2972 = vmatprep.subr.bf16.mxu0 %v2668
    %2973 = vmatpush2.bf16.msra.mxu0 %v2667
    %2974 = vmatprep.subr.bf16.mxu0 %v2666
    %2975 = vmatpush2.bf16.msra.mxu0 %v2665
    %2976 = vmatprep.subr.bf16.mxu0 %v2664
    %2977 = vmatpush2.bf16.msra.mxu0 %v2663
    %2978 = vmatprep.subr.bf16.mxu0 %v2662
    %2979 = vmatpush2.bf16.msra.mxu0 %v2661
    %2980 = vmatprep.subr.bf16.mxu0 %v2660
    %2981 = vmatpush2.bf16.msra.mxu0 %v2659
    %2982 = vmatprep.subr.bf16.mxu0 %v2658
    %2983 = vmatpush2.bf16.msra.mxu0 %v2657
    %2984 = vmatprep.mubr.bf16.mxu0 %v883
    %2985 = vmatmul.mubr.bf16.gmra.mxu0 %v882
    %v2986 = vpop.f32.mrf.mxu0
    %v2987 = vadd.f32 %v2944, %v2986
    %v2988 = vpop.f32.mrf.mxu0
    %v2989 = vadd.f32 %v2946, %v2988
    %v2990 = vpop.f32.mrf.mxu0
    %v2991 = vadd.f32 %v2948, %v2990
    %v2992 = vpop.f32.mrf.mxu0
    %v2993 = vadd.f32 %v2950, %v2992
    %2994 = vdwg.mxu0
    %2995 = vmatprep.subr.bf16.mxu0 %v2688
    %2996 = vmatpush1.bf16.msra.mxu0 %v2687
    %2997 = vmatprep.subr.bf16.mxu0 %v2686
    %2998 = vmatpush1.bf16.msra.mxu0 %v2685
    %2999 = vmatprep.subr.bf16.mxu0 %v2684
    %3000 = vmatpush1.bf16.msra.mxu0 %v2683
    %3001 = vmatprep.subr.bf16.mxu0 %v2682
    %3002 = vmatpush1.bf16.msra.mxu0 %v2681
    %3003 = vmatprep.subr.bf16.mxu0 %v2680
    %3004 = vmatpush1.bf16.msra.mxu0 %v2679
    %3005 = vmatprep.subr.bf16.mxu0 %v2678
    %3006 = vmatpush1.bf16.msra.mxu0 %v2677
    %3007 = vmatprep.subr.bf16.mxu0 %v2676
    %3008 = vmatpush1.bf16.msra.mxu0 %v2675
    %3009 = vmatprep.subr.bf16.mxu0 %v2674
    %3010 = vmatpush1.bf16.msra.mxu0 %v2673
    %3011 = vmatprep.subr.bf16.mxu0 %v2704
    %3012 = vmatpush2.bf16.msra.mxu0 %v2703
    %3013 = vmatprep.subr.bf16.mxu0 %v2702
    %3014 = vmatpush2.bf16.msra.mxu0 %v2701
    %3015 = vmatprep.subr.bf16.mxu0 %v2700
    %3016 = vmatpush2.bf16.msra.mxu0 %v2699
    %3017 = vmatprep.subr.bf16.mxu0 %v2698
    %3018 = vmatpush2.bf16.msra.mxu0 %v2697
    %3019 = vmatprep.subr.bf16.mxu0 %v2696
    %3020 = vmatpush2.bf16.msra.mxu0 %v2695
    %3021 = vmatprep.subr.bf16.mxu0 %v2694
    %3022 = vmatpush2.bf16.msra.mxu0 %v2693
    %3023 = vmatprep.subr.bf16.mxu0 %v2692
    %3024 = vmatpush2.bf16.msra.mxu0 %v2691
    %3025 = vmatprep.subr.bf16.mxu0 %v2690
    %3026 = vmatpush2.bf16.msra.mxu0 %v2689
    %3027 = vmatprep.mubr.bf16.mxu0 %v885
    %3028 = vmatmul.mubr.bf16.gmra.mxu0 %v884
    %v3029 = vpop.f32.mrf.mxu0
    %v3030 = vadd.f32 %v2987, %v3029
    %v3031 = vpop.f32.mrf.mxu0
    %v3032 = vadd.f32 %v2989, %v3031
    %v3033 = vpop.f32.mrf.mxu0
    %v3034 = vadd.f32 %v2991, %v3033
    %v3035 = vpop.f32.mrf.mxu0
    %v3036 = vadd.f32 %v2993, %v3035
    %3037 = vdwg.mxu0
    %3038 = vmatprep.subr.bf16.mxu0 %v2720
    %3039 = vmatpush1.bf16.msra.mxu0 %v2719
    %3040 = vmatprep.subr.bf16.mxu0 %v2718
    %3041 = vmatpush1.bf16.msra.mxu0 %v2717
    %3042 = vmatprep.subr.bf16.mxu0 %v2716
    %3043 = vmatpush1.bf16.msra.mxu0 %v2715
    %3044 = vmatprep.subr.bf16.mxu0 %v2714
    %3045 = vmatpush1.bf16.msra.mxu0 %v2713
    %3046 = vmatprep.subr.bf16.mxu0 %v2712
    %3047 = vmatpush1.bf16.msra.mxu0 %v2711
    %3048 = vmatprep.subr.bf16.mxu0 %v2710
    %3049 = vmatpush1.bf16.msra.mxu0 %v2709
    %3050 = vmatprep.subr.bf16.mxu0 %v2708
    %3051 = vmatpush1.bf16.msra.mxu0 %v2707
    %3052 = vmatprep.subr.bf16.mxu0 %v2706
    %3053 = vmatpush1.bf16.msra.mxu0 %v2705
    %3054 = vmatprep.subr.bf16.mxu0 %v2736
    %3055 = vmatpush2.bf16.msra.mxu0 %v2735
    %3056 = vmatprep.subr.bf16.mxu0 %v2734
    %3057 = vmatpush2.bf16.msra.mxu0 %v2733
    %3058 = vmatprep.subr.bf16.mxu0 %v2732
    %3059 = vmatpush2.bf16.msra.mxu0 %v2731
    %3060 = vmatprep.subr.bf16.mxu0 %v2730
    %3061 = vmatpush2.bf16.msra.mxu0 %v2729
    %3062 = vmatprep.subr.bf16.mxu0 %v2728
    %3063 = vmatpush2.bf16.msra.mxu0 %v2727
    %3064 = vmatprep.subr.bf16.mxu0 %v2726
    %3065 = vmatpush2.bf16.msra.mxu0 %v2725
    %3066 = vmatprep.subr.bf16.mxu0 %v2724
    %3067 = vmatpush2.bf16.msra.mxu0 %v2723
    %3068 = vmatprep.subr.bf16.mxu0 %v2722
    %3069 = vmatpush2.bf16.msra.mxu0 %v2721
    %3070 = vmatprep.mubr.bf16.mxu0 %v887
    %3071 = vmatmul.mubr.bf16.gmra.mxu0 %v886
    %v3072 = vpop.f32.mrf.mxu0
    %v3073 = vadd.f32 %v3030, %v3072
    %v3074 = vpop.f32.mrf.mxu0
    %v3075 = vadd.f32 %v3032, %v3074
    %v3076 = vpop.f32.mrf.mxu0
    %v3077 = vadd.f32 %v3034, %v3076
    %v3078 = vpop.f32.mrf.mxu0
    %v3079 = vadd.f32 %v3036, %v3078
    %3080 = vdwg.mxu0
    %3081 = vmatprep.subr.bf16.mxu0 %v2752
    %3082 = vmatpush1.bf16.msra.mxu0 %v2751
    %3083 = vmatprep.subr.bf16.mxu0 %v2750
    %3084 = vmatpush1.bf16.msra.mxu0 %v2749
    %3085 = vmatprep.subr.bf16.mxu0 %v2748
    %3086 = vmatpush1.bf16.msra.mxu0 %v2747
    %3087 = vmatprep.subr.bf16.mxu0 %v2746
    %3088 = vmatpush1.bf16.msra.mxu0 %v2745
    %3089 = vmatprep.subr.bf16.mxu0 %v2744
    %3090 = vmatpush1.bf16.msra.mxu0 %v2743
    %3091 = vmatprep.subr.bf16.mxu0 %v2742
    %3092 = vmatpush1.bf16.msra.mxu0 %v2741
    %3093 = vmatprep.subr.bf16.mxu0 %v2740
    %3094 = vmatpush1.bf16.msra.mxu0 %v2739
    %3095 = vmatprep.subr.bf16.mxu0 %v2738
    %3096 = vmatpush1.bf16.msra.mxu0 %v2737
    %3097 = vmatprep.subr.bf16.mxu0 0
    %3098 = vmatpush2.bf16.msra.mxu0 0
    %3099 = vmatprep.subr.bf16.mxu0 0
    %3100 = vmatpush2.bf16.msra.mxu0 0
    %3101 = vmatprep.subr.bf16.mxu0 0
    %3102 = vmatpush2.bf16.msra.mxu0 0
    %3103 = vmatprep.subr.bf16.mxu0 0
    %3104 = vmatpush2.bf16.msra.mxu0 0
    %3105 = vmatprep.subr.bf16.mxu0 0
    %3106 = vmatpush2.bf16.msra.mxu0 0
    %3107 = vmatprep.subr.bf16.mxu0 %v2758
    %3108 = vmatpush2.bf16.msra.mxu0 %v2757
    %3109 = vmatprep.subr.bf16.mxu0 %v2756
    %3110 = vmatpush2.bf16.msra.mxu0 %v2755
    %3111 = vmatprep.subr.bf16.mxu0 %v2754
    %3112 = vmatpush2.bf16.msra.mxu0 %v2753
    %3113 = vmatprep.mubr.bf16.mxu0 %v1792
    %3114 = vmatmul.mubr.bf16.gmra.mxu0 %v888
    %v3115 = vpop.f32.mrf.mxu0
    %v3116 = vadd.f32 %v3073, %v3115
    %v3117 = vpop.f32.mrf.mxu0
    %v3118 = vadd.f32 %v3075, %v3117
    %v3119 = vpop.f32.mrf.mxu0
    %v3120 = vadd.f32 %v3077, %v3119
    %v3121 = vpop.f32.mrf.mxu0
    %v3122 = vadd.f32 %v3079, %v3121
    %3123 = vdwg.mxu0
    %v3124 = vmax.f32 %v2001, %v3116
    %v3125 = vmax.f32 %v2003, %v3118
    %v3126 = vmax.f32 %v2005, %v3120
    %v3127 = vmax.f32 %v2007, %v3122
    %v3128 = vld [vmem:[%s6] sm:$0x3]
    %v3130 = vlaneseq
    %v3131 = vshrl.u32 %v3130, 7
    %v3132 = vsub.s32 0, %v3131
    %v3133 = vrot.slane %v3128, %v3132
    %v3134 = vlaneseq
    %v3135 = vshrl.u32 %v3134, 7
    %v3136 = vsub.s32 1, %v3135
    %v3137 = vrot.slane %v3128, %v3136
    %v3140 = vadd.f32 %v3124, %v3133
    %v3141 = vadd.f32 %v3125, %v3137
    %v3142 = vadd.f32 %v3126, %v3133
    %v3143 = vadd.f32 %v3127, %v3137
    %v3144 = vmax.f32 %v3140, 0.0
    %v3145 = vmax.f32 %v3141, 0.0
    %v3146 = vmax.f32 %v3142, 0.0
    %v3147 = vmax.f32 %v3143, 0.0
    %v3152 = vrot.slane %v3144, 1
    %v3153 = vrot.slane %v3145, 1
    %v3154 = vrot.slane %v3146, 1
    %v3155 = vrot.slane %v3147, 1
    %v3160 = vmax.f32 %v3144, %v3152
    %v3161 = vmax.f32 %v3145, %v3153
    %v3162 = vmax.f32 %v3146, %v3154
    %v3163 = vmax.f32 %v3147, %v3155
    %v3168 = vrot.slane %v3162, 7
    %vm3169 = vcmask 1041409
    %v3170 = vsel %vm3169, %v3168, %v3160
    %v3171 = vrot.slane %v3163, 7
    %v3172 = vsel %vm3169, %v3171, %v3161
    %v3175 = vrot.slane %v3160, 2
    %v3176 = vrot.slane %v3162, 1
    %v3177 = vsel %vm3169, %v3176, %v3175
    %v3178 = vrot.slane %v3161, 2
    %v3179 = vrot.slane %v3163, 1
    %v3180 = vsel %vm3169, %v3179, %v3178
    %3181 = vrot.lane.b32.xlu0 %v3177, 72
    %v3182 = vpop.permute.xlu0 %3181
    %3183 = vrot.lane.b32.xlu0 %v3180, 72
    %v3184 = vpop.permute.xlu0 %3183
    %vm3185 = vcmask 588800
    %v3186 = vsel %vm3185, %v3182, %v3184
    %v3190 = vrot.slane %v3160, 4
    %v3191 = vrot.slane %v3162, 3
    %v3192 = vsel %vm3169, %v3191, %v3190
    %v3193 = vrot.slane %v3161, 4
    %v3194 = vrot.slane %v3163, 3
    %v3195 = vsel %vm3169, %v3194, %v3193
    %3196 = vrot.lane.b32.xlu0 %v3192, 16
    %v3197 = vpop.permute.xlu0 %3196
    %3198 = vrot.lane.b32.xlu0 %v3195, 16
    %v3199 = vpop.permute.xlu0 %3198
    %vm3200 = vcmask 130048
    %v3201 = vsel %vm3200, %v3197, %v3199
    %v3204 = vrot.slane %v3160, 6
    %v3205 = vrot.slane %v3162, 5
    %v3206 = vsel %vm3169, %v3205, %v3204
    %v3207 = vrot.slane %v3161, 6
    %v3208 = vrot.slane %v3163, 5
    %v3209 = vsel %vm3169, %v3208, %v3207
    %3210 = vrot.lane.b32.xlu0 %v3206, 88
    %v3211 = vpop.permute.xlu0 %3210
    %3212 = vrot.lane.b32.xlu0 %v3209, 88
    %v3213 = vpop.permute.xlu0 %3212
    %vm3214 = vcmask 719872
    %v3215 = vsel %vm3214, %v3211, %v3213
    %v3219 = vsel %vm3185, %v3172, %v3182
    %v3220 = vsel %vm3200, %v3184, %v3197
    %v3221 = vsel %vm3214, %v3201, %v3211
    %v3222 = vpack.c.bf16 %v3170, %v3170
    %v3223 = vpack.c.bf16 %v3219, %v3219
    %v3224 = vpack.c.bf16 %v3186, %v3186
    %v3225 = vpack.c.bf16 %v3220, %v3220
    %v3226 = vpack.c.bf16 %v3221, %v3221
    %v3227 = vpack.c.bf16 %v3215, %v3215
    %v3228 = vpack.c.bf16 %v3213, %v3213
    %v3229 = vld [vmem:[%s7] sm:$0xff]
    %v3230 = vld [vmem:[%s7 + $0x8] sm:$0xff]
    %v3231 = vld [vmem:[%s7 + $0x10] sm:$0xff]
    %v3232 = vld [vmem:[%s7 + $0x18] sm:$0xff]
    %v3233 = vld [vmem:[%s7 + $0x20] sm:$0xff]
    %v3234 = vld [vmem:[%s7 + $0x28] sm:$0xff]
    %v3235 = vld [vmem:[%s7 + $0x30] sm:$0xff]
    %v3236 = vld [vmem:[%s7 + $0x38] sm:$0xff]
    %v3237 = vld [vmem:[%s7 + $0x40] sm:$0xff]
    %v3238 = vld [vmem:[%s7 + $0x48] sm:$0xff]
    %v3239 = vld [vmem:[%s7 + $0x50] sm:$0xff]
    %v3240 = vld [vmem:[%s7 + $0x58] sm:$0xff]
    %v3241 = vld [vmem:[%s7 + $0x60] sm:$0xff]
    %v3242 = vld [vmem:[%s7 + $0x68] sm:$0xff]
    %v3243 = vld [vmem:[%s7 + $0x70] sm:$0xff]
    %v3244 = vld [vmem:[%s7 + $0x78] sm:$0xff]
    %v3245 = vld [vmem:[%s7 + $0x80] sm:$0xff]
    %v3246 = vld [vmem:[%s7 + $0x88] sm:$0xff]
    %v3247 = vld [vmem:[%s7 + $0x90] sm:$0xff]
    %v3248 = vld [vmem:[%s7 + $0x98] sm:$0xff]
    %v3249 = vld [vmem:[%s7 + $0xa0] sm:$0xff]
    %v3250 = vld [vmem:[%s7 + $0xa8] sm:$0xff]
    %v3251 = vld [vmem:[%s7 + $0xb0] sm:$0xff]
    %v3252 = vld [vmem:[%s7 + $0xb8] sm:$0xff]
    %v3253 = vld [vmem:[%s7 + $0xc0] sm:$0xff]
    %v3254 = vld [vmem:[%s7 + $0xc8] sm:$0xff]
    %v3255 = vld [vmem:[%s7 + $0xd0] sm:$0xff]
    %v3256 = vld [vmem:[%s7 + $0xd8] sm:$0xff]
    %v3257 = vld [vmem:[%s7 + $0xe0] sm:$0xff]
    %v3258 = vld [vmem:[%s7 + $0xe8] sm:$0xff]
    %v3259 = vld [vmem:[%s7 + $0xf0] sm:$0xff]
    %v3260 = vld [vmem:[%s7 + $0xf8] sm:$0xff]
    %v3261 = vld [vmem:[%s7 + $0x100] sm:$0xff]
    %v3262 = vld [vmem:[%s7 + $0x108] sm:$0xff]
    %v3263 = vld [vmem:[%s7 + $0x110] sm:$0xff]
    %v3264 = vld [vmem:[%s7 + $0x118] sm:$0xff]
    %v3265 = vld [vmem:[%s7 + $0x120] sm:$0xff]
    %v3266 = vld [vmem:[%s7 + $0x128] sm:$0xff]
    %v3267 = vld [vmem:[%s7 + $0x130] sm:$0xff]
    %v3268 = vld [vmem:[%s7 + $0x138] sm:$0xff]
    %v3269 = vld [vmem:[%s7 + $0x140] sm:$0xff]
    %v3270 = vld [vmem:[%s7 + $0x148] sm:$0xff]
    %v3271 = vld [vmem:[%s7 + $0x150] sm:$0xff]
    %v3272 = vld [vmem:[%s7 + $0x158] sm:$0xff]
    %v3273 = vld [vmem:[%s7 + $0x160] sm:$0xff]
    %v3274 = vld [vmem:[%s7 + $0x168] sm:$0xff]
    %v3275 = vld [vmem:[%s7 + $0x170] sm:$0xff]
    %v3276 = vld [vmem:[%s7 + $0x178] sm:$0xff]
    %v3277 = vld [vmem:[%s7 + $0x180] sm:$0xff]
    %v3278 = vld [vmem:[%s7 + $0x188] sm:$0xff]
    %v3279 = vld [vmem:[%s7 + $0x190] sm:$0xff]
    %v3280 = vld [vmem:[%s7 + $0x198] sm:$0xff]
    %v3281 = vld [vmem:[%s7 + $0x1a0] sm:$0xff]
    %v3282 = vld [vmem:[%s7 + $0x1a8] sm:$0xff]
    %v3283 = vld [vmem:[%s7 + $0x1b0] sm:$0xff]
    %v3284 = vld [vmem:[%s7 + $0x1b8] sm:$0xff]
    %v3285 = vld [vmem:[%s7 + $0x1c0] sm:$0xff]
    %v3286 = vld [vmem:[%s7 + $0x1c8] sm:$0xff]
    %v3287 = vld [vmem:[%s7 + $0x1d0] sm:$0xff]
    %v3288 = vld [vmem:[%s7 + $0x1d8] sm:$0xff]
    %v3289 = vld [vmem:[%s7 + $0x1e0] sm:$0xff]
    %v3290 = vld [vmem:[%s7 + $0x1e8] sm:$0xff]
    %v3291 = vld [vmem:[%s7 + $0x1f0] sm:$0xff]
    %v3292 = vld [vmem:[%s7 + $0x1f8] sm:$0xff]
    %v3293 = vld [vmem:[%s7 + $0x200] sm:$0xff]
    %v3294 = vld [vmem:[%s7 + $0x208] sm:$0xff]
    %v3295 = vld [vmem:[%s7 + $0x210] sm:$0xff]
    %v3296 = vld [vmem:[%s7 + $0x218] sm:$0xff]
    %v3297 = vld [vmem:[%s7 + $0x220] sm:$0xff]
    %v3298 = vld [vmem:[%s7 + $0x228] sm:$0xff]
    %v3299 = vld [vmem:[%s7 + $0x230] sm:$0xff]
    %v3300 = vld [vmem:[%s7 + $0x238] sm:$0xff]
    %v3301 = vld [vmem:[%s7 + $0x240] sm:$0xff]
    %v3302 = vld [vmem:[%s7 + $0x248] sm:$0xff]
    %v3303 = vld [vmem:[%s7 + $0x250] sm:$0xff]
    %v3304 = vld [vmem:[%s7 + $0x258] sm:$0xff]
    %v3305 = vld [vmem:[%s7 + $0x260] sm:$0xff]
    %v3306 = vld [vmem:[%s7 + $0x268] sm:$0xff]
    %v3307 = vld [vmem:[%s7 + $0x270] sm:$0xff]
    %v3308 = vld [vmem:[%s7 + $0x278] sm:$0xff]
    %v3309 = vld [vmem:[%s7 + $0x280] sm:$0xff]
    %v3310 = vld [vmem:[%s7 + $0x288] sm:$0xff]
    %v3311 = vld [vmem:[%s7 + $0x290] sm:$0xff]
    %v3312 = vld [vmem:[%s7 + $0x298] sm:$0xff]
    %v3313 = vld [vmem:[%s7 + $0x2a0] sm:$0xff]
    %v3314 = vld [vmem:[%s7 + $0x2a8] sm:$0xff]
    %v3315 = vld [vmem:[%s7 + $0x2b0] sm:$0xff]
    %v3316 = vld [vmem:[%s7 + $0x2b8] sm:$0xff]
    %v3317 = vld [vmem:[%s7 + $0x2c0] sm:$0xff]
    %v3318 = vld [vmem:[%s7 + $0x2c8] sm:$0xff]
    %v3319 = vld [vmem:[%s7 + $0x2d0] sm:$0xff]
    %v3320 = vld [vmem:[%s7 + $0x2d8] sm:$0xff]
    %v3321 = vld [vmem:[%s7 + $0x2e0] sm:$0xff]
    %v3322 = vld [vmem:[%s7 + $0x2e8] sm:$0xff]
    %v3323 = vld [vmem:[%s7 + $0x2f0] sm:$0xff]
    %v3324 = vld [vmem:[%s7 + $0x2f8] sm:$0xff]
    %v3325 = vld [vmem:[%s7 + $0x300] sm:$0xff]
    %v3326 = vld [vmem:[%s7 + $0x308] sm:$0xff]
    %v3327 = vld [vmem:[%s7 + $0x310] sm:$0xff]
    %v3328 = vld [vmem:[%s7 + $0x318] sm:$0xff]
    %v3329 = vld [vmem:[%s7 + $0x320] sm:$0xff]
    %v3330 = vld [vmem:[%s7 + $0x328] sm:$0xff]
    %v3331 = vld [vmem:[%s7 + $0x330] sm:$0xff]
    %v3332 = vld [vmem:[%s7 + $0x338] sm:$0xff]
    %v3333 = vld [vmem:[%s7 + $0x340] sm:$0xff]
    %v3334 = vld [vmem:[%s7 + $0x348] sm:$0xff]
    %v3335 = vld [vmem:[%s7 + $0x350] sm:$0xff]
    %v3336 = vld [vmem:[%s7 + $0x358] sm:$0xff]
    %v3337 = vld [vmem:[%s7 + $0x360] sm:$0xff]
    %v3338 = vld [vmem:[%s7 + $0x368] sm:$0xff]
    %v3339 = vld [vmem:[%s7 + $0x370] sm:$0xff]
    %v3340 = vld [vmem:[%s7 + $0x378] sm:$0xff]
    %v3341 = vld [vmem:[%s7 + $0x380] sm:$0xff]
    %v3342 = vld [vmem:[%s7 + $0x388] sm:$0xff]
    %v3343 = vld [vmem:[%s7 + $0x390] sm:$0xff]
    %v3344 = vld [vmem:[%s7 + $0x398] sm:$0xff]
    %v3345 = vld [vmem:[%s7 + $0x3a0] sm:$0xff]
    %v3346 = vld [vmem:[%s7 + $0x3a8] sm:$0xff]
    %v3347 = vld [vmem:[%s7 + $0x3b0] sm:$0xff]
    %v3348 = vld [vmem:[%s7 + $0x3b8] sm:$0xff]
    %v3349 = vld [vmem:[%s7 + $0x3c0] sm:$0xff]
    %v3350 = vld [vmem:[%s7 + $0x3c8] sm:$0xff]
    %v3351 = vld [vmem:[%s7 + $0x3d0] sm:$0xff]
    %v3352 = vld [vmem:[%s7 + $0x3d8] sm:$0xff]
    %v3353 = vld [vmem:[%s7 + $0x3e0] sm:$0xff]
    %v3354 = vld [vmem:[%s7 + $0x3e8] sm:$0xff]
    %v3355 = vld [vmem:[%s7 + $0x3f0] sm:$0xff]
    %v3356 = vld [vmem:[%s7 + $0x3f8] sm:$0xff]
    %v3357 = vld [vmem:[%s7 + $0x400] sm:$0xff]
    %v3358 = vld [vmem:[%s7 + $0x408] sm:$0xff]
    %v3359 = vld [vmem:[%s7 + $0x410] sm:$0xff]
    %v3360 = vld [vmem:[%s7 + $0x418] sm:$0xff]
    %v3361 = vld [vmem:[%s7 + $0x420] sm:$0xff]
    %v3362 = vld [vmem:[%s7 + $0x428] sm:$0xff]
    %v3363 = vld [vmem:[%s7 + $0x430] sm:$0xff]
    %v3364 = vld [vmem:[%s7 + $0x438] sm:$0xff]
    %v3365 = vld [vmem:[%s7 + $0x440] sm:$0xff]
    %v3366 = vld [vmem:[%s7 + $0x448] sm:$0xff]
    %v3367 = vld [vmem:[%s7 + $0x450] sm:$0xff]
    %v3368 = vld [vmem:[%s7 + $0x458] sm:$0xff]
    %v3369 = vld [vmem:[%s7 + $0x460] sm:$0xff]
    %v3370 = vld [vmem:[%s7 + $0x468] sm:$0xff]
    %v3371 = vld [vmem:[%s7 + $0x470] sm:$0xff]
    %v3372 = vld [vmem:[%s7 + $0x478] sm:$0xff]
    %v3373 = vld [vmem:[%s7 + $0x480] sm:$0xff]
    %v3374 = vld [vmem:[%s7 + $0x488] sm:$0xff]
    %v3375 = vld [vmem:[%s7 + $0x490] sm:$0xff]
    %v3376 = vld [vmem:[%s7 + $0x498] sm:$0xff]
    %v3377 = vld [vmem:[%s7 + $0x4a0] sm:$0xff]
    %v3378 = vld [vmem:[%s7 + $0x4a8] sm:$0xff]
    %v3379 = vld [vmem:[%s7 + $0x4b0] sm:$0xff]
    %v3380 = vld [vmem:[%s7 + $0x4b8] sm:$0xff]
    %v3381 = vld [vmem:[%s7 + $0x4c0] sm:$0xff]
    %v3382 = vld [vmem:[%s7 + $0x4c8] sm:$0xff]
    %v3383 = vld [vmem:[%s7 + $0x4d0] sm:$0xff]
    %v3384 = vld [vmem:[%s7 + $0x4d8] sm:$0xff]
    %v3385 = vld [vmem:[%s7 + $0x4e0] sm:$0xff]
    %v3386 = vld [vmem:[%s7 + $0x4e8] sm:$0xff]
    %v3387 = vld [vmem:[%s7 + $0x4f0] sm:$0xff]
    %v3388 = vld [vmem:[%s7 + $0x4f8] sm:$0xff]
    %v3389 = vld [vmem:[%s7 + $0x500] sm:$0xff]
    %v3390 = vld [vmem:[%s7 + $0x508] sm:$0xff]
    %v3391 = vld [vmem:[%s7 + $0x510] sm:$0xff]
    %v3392 = vld [vmem:[%s7 + $0x518] sm:$0xff]
    %v3393 = vld [vmem:[%s7 + $0x520] sm:$0xff]
    %v3394 = vld [vmem:[%s7 + $0x528] sm:$0xff]
    %v3395 = vld [vmem:[%s7 + $0x530] sm:$0xff]
    %v3396 = vld [vmem:[%s7 + $0x538] sm:$0xff]
    %v3397 = vld [vmem:[%s7 + $0x540] sm:$0xff]
    %v3398 = vld [vmem:[%s7 + $0x548] sm:$0xff]
    %v3399 = vld [vmem:[%s7 + $0x550] sm:$0xff]
    %v3400 = vld [vmem:[%s7 + $0x558] sm:$0xff]
    %v3401 = vld [vmem:[%s7 + $0x560] sm:$0xff]
    %v3402 = vld [vmem:[%s7 + $0x568] sm:$0xff]
    %v3403 = vld [vmem:[%s7 + $0x570] sm:$0xff]
    %v3404 = vld [vmem:[%s7 + $0x578] sm:$0xff]
    %v3405 = vld [vmem:[%s7 + $0x580] sm:$0xff]
    %v3406 = vld [vmem:[%s7 + $0x588] sm:$0xff]
    %v3407 = vld [vmem:[%s7 + $0x590] sm:$0xff]
    %v3408 = vld [vmem:[%s7 + $0x598] sm:$0xff]
    %v3409 = vld [vmem:[%s7 + $0x5a0] sm:$0xff]
    %v3410 = vld [vmem:[%s7 + $0x5a8] sm:$0xff]
    %v3411 = vld [vmem:[%s7 + $0x5b0] sm:$0xff]
    %v3412 = vld [vmem:[%s7 + $0x5b8] sm:$0xff]
    %v3413 = vld [vmem:[%s7 + $0x5c0] sm:$0xff]
    %v3414 = vld [vmem:[%s7 + $0x5c8] sm:$0xff]
    %v3415 = vld [vmem:[%s7 + $0x5d0] sm:$0xff]
    %v3416 = vld [vmem:[%s7 + $0x5d8] sm:$0xff]
    %v3417 = vld [vmem:[%s7 + $0x5e0] sm:$0xff]
    %v3418 = vld [vmem:[%s7 + $0x5e8] sm:$0xff]
    %v3419 = vld [vmem:[%s7 + $0x5f0] sm:$0xff]
    %v3420 = vld [vmem:[%s7 + $0x5f8] sm:$0xff]
    %v3421 = vld [vmem:[%s7 + $0x600] sm:$0xff]
    %v3422 = vld [vmem:[%s7 + $0x608] sm:$0xff]
    %v3423 = vld [vmem:[%s7 + $0x610] sm:$0xff]
    %v3424 = vld [vmem:[%s7 + $0x618] sm:$0xff]
    %v3425 = vld [vmem:[%s7 + $0x620] sm:$0xff]
    %v3426 = vld [vmem:[%s7 + $0x628] sm:$0xff]
    %v3427 = vld [vmem:[%s7 + $0x630] sm:$0xff]
    %v3428 = vld [vmem:[%s7 + $0x638] sm:$0xff]
    %v3429 = vld [vmem:[%s8] sm:$0xf]
    %v3431 = vlaneseq
    %v3432 = vshrl.u32 %v3431, 7
    %v3433 = vsub.s32 0, %v3432
    %v3434 = vrot.slane %v3429, %v3433
    %v3435 = vlaneseq
    %v3436 = vshrl.u32 %v3435, 7
    %v3437 = vsub.s32 1, %v3436
    %v3438 = vrot.slane %v3429, %v3437
    %v3439 = vlaneseq
    %v3440 = vshrl.u32 %v3439, 7
    %v3441 = vsub.s32 2, %v3440
    %v3442 = vrot.slane %v3429, %v3441
    %v3443 = vlaneseq
    %v3444 = vshrl.u32 %v3443, 7
    %v3445 = vsub.s32 3, %v3444
    %v3446 = vrot.slane %v3429, %v3445
    %v3651 = vunpack.c.l.b16 %v3229
    %v3652 = vunpack.c.h.b16 %v3229
    %v3653 = vunpack.c.l.b16 %v3230
    %v3654 = vunpack.c.h.b16 %v3230
    %v3655 = vunpack.c.l.b16 %v3231
    %v3656 = vunpack.c.h.b16 %v3231
    %v3657 = vunpack.c.l.b16 %v3232
    %v3658 = vunpack.c.h.b16 %v3232
    %v3659 = vunpack.c.l.b16 %v3233
    %v3660 = vunpack.c.h.b16 %v3233
    %v3661 = vunpack.c.l.b16 %v3234
    %v3662 = vunpack.c.h.b16 %v3234
    %v3663 = vunpack.c.l.b16 %v3235
    %v3664 = vunpack.c.h.b16 %v3235
    %v3665 = vunpack.c.l.b16 %v3236
    %v3666 = vunpack.c.h.b16 %v3236
    %v3667 = vunpack.c.l.b16 %v3237
    %v3668 = vunpack.c.h.b16 %v3237
    %v3669 = vunpack.c.l.b16 %v3238
    %v3670 = vunpack.c.h.b16 %v3238
    %v3671 = vunpack.c.l.b16 %v3239
    %v3672 = vunpack.c.h.b16 %v3239
    %v3673 = vunpack.c.l.b16 %v3240
    %v3674 = vunpack.c.h.b16 %v3240
    %v3675 = vunpack.c.l.b16 %v3241
    %v3676 = vunpack.c.h.b16 %v3241
    %v3677 = vunpack.c.l.b16 %v3242
    %v3678 = vunpack.c.h.b16 %v3242
    %v3679 = vunpack.c.l.b16 %v3243
    %v3680 = vunpack.c.h.b16 %v3243
    %v3681 = vunpack.c.l.b16 %v3244
    %v3682 = vunpack.c.h.b16 %v3244
    %v3683 = vunpack.c.l.b16 %v3245
    %v3684 = vunpack.c.h.b16 %v3245
    %v3685 = vunpack.c.l.b16 %v3246
    %v3686 = vunpack.c.h.b16 %v3246
    %v3687 = vunpack.c.l.b16 %v3247
    %v3688 = vunpack.c.h.b16 %v3247
    %v3689 = vunpack.c.l.b16 %v3248
    %v3690 = vunpack.c.h.b16 %v3248
    %v3691 = vunpack.c.l.b16 %v3249
    %v3692 = vunpack.c.h.b16 %v3249
    %v3693 = vunpack.c.l.b16 %v3250
    %v3694 = vunpack.c.h.b16 %v3250
    %v3695 = vunpack.c.l.b16 %v3251
    %v3696 = vunpack.c.h.b16 %v3251
    %v3697 = vunpack.c.l.b16 %v3252
    %v3698 = vunpack.c.h.b16 %v3252
    %v3699 = vunpack.c.l.b16 %v3253
    %v3700 = vunpack.c.h.b16 %v3253
    %v3701 = vunpack.c.l.b16 %v3254
    %v3702 = vunpack.c.h.b16 %v3254
    %v3703 = vunpack.c.l.b16 %v3255
    %v3704 = vunpack.c.h.b16 %v3255
    %v3705 = vunpack.c.l.b16 %v3256
    %v3706 = vunpack.c.h.b16 %v3256
    %v3707 = vunpack.c.l.b16 %v3257
    %v3708 = vunpack.c.h.b16 %v3257
    %v3709 = vunpack.c.l.b16 %v3258
    %v3710 = vunpack.c.h.b16 %v3258
    %v3711 = vunpack.c.l.b16 %v3259
    %v3712 = vunpack.c.h.b16 %v3259
    %v3713 = vunpack.c.l.b16 %v3260
    %v3714 = vunpack.c.h.b16 %v3260
    %v3715 = vunpack.c.l.b16 %v3261
    %v3716 = vunpack.c.h.b16 %v3261
    %v3717 = vunpack.c.l.b16 %v3262
    %v3718 = vunpack.c.h.b16 %v3262
    %v3719 = vunpack.c.l.b16 %v3263
    %v3720 = vunpack.c.h.b16 %v3263
    %v3721 = vunpack.c.l.b16 %v3264
    %v3722 = vunpack.c.h.b16 %v3264
    %v3723 = vunpack.c.l.b16 %v3265
    %v3724 = vunpack.c.h.b16 %v3265
    %v3725 = vunpack.c.l.b16 %v3266
    %v3726 = vunpack.c.h.b16 %v3266
    %v3727 = vunpack.c.l.b16 %v3267
    %v3728 = vunpack.c.h.b16 %v3267
    %v3729 = vunpack.c.l.b16 %v3268
    %v3730 = vunpack.c.h.b16 %v3268
    %v3731 = vunpack.c.l.b16 %v3269
    %v3732 = vunpack.c.h.b16 %v3269
    %v3733 = vunpack.c.l.b16 %v3270
    %v3734 = vunpack.c.h.b16 %v3270
    %v3735 = vunpack.c.l.b16 %v3271
    %v3736 = vunpack.c.h.b16 %v3271
    %v3737 = vunpack.c.l.b16 %v3272
    %v3738 = vunpack.c.h.b16 %v3272
    %v3739 = vunpack.c.l.b16 %v3273
    %v3740 = vunpack.c.h.b16 %v3273
    %v3741 = vunpack.c.l.b16 %v3274
    %v3742 = vunpack.c.h.b16 %v3274
    %v3743 = vunpack.c.l.b16 %v3275
    %v3744 = vunpack.c.h.b16 %v3275
    %v3745 = vunpack.c.l.b16 %v3276
    %v3746 = vunpack.c.h.b16 %v3276
    %v3747 = vunpack.c.l.b16 %v3277
    %v3748 = vunpack.c.h.b16 %v3277
    %v3749 = vunpack.c.l.b16 %v3278
    %v3750 = vunpack.c.h.b16 %v3278
    %v3751 = vunpack.c.l.b16 %v3279
    %v3752 = vunpack.c.h.b16 %v3279
    %v3753 = vunpack.c.l.b16 %v3280
    %v3754 = vunpack.c.h.b16 %v3280
    %v3755 = vunpack.c.l.b16 %v3281
    %v3756 = vunpack.c.h.b16 %v3281
    %v3757 = vunpack.c.l.b16 %v3282
    %v3758 = vunpack.c.h.b16 %v3282
    %v3759 = vunpack.c.l.b16 %v3283
    %v3760 = vunpack.c.h.b16 %v3283
    %v3761 = vunpack.c.l.b16 %v3284
    %v3762 = vunpack.c.h.b16 %v3284
    %v3763 = vunpack.c.l.b16 %v3285
    %v3764 = vunpack.c.h.b16 %v3285
    %v3765 = vunpack.c.l.b16 %v3286
    %v3766 = vunpack.c.h.b16 %v3286
    %v3767 = vunpack.c.l.b16 %v3287
    %v3768 = vunpack.c.h.b16 %v3287
    %v3769 = vunpack.c.l.b16 %v3288
    %v3770 = vunpack.c.h.b16 %v3288
    %v3771 = vunpack.c.l.b16 %v3289
    %v3772 = vunpack.c.h.b16 %v3289
    %v3773 = vunpack.c.l.b16 %v3290
    %v3774 = vunpack.c.h.b16 %v3290
    %v3775 = vunpack.c.l.b16 %v3291
    %v3776 = vunpack.c.h.b16 %v3291
    %v3777 = vunpack.c.l.b16 %v3292
    %v3778 = vunpack.c.h.b16 %v3292
    %v3779 = vunpack.c.l.b16 %v3293
    %v3780 = vunpack.c.h.b16 %v3293
    %v3781 = vunpack.c.l.b16 %v3294
    %v3782 = vunpack.c.h.b16 %v3294
    %v3783 = vunpack.c.l.b16 %v3295
    %v3784 = vunpack.c.h.b16 %v3295
    %v3785 = vunpack.c.l.b16 %v3296
    %v3786 = vunpack.c.h.b16 %v3296
    %v3787 = vunpack.c.l.b16 %v3297
    %v3788 = vunpack.c.h.b16 %v3297
    %v3789 = vunpack.c.l.b16 %v3298
    %v3790 = vunpack.c.h.b16 %v3298
    %v3791 = vunpack.c.l.b16 %v3299
    %v3792 = vunpack.c.h.b16 %v3299
    %v3793 = vunpack.c.l.b16 %v3300
    %v3794 = vunpack.c.h.b16 %v3300
    %v3795 = vunpack.c.l.b16 %v3301
    %v3796 = vunpack.c.h.b16 %v3301
    %v3797 = vunpack.c.l.b16 %v3302
    %v3798 = vunpack.c.h.b16 %v3302
    %v3799 = vunpack.c.l.b16 %v3303
    %v3800 = vunpack.c.h.b16 %v3303
    %v3801 = vunpack.c.l.b16 %v3304
    %v3802 = vunpack.c.h.b16 %v3304
    %v3803 = vunpack.c.l.b16 %v3305
    %v3804 = vunpack.c.h.b16 %v3305
    %v3805 = vunpack.c.l.b16 %v3306
    %v3806 = vunpack.c.h.b16 %v3306
    %v3807 = vunpack.c.l.b16 %v3307
    %v3808 = vunpack.c.h.b16 %v3307
    %v3809 = vunpack.c.l.b16 %v3308
    %v3810 = vunpack.c.h.b16 %v3308
    %v3811 = vunpack.c.l.b16 %v3309
    %v3812 = vunpack.c.h.b16 %v3309
    %v3813 = vunpack.c.l.b16 %v3310
    %v3814 = vunpack.c.h.b16 %v3310
    %v3815 = vunpack.c.l.b16 %v3311
    %v3816 = vunpack.c.h.b16 %v3311
    %v3817 = vunpack.c.l.b16 %v3312
    %v3818 = vunpack.c.h.b16 %v3312
    %v3819 = vunpack.c.l.b16 %v3313
    %v3820 = vunpack.c.h.b16 %v3313
    %v3821 = vunpack.c.l.b16 %v3314
    %v3822 = vunpack.c.h.b16 %v3314
    %v3823 = vunpack.c.l.b16 %v3315
    %v3824 = vunpack.c.h.b16 %v3315
    %v3825 = vunpack.c.l.b16 %v3316
    %v3826 = vunpack.c.h.b16 %v3316
    %v3827 = vunpack.c.l.b16 %v3317
    %v3828 = vunpack.c.h.b16 %v3317
    %v3829 = vunpack.c.l.b16 %v3318
    %v3830 = vunpack.c.h.b16 %v3318
    %v3831 = vunpack.c.l.b16 %v3319
    %v3832 = vunpack.c.h.b16 %v3319
    %v3833 = vunpack.c.l.b16 %v3320
    %v3834 = vunpack.c.h.b16 %v3320
    %v3835 = vunpack.c.l.b16 %v3321
    %v3836 = vunpack.c.h.b16 %v3321
    %v3837 = vunpack.c.l.b16 %v3322
    %v3838 = vunpack.c.h.b16 %v3322
    %v3839 = vunpack.c.l.b16 %v3323
    %v3840 = vunpack.c.h.b16 %v3323
    %v3841 = vunpack.c.l.b16 %v3324
    %v3842 = vunpack.c.h.b16 %v3324
    %v3843 = vunpack.c.l.b16 %v3325
    %v3844 = vunpack.c.h.b16 %v3325
    %v3845 = vunpack.c.l.b16 %v3326
    %v3846 = vunpack.c.h.b16 %v3326
    %v3847 = vunpack.c.l.b16 %v3327
    %v3848 = vunpack.c.h.b16 %v3327
    %v3849 = vunpack.c.l.b16 %v3328
    %v3850 = vunpack.c.h.b16 %v3328
    %v3851 = vunpack.c.l.b16 %v3329
    %v3852 = vunpack.c.h.b16 %v3329
    %v3853 = vunpack.c.l.b16 %v3330
    %v3854 = vunpack.c.h.b16 %v3330
    %v3855 = vunpack.c.l.b16 %v3331
    %v3856 = vunpack.c.h.b16 %v3331
    %v3857 = vunpack.c.l.b16 %v3332
    %v3858 = vunpack.c.h.b16 %v3332
    %v3859 = vunpack.c.l.b16 %v3333
    %v3860 = vunpack.c.h.b16 %v3333
    %v3861 = vunpack.c.l.b16 %v3334
    %v3862 = vunpack.c.h.b16 %v3334
    %v3863 = vunpack.c.l.b16 %v3335
    %v3864 = vunpack.c.h.b16 %v3335
    %v3865 = vunpack.c.l.b16 %v3336
    %v3866 = vunpack.c.h.b16 %v3336
    %v3867 = vunpack.c.l.b16 %v3337
    %v3868 = vunpack.c.h.b16 %v3337
    %v3869 = vunpack.c.l.b16 %v3338
    %v3870 = vunpack.c.h.b16 %v3338
    %v3871 = vunpack.c.l.b16 %v3339
    %v3872 = vunpack.c.h.b16 %v3339
    %v3873 = vunpack.c.l.b16 %v3340
    %v3874 = vunpack.c.h.b16 %v3340
    %v3875 = vunpack.c.l.b16 %v3341
    %v3876 = vunpack.c.h.b16 %v3341
    %v3877 = vunpack.c.l.b16 %v3342
    %v3878 = vunpack.c.h.b16 %v3342
    %v3879 = vunpack.c.l.b16 %v3343
    %v3880 = vunpack.c.h.b16 %v3343
    %v3881 = vunpack.c.l.b16 %v3344
    %v3882 = vunpack.c.h.b16 %v3344
    %v3883 = vunpack.c.l.b16 %v3345
    %v3884 = vunpack.c.h.b16 %v3345
    %v3885 = vunpack.c.l.b16 %v3346
    %v3886 = vunpack.c.h.b16 %v3346
    %v3887 = vunpack.c.l.b16 %v3347
    %v3888 = vunpack.c.h.b16 %v3347
    %v3889 = vunpack.c.l.b16 %v3348
    %v3890 = vunpack.c.h.b16 %v3348
    %v3891 = vunpack.c.l.b16 %v3349
    %v3892 = vunpack.c.h.b16 %v3349
    %v3893 = vunpack.c.l.b16 %v3350
    %v3894 = vunpack.c.h.b16 %v3350
    %v3895 = vunpack.c.l.b16 %v3351
    %v3896 = vunpack.c.h.b16 %v3351
    %v3897 = vunpack.c.l.b16 %v3352
    %v3898 = vunpack.c.h.b16 %v3352
    %v3899 = vunpack.c.l.b16 %v3353
    %v3900 = vunpack.c.h.b16 %v3353
    %v3901 = vunpack.c.l.b16 %v3354
    %v3902 = vunpack.c.h.b16 %v3354
    %v3903 = vunpack.c.l.b16 %v3355
    %v3904 = vunpack.c.h.b16 %v3355
    %v3905 = vunpack.c.l.b16 %v3356
    %v3906 = vunpack.c.h.b16 %v3356
    %v3907 = vunpack.c.l.b16 %v3357
    %v3908 = vunpack.c.h.b16 %v3357
    %v3909 = vunpack.c.l.b16 %v3358
    %v3910 = vunpack.c.h.b16 %v3358
    %v3911 = vunpack.c.l.b16 %v3359
    %v3912 = vunpack.c.h.b16 %v3359
    %v3913 = vunpack.c.l.b16 %v3360
    %v3914 = vunpack.c.h.b16 %v3360
    %v3915 = vunpack.c.l.b16 %v3361
    %v3916 = vunpack.c.h.b16 %v3361
    %v3917 = vunpack.c.l.b16 %v3362
    %v3918 = vunpack.c.h.b16 %v3362
    %v3919 = vunpack.c.l.b16 %v3363
    %v3920 = vunpack.c.h.b16 %v3363
    %v3921 = vunpack.c.l.b16 %v3364
    %v3922 = vunpack.c.h.b16 %v3364
    %v3923 = vunpack.c.l.b16 %v3365
    %v3924 = vunpack.c.h.b16 %v3365
    %v3925 = vunpack.c.l.b16 %v3366
    %v3926 = vunpack.c.h.b16 %v3366
    %v3927 = vunpack.c.l.b16 %v3367
    %v3928 = vunpack.c.h.b16 %v3367
    %v3929 = vunpack.c.l.b16 %v3368
    %v3930 = vunpack.c.h.b16 %v3368
    %v3931 = vunpack.c.l.b16 %v3369
    %v3932 = vunpack.c.h.b16 %v3369
    %v3933 = vunpack.c.l.b16 %v3370
    %v3934 = vunpack.c.h.b16 %v3370
    %v3935 = vunpack.c.l.b16 %v3371
    %v3936 = vunpack.c.h.b16 %v3371
    %v3937 = vunpack.c.l.b16 %v3372
    %v3938 = vunpack.c.h.b16 %v3372
    %v3939 = vunpack.c.l.b16 %v3373
    %v3940 = vunpack.c.h.b16 %v3373
    %v3941 = vunpack.c.l.b16 %v3374
    %v3942 = vunpack.c.h.b16 %v3374
    %v3943 = vunpack.c.l.b16 %v3375
    %v3944 = vunpack.c.h.b16 %v3375
    %v3945 = vunpack.c.l.b16 %v3376
    %v3946 = vunpack.c.h.b16 %v3376
    %v3947 = vunpack.c.l.b16 %v3377
    %v3948 = vunpack.c.h.b16 %v3377
    %v3949 = vunpack.c.l.b16 %v3378
    %v3950 = vunpack.c.h.b16 %v3378
    %v3951 = vunpack.c.l.b16 %v3379
    %v3952 = vunpack.c.h.b16 %v3379
    %v3953 = vunpack.c.l.b16 %v3380
    %v3954 = vunpack.c.h.b16 %v3380
    %v3955 = vunpack.c.l.b16 %v3381
    %v3956 = vunpack.c.h.b16 %v3381
    %v3957 = vunpack.c.l.b16 %v3382
    %v3958 = vunpack.c.h.b16 %v3382
    %v3959 = vunpack.c.l.b16 %v3383
    %v3960 = vunpack.c.h.b16 %v3383
    %v3961 = vunpack.c.l.b16 %v3384
    %v3962 = vunpack.c.h.b16 %v3384
    %v3963 = vunpack.c.l.b16 %v3385
    %v3964 = vunpack.c.h.b16 %v3385
    %v3965 = vunpack.c.l.b16 %v3386
    %v3966 = vunpack.c.h.b16 %v3386
    %v3967 = vunpack.c.l.b16 %v3387
    %v3968 = vunpack.c.h.b16 %v3387
    %v3969 = vunpack.c.l.b16 %v3388
    %v3970 = vunpack.c.h.b16 %v3388
    %v3971 = vunpack.c.l.b16 %v3389
    %v3972 = vunpack.c.h.b16 %v3389
    %v3973 = vunpack.c.l.b16 %v3390
    %v3974 = vunpack.c.h.b16 %v3390
    %v3975 = vunpack.c.l.b16 %v3391
    %v3976 = vunpack.c.h.b16 %v3391
    %v3977 = vunpack.c.l.b16 %v3392
    %v3978 = vunpack.c.h.b16 %v3392
    %v3979 = vunpack.c.l.b16 %v3393
    %v3980 = vunpack.c.h.b16 %v3393
    %v3981 = vunpack.c.l.b16 %v3394
    %v3982 = vunpack.c.h.b16 %v3394
    %v3983 = vunpack.c.l.b16 %v3395
    %v3984 = vunpack.c.h.b16 %v3395
    %v3985 = vunpack.c.l.b16 %v3396
    %v3986 = vunpack.c.h.b16 %v3396
    %v3987 = vunpack.c.l.b16 %v3397
    %v3988 = vunpack.c.h.b16 %v3397
    %v3989 = vunpack.c.l.b16 %v3398
    %v3990 = vunpack.c.h.b16 %v3398
    %v3991 = vunpack.c.l.b16 %v3399
    %v3992 = vunpack.c.h.b16 %v3399
    %v3993 = vunpack.c.l.b16 %v3400
    %v3994 = vunpack.c.h.b16 %v3400
    %v3995 = vunpack.c.l.b16 %v3401
    %v3996 = vunpack.c.h.b16 %v3401
    %v3997 = vunpack.c.l.b16 %v3402
    %v3998 = vunpack.c.h.b16 %v3402
    %v3999 = vunpack.c.l.b16 %v3403
    %v4000 = vunpack.c.h.b16 %v3403
    %v4001 = vunpack.c.l.b16 %v3404
    %v4002 = vunpack.c.h.b16 %v3404
    %v4003 = vunpack.c.l.b16 %v3405
    %v4004 = vunpack.c.h.b16 %v3405
    %v4005 = vunpack.c.l.b16 %v3406
    %v4006 = vunpack.c.h.b16 %v3406
    %v4007 = vunpack.c.l.b16 %v3407
    %v4008 = vunpack.c.h.b16 %v3407
    %v4009 = vunpack.c.l.b16 %v3408
    %v4010 = vunpack.c.h.b16 %v3408
    %v4011 = vunpack.c.l.b16 %v3409
    %v4012 = vunpack.c.h.b16 %v3409
    %v4013 = vunpack.c.l.b16 %v3410
    %v4014 = vunpack.c.h.b16 %v3410
    %v4015 = vunpack.c.l.b16 %v3411
    %v4016 = vunpack.c.h.b16 %v3411
    %v4017 = vunpack.c.l.b16 %v3412
    %v4018 = vunpack.c.h.b16 %v3412
    %v4019 = vunpack.c.l.b16 %v3413
    %v4020 = vunpack.c.h.b16 %v3413
    %v4021 = vunpack.c.l.b16 %v3414
    %v4022 = vunpack.c.h.b16 %v3414
    %v4023 = vunpack.c.l.b16 %v3415
    %v4024 = vunpack.c.h.b16 %v3415
    %v4025 = vunpack.c.l.b16 %v3416
    %v4026 = vunpack.c.h.b16 %v3416
    %v4027 = vunpack.c.l.b16 %v3417
    %v4028 = vunpack.c.h.b16 %v3417
    %v4029 = vunpack.c.l.b16 %v3418
    %v4030 = vunpack.c.h.b16 %v3418
    %v4031 = vunpack.c.l.b16 %v3419
    %v4032 = vunpack.c.h.b16 %v3419
    %v4033 = vunpack.c.l.b16 %v3420
    %v4034 = vunpack.c.h.b16 %v3420
    %v4035 = vunpack.c.l.b16 %v3421
    %v4036 = vunpack.c.h.b16 %v3421
    %v4037 = vunpack.c.l.b16 %v3422
    %v4038 = vunpack.c.h.b16 %v3422
    %v4039 = vunpack.c.l.b16 %v3423
    %v4040 = vunpack.c.h.b16 %v3423
    %v4041 = vunpack.c.l.b16 %v3424
    %v4042 = vunpack.c.h.b16 %v3424
    %v4043 = vunpack.c.l.b16 %v3425
    %v4044 = vunpack.c.h.b16 %v3425
    %v4045 = vunpack.c.l.b16 %v3426
    %v4046 = vunpack.c.h.b16 %v3426
    %v4047 = vunpack.c.l.b16 %v3427
    %v4048 = vunpack.c.h.b16 %v3427
    %v4049 = vunpack.c.l.b16 %v3428
    %v4050 = vunpack.c.h.b16 %v3428
    %v4051 = vpack.c.b16 %v3655, %v3651
    %v4052 = vpack.c.b16 %v3656, %v3652
    %v4053 = vpack.c.b16 %v3657, %v3653
    %v4054 = vpack.c.b16 %v3658, %v3654
    %v4055 = vpack.c.b16 %v3663, %v3659
    %v4056 = vpack.c.b16 %v3664, %v3660
    %v4057 = vpack.c.b16 %v3665, %v3661
    %v4058 = vpack.c.b16 %v3666, %v3662
    %v4059 = vpack.c.b16 %v3671, %v3667
    %v4060 = vpack.c.b16 %v3672, %v3668
    %v4061 = vpack.c.b16 %v3673, %v3669
    %v4062 = vpack.c.b16 %v3674, %v3670
    %v4063 = vpack.c.b16 %v3679, %v3675
    %v4064 = vpack.c.b16 %v3680, %v3676
    %v4065 = vpack.c.b16 %v3681, %v3677
    %v4066 = vpack.c.b16 %v3682, %v3678
    %v4067 = vpack.c.b16 %v3687, %v3683
    %v4068 = vpack.c.b16 %v3688, %v3684
    %v4069 = vpack.c.b16 %v3689, %v3685
    %v4070 = vpack.c.b16 %v3690, %v3686
    %v4071 = vpack.c.b16 %v3695, %v3691
    %v4072 = vpack.c.b16 %v3696, %v3692
    %v4073 = vpack.c.b16 %v3697, %v3693
    %v4074 = vpack.c.b16 %v3698, %v3694
    %v4075 = vpack.c.b16 %v3703, %v3699
    %v4076 = vpack.c.b16 %v3704, %v3700
    %v4077 = vpack.c.b16 %v3705, %v3701
    %v4078 = vpack.c.b16 %v3706, %v3702
    %v4079 = vpack.c.b16 %v3711, %v3707
    %v4080 = vpack.c.b16 %v3712, %v3708
    %v4081 = vpack.c.b16 %v3713, %v3709
    %v4082 = vpack.c.b16 %v3714, %v3710
    %v4083 = vpack.c.b16 %v3719, %v3715
    %v4084 = vpack.c.b16 %v3720, %v3716
    %v4085 = vpack.c.b16 %v3721, %v3717
    %v4086 = vpack.c.b16 %v3722, %v3718
    %v4087 = vpack.c.b16 %v3727, %v3723
    %v4088 = vpack.c.b16 %v3728, %v3724
    %v4089 = vpack.c.b16 %v3729, %v3725
    %v4090 = vpack.c.b16 %v3730, %v3726
    %v4091 = vpack.c.b16 %v3735, %v3731
    %v4092 = vpack.c.b16 %v3736, %v3732
    %v4093 = vpack.c.b16 %v3737, %v3733
    %v4094 = vpack.c.b16 %v3738, %v3734
    %v4095 = vpack.c.b16 %v3743, %v3739
    %v4096 = vpack.c.b16 %v3744, %v3740
    %v4097 = vpack.c.b16 %v3745, %v3741
    %v4098 = vpack.c.b16 %v3746, %v3742
    %v4099 = vpack.c.b16 %v3751, %v3747
    %v4100 = vpack.c.b16 %v3752, %v3748
    %v4101 = vpack.c.b16 %v3753, %v3749
    %v4102 = vpack.c.b16 %v3754, %v3750
    %v4103 = vpack.c.b16 %v3759, %v3755
    %v4104 = vpack.c.b16 %v3760, %v3756
    %v4105 = vpack.c.b16 %v3761, %v3757
    %v4106 = vpack.c.b16 %v3762, %v3758
    %v4107 = vpack.c.b16 %v3767, %v3763
    %v4108 = vpack.c.b16 %v3768, %v3764
    %v4109 = vpack.c.b16 %v3769, %v3765
    %v4110 = vpack.c.b16 %v3770, %v3766
    %v4111 = vpack.c.b16 %v3775, %v3771
    %v4112 = vpack.c.b16 %v3776, %v3772
    %v4113 = vpack.c.b16 %v3777, %v3773
    %v4114 = vpack.c.b16 %v3778, %v3774
    %v4115 = vpack.c.b16 %v3783, %v3779
    %v4116 = vpack.c.b16 %v3784, %v3780
    %v4117 = vpack.c.b16 %v3785, %v3781
    %v4118 = vpack.c.b16 %v3786, %v3782
    %v4119 = vpack.c.b16 %v3791, %v3787
    %v4120 = vpack.c.b16 %v3792, %v3788
    %v4121 = vpack.c.b16 %v3793, %v3789
    %v4122 = vpack.c.b16 %v3794, %v3790
    %v4123 = vpack.c.b16 %v3799, %v3795
    %v4124 = vpack.c.b16 %v3800, %v3796
    %v4125 = vpack.c.b16 %v3801, %v3797
    %v4126 = vpack.c.b16 %v3802, %v3798
    %v4127 = vpack.c.b16 %v3807, %v3803
    %v4128 = vpack.c.b16 %v3808, %v3804
    %v4129 = vpack.c.b16 %v3809, %v3805
    %v4130 = vpack.c.b16 %v3810, %v3806
    %v4131 = vpack.c.b16 %v3815, %v3811
    %v4132 = vpack.c.b16 %v3816, %v3812
    %v4133 = vpack.c.b16 %v3817, %v3813
    %v4134 = vpack.c.b16 %v3818, %v3814
    %v4135 = vpack.c.b16 %v3823, %v3819
    %v4136 = vpack.c.b16 %v3824, %v3820
    %v4137 = vpack.c.b16 %v3825, %v3821
    %v4138 = vpack.c.b16 %v3826, %v3822
    %v4139 = vpack.c.b16 %v3831, %v3827
    %v4140 = vpack.c.b16 %v3832, %v3828
    %v4141 = vpack.c.b16 %v3833, %v3829
    %v4142 = vpack.c.b16 %v3834, %v3830
    %v4143 = vpack.c.b16 %v3839, %v3835
    %v4144 = vpack.c.b16 %v3840, %v3836
    %v4145 = vpack.c.b16 %v3841, %v3837
    %v4146 = vpack.c.b16 %v3842, %v3838
    %v4147 = vpack.c.b16 %v3847, %v3843
    %v4148 = vpack.c.b16 %v3848, %v3844
    %v4149 = vpack.c.b16 %v3849, %v3845
    %v4150 = vpack.c.b16 %v3850, %v3846
    %v4151 = vpack.c.b16 %v3855, %v3851
    %v4152 = vpack.c.b16 %v3856, %v3852
    %v4153 = vpack.c.b16 %v3857, %v3853
    %v4154 = vpack.c.b16 %v3858, %v3854
    %v4155 = vpack.c.b16 %v3863, %v3859
    %v4156 = vpack.c.b16 %v3864, %v3860
    %v4157 = vpack.c.b16 %v3865, %v3861
    %v4158 = vpack.c.b16 %v3866, %v3862
    %v4159 = vpack.c.b16 %v3871, %v3867
    %v4160 = vpack.c.b16 %v3872, %v3868
    %v4161 = vpack.c.b16 %v3873, %v3869
    %v4162 = vpack.c.b16 %v3874, %v3870
    %v4163 = vpack.c.b16 %v3879, %v3875
    %v4164 = vpack.c.b16 %v3880, %v3876
    %v4165 = vpack.c.b16 %v3881, %v3877
    %v4166 = vpack.c.b16 %v3882, %v3878
    %v4167 = vpack.c.b16 %v3887, %v3883
    %v4168 = vpack.c.b16 %v3888, %v3884
    %v4169 = vpack.c.b16 %v3889, %v3885
    %v4170 = vpack.c.b16 %v3890, %v3886
    %v4171 = vpack.c.b16 %v3895, %v3891
    %v4172 = vpack.c.b16 %v3896, %v3892
    %v4173 = vpack.c.b16 %v3897, %v3893
    %v4174 = vpack.c.b16 %v3898, %v3894
    %v4175 = vpack.c.b16 %v3903, %v3899
    %v4176 = vpack.c.b16 %v3904, %v3900
    %v4177 = vpack.c.b16 %v3905, %v3901
    %v4178 = vpack.c.b16 %v3906, %v3902
    %v4179 = vpack.c.b16 %v3911, %v3907
    %v4180 = vpack.c.b16 %v3912, %v3908
    %v4181 = vpack.c.b16 %v3913, %v3909
    %v4182 = vpack.c.b16 %v3914, %v3910
    %v4183 = vpack.c.b16 %v3919, %v3915
    %v4184 = vpack.c.b16 %v3920, %v3916
    %v4185 = vpack.c.b16 %v3921, %v3917
    %v4186 = vpack.c.b16 %v3922, %v3918
    %v4187 = vpack.c.b16 %v3927, %v3923
    %v4188 = vpack.c.b16 %v3928, %v3924
    %v4189 = vpack.c.b16 %v3929, %v3925
    %v4190 = vpack.c.b16 %v3930, %v3926
    %v4191 = vpack.c.b16 %v3935, %v3931
    %v4192 = vpack.c.b16 %v3936, %v3932
    %v4193 = vpack.c.b16 %v3937, %v3933
    %v4194 = vpack.c.b16 %v3938, %v3934
    %v4195 = vpack.c.b16 %v3943, %v3939
    %v4196 = vpack.c.b16 %v3944, %v3940
    %v4197 = vpack.c.b16 %v3945, %v3941
    %v4198 = vpack.c.b16 %v3946, %v3942
    %v4199 = vpack.c.b16 %v3951, %v3947
    %v4200 = vpack.c.b16 %v3952, %v3948
    %v4201 = vpack.c.b16 %v3953, %v3949
    %v4202 = vpack.c.b16 %v3954, %v3950
    %v4203 = vpack.c.b16 %v3959, %v3955
    %v4204 = vpack.c.b16 %v3960, %v3956
    %v4205 = vpack.c.b16 %v3961, %v3957
    %v4206 = vpack.c.b16 %v3962, %v3958
    %v4207 = vpack.c.b16 %v3967, %v3963
    %v4208 = vpack.c.b16 %v3968, %v3964
    %v4209 = vpack.c.b16 %v3969, %v3965
    %v4210 = vpack.c.b16 %v3970, %v3966
    %v4211 = vpack.c.b16 %v3975, %v3971
    %v4212 = vpack.c.b16 %v3976, %v3972
    %v4213 = vpack.c.b16 %v3977, %v3973
    %v4214 = vpack.c.b16 %v3978, %v3974
    %v4215 = vpack.c.b16 %v3983, %v3979
    %v4216 = vpack.c.b16 %v3984, %v3980
    %v4217 = vpack.c.b16 %v3985, %v3981
    %v4218 = vpack.c.b16 %v3986, %v3982
    %v4219 = vpack.c.b16 %v3991, %v3987
    %v4220 = vpack.c.b16 %v3992, %v3988
    %v4221 = vpack.c.b16 %v3993, %v3989
    %v4222 = vpack.c.b16 %v3994, %v3990
    %v4223 = vpack.c.b16 %v3999, %v3995
    %v4224 = vpack.c.b16 %v4000, %v3996
    %v4225 = vpack.c.b16 %v4001, %v3997
    %v4226 = vpack.c.b16 %v4002, %v3998
    %v4227 = vpack.c.b16 %v4007, %v4003
    %v4228 = vpack.c.b16 %v4008, %v4004
    %v4229 = vpack.c.b16 %v4009, %v4005
    %v4230 = vpack.c.b16 %v4010, %v4006
    %v4231 = vpack.c.b16 %v4015, %v4011
    %v4232 = vpack.c.b16 %v4016, %v4012
    %v4233 = vpack.c.b16 %v4017, %v4013
    %v4234 = vpack.c.b16 %v4018, %v4014
    %v4235 = vpack.c.b16 %v4023, %v4019
    %v4236 = vpack.c.b16 %v4024, %v4020
    %v4237 = vpack.c.b16 %v4025, %v4021
    %v4238 = vpack.c.b16 %v4026, %v4022
    %v4239 = vpack.c.b16 %v4031, %v4027
    %v4240 = vpack.c.b16 %v4032, %v4028
    %v4241 = vpack.c.b16 %v4033, %v4029
    %v4242 = vpack.c.b16 %v4034, %v4030
    %v4243 = vpack.c.b16 %v4039, %v4035
    %v4244 = vpack.c.b16 %v4040, %v4036
    %v4245 = vpack.c.b16 %v4041, %v4037
    %v4246 = vpack.c.b16 %v4042, %v4038
    %v4247 = vpack.c.b16 %v4047, %v4043
    %v4248 = vpack.c.b16 %v4048, %v4044
    %v4249 = vpack.c.b16 %v4049, %v4045
    %v4250 = vpack.c.b16 %v4050, %v4046
    %vm4451 = vcmask 261120
    %v4453 = vsel %vm4451, %v3228, 0
    %4455 = vmatprep.subr.bf16.mxu0 %v4080
    %4456 = vmatpush1.bf16.msra.mxu0 %v4079
    %4457 = vmatprep.subr.bf16.mxu0 %v4076
    %4458 = vmatpush1.bf16.msra.mxu0 %v4075
    %4459 = vmatprep.subr.bf16.mxu0 %v4072
    %4460 = vmatpush1.bf16.msra.mxu0 %v4071
    %4461 = vmatprep.subr.bf16.mxu0 %v4068
    %4462 = vmatpush1.bf16.msra.mxu0 %v4067
    %4463 = vmatprep.subr.bf16.mxu0 %v4064
    %4464 = vmatpush1.bf16.msra.mxu0 %v4063
    %4465 = vmatprep.subr.bf16.mxu0 %v4060
    %4466 = vmatpush1.bf16.msra.mxu0 %v4059
    %4467 = vmatprep.subr.bf16.mxu0 %v4056
    %4468 = vmatpush1.bf16.msra.mxu0 %v4055
    %4469 = vmatprep.subr.bf16.mxu0 %v4052
    %4470 = vmatpush1.bf16.msra.mxu0 %v4051
    %4471 = vmatprep.subr.bf16.mxu0 %v4112
    %4472 = vmatpush2.bf16.msra.mxu0 %v4111
    %4473 = vmatprep.subr.bf16.mxu0 %v4108
    %4474 = vmatpush2.bf16.msra.mxu0 %v4107
    %4475 = vmatprep.subr.bf16.mxu0 %v4104
    %4476 = vmatpush2.bf16.msra.mxu0 %v4103
    %4477 = vmatprep.subr.bf16.mxu0 %v4100
    %4478 = vmatpush2.bf16.msra.mxu0 %v4099
    %4479 = vmatprep.subr.bf16.mxu0 %v4096
    %4480 = vmatpush2.bf16.msra.mxu0 %v4095
    %4481 = vmatprep.subr.bf16.mxu0 %v4092
    %4482 = vmatpush2.bf16.msra.mxu0 %v4091
    %4483 = vmatprep.subr.bf16.mxu0 %v4088
    %4484 = vmatpush2.bf16.msra.mxu0 %v4087
    %4485 = vmatprep.subr.bf16.mxu0 %v4084
    %4486 = vmatpush2.bf16.msra.mxu0 %v4083
    %4487 = vmatprep.mubr.bf16.mxu0 %v3223
    %4488 = vmatmul.mubr.bf16.gmra.mxu0 %v3222
    %v4489 = vpop.f32.mrf.mxu0
    %v4490 = vadd.f32 %v3434, %v4489
    %v4491 = vpop.f32.mrf.mxu0
    %v4492 = vadd.f32 %v3438, %v4491
    %v4493 = vpop.f32.mrf.mxu0
    %v4494 = vpop.f32.mrf.mxu0
    %4495 = vdwg.mxu0
    %4496 = vmatprep.subr.bf16.mxu0 %v4144
    %4497 = vmatpush1.bf16.msra.mxu0 %v4143
    %4498 = vmatprep.subr.bf16.mxu0 %v4140
    %4499 = vmatpush1.bf16.msra.mxu0 %v4139
    %4500 = vmatprep.subr.bf16.mxu0 %v4136
    %4501 = vmatpush1.bf16.msra.mxu0 %v4135
    %4502 = vmatprep.subr.bf16.mxu0 %v4132
    %4503 = vmatpush1.bf16.msra.mxu0 %v4131
    %4504 = vmatprep.subr.bf16.mxu0 %v4128
    %4505 = vmatpush1.bf16.msra.mxu0 %v4127
    %4506 = vmatprep.subr.bf16.mxu0 %v4124
    %4507 = vmatpush1.bf16.msra.mxu0 %v4123
    %4508 = vmatprep.subr.bf16.mxu0 %v4120
    %4509 = vmatpush1.bf16.msra.mxu0 %v4119
    %4510 = vmatprep.subr.bf16.mxu0 %v4116
    %4511 = vmatpush1.bf16.msra.mxu0 %v4115
    %4512 = vmatprep.subr.bf16.mxu0 %v4176
    %4513 = vmatpush2.bf16.msra.mxu0 %v4175
    %4514 = vmatprep.subr.bf16.mxu0 %v4172
    %4515 = vmatpush2.bf16.msra.mxu0 %v4171
    %4516 = vmatprep.subr.bf16.mxu0 %v4168
    %4517 = vmatpush2.bf16.msra.mxu0 %v4167
    %4518 = vmatprep.subr.bf16.mxu0 %v4164
    %4519 = vmatpush2.bf16.msra.mxu0 %v4163
    %4520 = vmatprep.subr.bf16.mxu0 %v4160
    %4521 = vmatpush2.bf16.msra.mxu0 %v4159
    %4522 = vmatprep.subr.bf16.mxu0 %v4156
    %4523 = vmatpush2.bf16.msra.mxu0 %v4155
    %4524 = vmatprep.subr.bf16.mxu0 %v4152
    %4525 = vmatpush2.bf16.msra.mxu0 %v4151
    %4526 = vmatprep.subr.bf16.mxu0 %v4148
    %4527 = vmatpush2.bf16.msra.mxu0 %v4147
    %4528 = vmatprep.mubr.bf16.mxu0 %v3225
    %4529 = vmatmul.mubr.bf16.gmra.mxu0 %v3224
    %v4530 = vpop.f32.mrf.mxu0
    %v4531 = vadd.f32 %v4490, %v4530
    %v4532 = vpop.f32.mrf.mxu0
    %v4533 = vadd.f32 %v4492, %v4532
    %v4534 = vpop.f32.mrf.mxu0
    %v4535 = vpop.f32.mrf.mxu0
    %4536 = vdwg.mxu0
    %4537 = vmatprep.subr.bf16.mxu0 %v4208
    %4538 = vmatpush1.bf16.msra.mxu0 %v4207
    %4539 = vmatprep.subr.bf16.mxu0 %v4204
    %4540 = vmatpush1.bf16.msra.mxu0 %v4203
    %4541 = vmatprep.subr.bf16.mxu0 %v4200
    %4542 = vmatpush1.bf16.msra.mxu0 %v4199
    %4543 = vmatprep.subr.bf16.mxu0 %v4196
    %4544 = vmatpush1.bf16.msra.mxu0 %v4195
    %4545 = vmatprep.subr.bf16.mxu0 %v4192
    %4546 = vmatpush1.bf16.msra.mxu0 %v4191
    %4547 = vmatprep.subr.bf16.mxu0 %v4188
    %4548 = vmatpush1.bf16.msra.mxu0 %v4187
    %4549 = vmatprep.subr.bf16.mxu0 %v4184
    %4550 = vmatpush1.bf16.msra.mxu0 %v4183
    %4551 = vmatprep.subr.bf16.mxu0 %v4180
    %4552 = vmatpush1.bf16.msra.mxu0 %v4179
    %4553 = vmatprep.subr.bf16.mxu0 %v4240
    %4554 = vmatpush2.bf16.msra.mxu0 %v4239
    %4555 = vmatprep.subr.bf16.mxu0 %v4236
    %4556 = vmatpush2.bf16.msra.mxu0 %v4235
    %4557 = vmatprep.subr.bf16.mxu0 %v4232
    %4558 = vmatpush2.bf16.msra.mxu0 %v4231
    %4559 = vmatprep.subr.bf16.mxu0 %v4228
    %4560 = vmatpush2.bf16.msra.mxu0 %v4227
    %4561 = vmatprep.subr.bf16.mxu0 %v4224
    %4562 = vmatpush2.bf16.msra.mxu0 %v4223
    %4563 = vmatprep.subr.bf16.mxu0 %v4220
    %4564 = vmatpush2.bf16.msra.mxu0 %v4219
    %4565 = vmatprep.subr.bf16.mxu0 %v4216
    %4566 = vmatpush2.bf16.msra.mxu0 %v4215
    %4567 = vmatprep.subr.bf16.mxu0 %v4212
    %4568 = vmatpush2.bf16.msra.mxu0 %v4211
    %4569 = vmatprep.mubr.bf16.mxu0 %v3227
    %4570 = vmatmul.mubr.bf16.gmra.mxu0 %v3226
    %v4571 = vpop.f32.mrf.mxu0
    %v4572 = vadd.f32 %v4531, %v4571
    %v4573 = vpop.f32.mrf.mxu0
    %v4574 = vadd.f32 %v4533, %v4573
    %v4575 = vpop.f32.mrf.mxu0
    %v4576 = vpop.f32.mrf.mxu0
    %4577 = vdwg.mxu0
    %4578 = vmatprep.subr.bf16.mxu0 0
    %4579 = vmatpush1.bf16.msra.mxu0 0
    %4580 = vmatprep.subr.bf16.mxu0 0
    %4581 = vmatpush1.bf16.msra.mxu0 0
    %4582 = vmatprep.subr.bf16.mxu0 0
    %4583 = vmatpush1.bf16.msra.mxu0 0
    %4584 = vmatprep.subr.bf16.mxu0 0
    %4585 = vmatpush1.bf16.msra.mxu0 0
    %4586 = vmatprep.subr.bf16.mxu0 0
    %4587 = vmatpush1.bf16.msra.mxu0 0
    %4588 = vmatprep.subr.bf16.mxu0 0
    %4589 = vmatpush1.bf16.msra.mxu0 0
    %4590 = vmatprep.subr.bf16.mxu0 %v4248
    %4591 = vmatpush1.bf16.msra.mxu0 %v4247
    %4592 = vmatprep.subr.bf16.mxu0 %v4244
    %4593 = vmatpush1.bf16.msra.mxu0 %v4243
    %4594 = vmatprep.subr.bf16.mxu0 0
    %4595 = vmatpush2.bf16.msra.mxu0 0
    %4596 = vmatprep.subr.bf16.mxu0 0
    %4597 = vmatpush2.bf16.msra.mxu0 0
    %4598 = vmatprep.subr.bf16.mxu0 0
    %4599 = vmatpush2.bf16.msra.mxu0 0
    %4600 = vmatprep.subr.bf16.mxu0 0
    %4601 = vmatpush2.bf16.msra.mxu0 0
    %4602 = vmatprep.subr.bf16.mxu0 0
    %4603 = vmatpush2.bf16.msra.mxu0 0
    %4604 = vmatprep.subr.bf16.mxu0 0
    %4605 = vmatpush2.bf16.msra.mxu0 0
    %4606 = vmatprep.subr.bf16.mxu0 0
    %4607 = vmatpush2.bf16.msra.mxu0 0
    %4608 = vmatprep.subr.bf16.mxu0 0
    %4609 = vmatpush2.bf16.msra.mxu0 0
    %4610 = vmatprep.mubr.bf16.mxu0 0
    %4611 = vmatmul.mubr.bf16.gmra.mxu0 %v4453
    %v4612 = vpop.f32.mrf.mxu0
    %v4613 = vadd.f32 %v4572, %v4612
    %v4614 = vpop.f32.mrf.mxu0
    %v4615 = vadd.f32 %v4574, %v4614
    %v4616 = vpop.f32.mrf.mxu0
    %v4617 = vpop.f32.mrf.mxu0
    %4618 = vdwg.mxu0
    %4619 = vmatprep.subr.bf16.mxu0 %v4082
    %4620 = vmatpush1.bf16.msra.mxu0 %v4081
    %4621 = vmatprep.subr.bf16.mxu0 %v4078
    %4622 = vmatpush1.bf16.msra.mxu0 %v4077
    %4623 = vmatprep.subr.bf16.mxu0 %v4074
    %4624 = vmatpush1.bf16.msra.mxu0 %v4073
    %4625 = vmatprep.subr.bf16.mxu0 %v4070
    %4626 = vmatpush1.bf16.msra.mxu0 %v4069
    %4627 = vmatprep.subr.bf16.mxu0 %v4066
    %4628 = vmatpush1.bf16.msra.mxu0 %v4065
    %4629 = vmatprep.subr.bf16.mxu0 %v4062
    %4630 = vmatpush1.bf16.msra.mxu0 %v4061
    %4631 = vmatprep.subr.bf16.mxu0 %v4058
    %4632 = vmatpush1.bf16.msra.mxu0 %v4057
    %4633 = vmatprep.subr.bf16.mxu0 %v4054
    %4634 = vmatpush1.bf16.msra.mxu0 %v4053
    %4635 = vmatprep.subr.bf16.mxu0 %v4114
    %4636 = vmatpush2.bf16.msra.mxu0 %v4113
    %4637 = vmatprep.subr.bf16.mxu0 %v4110
    %4638 = vmatpush2.bf16.msra.mxu0 %v4109
    %4639 = vmatprep.subr.bf16.mxu0 %v4106
    %4640 = vmatpush2.bf16.msra.mxu0 %v4105
    %4641 = vmatprep.subr.bf16.mxu0 %v4102
    %4642 = vmatpush2.bf16.msra.mxu0 %v4101
    %4643 = vmatprep.subr.bf16.mxu0 %v4098
    %4644 = vmatpush2.bf16.msra.mxu0 %v4097
    %4645 = vmatprep.subr.bf16.mxu0 %v4094
    %4646 = vmatpush2.bf16.msra.mxu0 %v4093
    %4647 = vmatprep.subr.bf16.mxu0 %v4090
    %4648 = vmatpush2.bf16.msra.mxu0 %v4089
    %4649 = vmatprep.subr.bf16.mxu0 %v4086
    %4650 = vmatpush2.bf16.msra.mxu0 %v4085
    %4651 = vmatprep.mubr.bf16.mxu0 %v3223
    %4652 = vmatmul.mubr.bf16.gmra.mxu0 %v3222
    %v4653 = vpop.f32.mrf.mxu0
    %v4654 = vadd.f32 %v3442, %v4653
    %v4655 = vpop.f32.mrf.mxu0
    %v4656 = vadd.f32 %v3446, %v4655
    %v4657 = vpop.f32.mrf.mxu0
    %v4658 = vpop.f32.mrf.mxu0
    %4659 = vdwg.mxu0
    %4660 = vmatprep.subr.bf16.mxu0 %v4146
    %4661 = vmatpush1.bf16.msra.mxu0 %v4145
    %4662 = vmatprep.subr.bf16.mxu0 %v4142
    %4663 = vmatpush1.bf16.msra.mxu0 %v4141
    %4664 = vmatprep.subr.bf16.mxu0 %v4138
    %4665 = vmatpush1.bf16.msra.mxu0 %v4137
    %4666 = vmatprep.subr.bf16.mxu0 %v4134
    %4667 = vmatpush1.bf16.msra.mxu0 %v4133
    %4668 = vmatprep.subr.bf16.mxu0 %v4130
    %4669 = vmatpush1.bf16.msra.mxu0 %v4129
    %4670 = vmatprep.subr.bf16.mxu0 %v4126
    %4671 = vmatpush1.bf16.msra.mxu0 %v4125
    %4672 = vmatprep.subr.bf16.mxu0 %v4122
    %4673 = vmatpush1.bf16.msra.mxu0 %v4121
    %4674 = vmatprep.subr.bf16.mxu0 %v4118
    %4675 = vmatpush1.bf16.msra.mxu0 %v4117
    %4676 = vmatprep.subr.bf16.mxu0 %v4178
    %4677 = vmatpush2.bf16.msra.mxu0 %v4177
    %4678 = vmatprep.subr.bf16.mxu0 %v4174
    %4679 = vmatpush2.bf16.msra.mxu0 %v4173
    %4680 = vmatprep.subr.bf16.mxu0 %v4170
    %4681 = vmatpush2.bf16.msra.mxu0 %v4169
    %4682 = vmatprep.subr.bf16.mxu0 %v4166
    %4683 = vmatpush2.bf16.msra.mxu0 %v4165
    %4684 = vmatprep.subr.bf16.mxu0 %v4162
    %4685 = vmatpush2.bf16.msra.mxu0 %v4161
    %4686 = vmatprep.subr.bf16.mxu0 %v4158
    %4687 = vmatpush2.bf16.msra.mxu0 %v4157
    %4688 = vmatprep.subr.bf16.mxu0 %v4154
    %4689 = vmatpush2.bf16.msra.mxu0 %v4153
    %4690 = vmatprep.subr.bf16.mxu0 %v4150
    %4691 = vmatpush2.bf16.msra.mxu0 %v4149
    %4692 = vmatprep.mubr.bf16.mxu0 %v3225
    %4693 = vmatmul.mubr.bf16.gmra.mxu0 %v3224
    %v4694 = vpop.f32.mrf.mxu0
    %v4695 = vadd.f32 %v4654, %v4694
    %v4696 = vpop.f32.mrf.mxu0
    %v4697 = vadd.f32 %v4656, %v4696
    %v4698 = vpop.f32.mrf.mxu0
    %v4699 = vpop.f32.mrf.mxu0
    %4700 = vdwg.mxu0
    %4701 = vmatprep.subr.bf16.mxu0 %v4210
    %4702 = vmatpush1.bf16.msra.mxu0 %v4209
    %4703 = vmatprep.subr.bf16.mxu0 %v4206
    %4704 = vmatpush1.bf16.msra.mxu0 %v4205
    %4705 = vmatprep.subr.bf16.mxu0 %v4202
    %4706 = vmatpush1.bf16.msra.mxu0 %v4201
    %4707 = vmatprep.subr.bf16.mxu0 %v4198
    %4708 = vmatpush1.bf16.msra.mxu0 %v4197
    %4709 = vmatprep.subr.bf16.mxu0 %v4194
    %4710 = vmatpush1.bf16.msra.mxu0 %v4193
    %4711 = vmatprep.subr.bf16.mxu0 %v4190
    %4712 = vmatpush1.bf16.msra.mxu0 %v4189
    %4713 = vmatprep.subr.bf16.mxu0 %v4186
    %4714 = vmatpush1.bf16.msra.mxu0 %v4185
    %4715 = vmatprep.subr.bf16.mxu0 %v4182
    %4716 = vmatpush1.bf16.msra.mxu0 %v4181
    %4717 = vmatprep.subr.bf16.mxu0 %v4242
    %4718 = vmatpush2.bf16.msra.mxu0 %v4241
    %4719 = vmatprep.subr.bf16.mxu0 %v4238
    %4720 = vmatpush2.bf16.msra.mxu0 %v4237
    %4721 = vmatprep.subr.bf16.mxu0 %v4234
    %4722 = vmatpush2.bf16.msra.mxu0 %v4233
    %4723 = vmatprep.subr.bf16.mxu0 %v4230
    %4724 = vmatpush2.bf16.msra.mxu0 %v4229
    %4725 = vmatprep.subr.bf16.mxu0 %v4226
    %4726 = vmatpush2.bf16.msra.mxu0 %v4225
    %4727 = vmatprep.subr.bf16.mxu0 %v4222
    %4728 = vmatpush2.bf16.msra.mxu0 %v4221
    %4729 = vmatprep.subr.bf16.mxu0 %v4218
    %4730 = vmatpush2.bf16.msra.mxu0 %v4217
    %4731 = vmatprep.subr.bf16.mxu0 %v4214
    %4732 = vmatpush2.bf16.msra.mxu0 %v4213
    %4733 = vmatprep.mubr.bf16.mxu0 %v3227
    %4734 = vmatmul.mubr.bf16.gmra.mxu0 %v3226
    %v4735 = vpop.f32.mrf.mxu0
    %v4736 = vadd.f32 %v4695, %v4735
    %v4737 = vpop.f32.mrf.mxu0
    %v4738 = vadd.f32 %v4697, %v4737
    %v4739 = vpop.f32.mrf.mxu0
    %v4740 = vpop.f32.mrf.mxu0
    %4741 = vdwg.mxu0
    %4742 = vmatprep.subr.bf16.mxu0 0
    %4743 = vmatpush1.bf16.msra.mxu0 0
    %4744 = vmatprep.subr.bf16.mxu0 0
    %4745 = vmatpush1.bf16.msra.mxu0 0
    %4746 = vmatprep.subr.bf16.mxu0 0
    %4747 = vmatpush1.bf16.msra.mxu0 0
    %4748 = vmatprep.subr.bf16.mxu0 0
    %4749 = vmatpush1.bf16.msra.mxu0 0
    %4750 = vmatprep.subr.bf16.mxu0 0
    %4751 = vmatpush1.bf16.msra.mxu0 0
    %4752 = vmatprep.subr.bf16.mxu0 0
    %4753 = vmatpush1.bf16.msra.mxu0 0
    %4754 = vmatprep.subr.bf16.mxu0 %v4250
    %4755 = vmatpush1.bf16.msra.mxu0 %v4249
    %4756 = vmatprep.subr.bf16.mxu0 %v4246
    %4757 = vmatpush1.bf16.msra.mxu0 %v4245
    %4758 = vmatprep.subr.bf16.mxu0 0
    %4759 = vmatpush2.bf16.msra.mxu0 0
    %4760 = vmatprep.subr.bf16.mxu0 0
    %4761 = vmatpush2.bf16.msra.mxu0 0
    %4762 = vmatprep.subr.bf16.mxu0 0
    %4763 = vmatpush2.bf16.msra.mxu0 0
    %4764 = vmatprep.subr.bf16.mxu0 0
    %4765 = vmatpush2.bf16.msra.mxu0 0
    %4766 = vmatprep.subr.bf16.mxu0 0
    %4767 = vmatpush2.bf16.msra.mxu0 0
    %4768 = vmatprep.subr.bf16.mxu0 0
    %4769 = vmatpush2.bf16.msra.mxu0 0
    %4770 = vmatprep.subr.bf16.mxu0 0
    %4771 = vmatpush2.bf16.msra.mxu0 0
    %4772 = vmatprep.subr.bf16.mxu0 0
    %4773 = vmatpush2.bf16.msra.mxu0 0
    %4774 = vmatprep.mubr.bf16.mxu0 0
    %4775 = vmatmul.mubr.bf16.gmra.mxu0 %v4453
    %v4776 = vpop.f32.mrf.mxu0
    %v4777 = vadd.f32 %v4736, %v4776
    %v4778 = vpop.f32.mrf.mxu0
    %v4779 = vadd.f32 %v4738, %v4778
    %v4780 = vpop.f32.mrf.mxu0
    %v4781 = vpop.f32.mrf.mxu0
    %4782 = vdwg.mxu0
    %v4783 = vmax.f32 %v4613, 0.0
    %v4784 = vmax.f32 %v4615, 0.0
    %v4785 = vmax.f32 %v4777, 0.0
    %v4786 = vmax.f32 %v4779, 0.0
    %v4787 = vpack.c.bf16 %v4783, %v4783
    %v4788 = vpack.c.bf16 %v4784, %v4784
    %v4789 = vpack.c.bf16 %v4785, %v4785
    %v4790 = vpack.c.bf16 %v4786, %v4786
    %v4791 = vld [vmem:[%s9] sm:$0xf]
    %v4792 = vld [vmem:[%s9 + $0x4] sm:$0xf]
    %v4793 = vld [vmem:[%s9 + $0x8] sm:$0xf]
    %v4794 = vld [vmem:[%s9 + $0xc] sm:$0xf]
    %v4795 = vld [vmem:[%s9 + $0x10] sm:$0xf]
    %v4796 = vld [vmem:[%s9 + $0x14] sm:$0xf]
    %v4797 = vld [vmem:[%s9 + $0x18] sm:$0xf]
    %v4798 = vld [vmem:[%s9 + $0x1c] sm:$0xf]
    %v4799 = vld [vmem:[%s9 + $0x20] sm:$0xf]
    %v4800 = vld [vmem:[%s9 + $0x24] sm:$0xf]
    %v4801 = vld [vmem:[%s9 + $0x28] sm:$0xf]
    %v4802 = vld [vmem:[%s9 + $0x2c] sm:$0xf]
    %v4803 = vld [vmem:[%s9 + $0x30] sm:$0xf]
    %v4804 = vld [vmem:[%s9 + $0x34] sm:$0xf]
    %v4805 = vld [vmem:[%s9 + $0x38] sm:$0xf]
    %v4806 = vld [vmem:[%s9 + $0x3c] sm:$0xf]
    %v4807 = vld [vmem:[%s9 + $0x40] sm:$0xf]
    %v4808 = vld [vmem:[%s9 + $0x44] sm:$0xf]
    %v4809 = vld [vmem:[%s9 + $0x48] sm:$0xf]
    %v4810 = vld [vmem:[%s9 + $0x4c] sm:$0xf]
    %v4811 = vld [vmem:[%s9 + $0x50] sm:$0xf]
    %v4812 = vld [vmem:[%s9 + $0x54] sm:$0xf]
    %v4813 = vld [vmem:[%s9 + $0x58] sm:$0xf]
    %v4814 = vld [vmem:[%s9 + $0x5c] sm:$0xf]
    %v4815 = vld [vmem:[%s9 + $0x60] sm:$0xf]
    %v4816 = vld [vmem:[%s9 + $0x64] sm:$0xf]
    %v4817 = vld [vmem:[%s9 + $0x68] sm:$0xf]
    %v4818 = vld [vmem:[%s9 + $0x6c] sm:$0xf]
    %v4819 = vld [vmem:[%s9 + $0x70] sm:$0xf]
    %v4820 = vld [vmem:[%s9 + $0x74] sm:$0xf]
    %v4821 = vld [vmem:[%s9 + $0x78] sm:$0xf]
    %v4822 = vld [vmem:[%s9 + $0x7c] sm:$0xf]
    %v4823 = vld [vmem:[%s9 + $0x80] sm:$0xf]
    %v4824 = vld [vmem:[%s9 + $0x84] sm:$0xf]
    %v4825 = vld [vmem:[%s9 + $0x88] sm:$0xf]
    %v4826 = vld [vmem:[%s9 + $0x8c] sm:$0xf]
    %v4827 = vld [vmem:[%s9 + $0x90] sm:$0xf]
    %v4828 = vld [vmem:[%s9 + $0x94] sm:$0xf]
    %v4829 = vld [vmem:[%s9 + $0x98] sm:$0xf]
    %v4830 = vld [vmem:[%s9 + $0x9c] sm:$0xf]
    %v4831 = vld [vmem:[%s9 + $0xa0] sm:$0xf]
    %v4832 = vld [vmem:[%s9 + $0xa4] sm:$0xf]
    %v4833 = vld [vmem:[%s9 + $0xa8] sm:$0xf]
    %v4834 = vld [vmem:[%s9 + $0xac] sm:$0xf]
    %v4835 = vld [vmem:[%s9 + $0xb0] sm:$0xf]
    %v4836 = vld [vmem:[%s9 + $0xb4] sm:$0xf]
    %v4837 = vld [vmem:[%s9 + $0xb8] sm:$0xf]
    %v4838 = vld [vmem:[%s9 + $0xbc] sm:$0xf]
    %v4839 = vld [vmem:[%s9 + $0xc0] sm:$0xf]
    %v4840 = vld [vmem:[%s9 + $0xc4] sm:$0xf]
    %v4841 = vld [vmem:[%s9 + $0xc8] sm:$0xf]
    %v4842 = vld [vmem:[%s9 + $0xcc] sm:$0xf]
    %v4843 = vld [vmem:[%s9 + $0xd0] sm:$0xf]
    %v4844 = vld [vmem:[%s9 + $0xd4] sm:$0xf]
    %v4845 = vld [vmem:[%s9 + $0xd8] sm:$0xf]
    %v4846 = vld [vmem:[%s9 + $0xdc] sm:$0xf]
    %v4847 = vld [vmem:[%s9 + $0xe0] sm:$0xf]
    %v4848 = vld [vmem:[%s9 + $0xe4] sm:$0xf]
    %v4849 = vld [vmem:[%s9 + $0xe8] sm:$0xf]
    %v4850 = vld [vmem:[%s9 + $0xec] sm:$0xf]
    %v4851 = vld [vmem:[%s9 + $0xf0] sm:$0xf]
    %v4852 = vld [vmem:[%s9 + $0xf4] sm:$0xf]
    %v4853 = vld [vmem:[%s9 + $0xf8] sm:$0x3]
    %v4854 = vld [vmem:[%s10] sm:$0x1]
    %v4856 = vlaneseq
    %v4857 = vshrl.u32 %v4856, 7
    %v4858 = vsub.s32 0, %v4857
    %v4859 = vrot.slane %v4854, %v4858
    %v4924 = vunpack.c.l.b16 %v4791
    %v4925 = vunpack.c.l.b16 %v4792
    %v4926 = vunpack.c.l.b16 %v4793
    %v4927 = vunpack.c.l.b16 %v4794
    %v4928 = vunpack.c.l.b16 %v4795
    %v4929 = vunpack.c.l.b16 %v4796
    %v4930 = vunpack.c.l.b16 %v4797
    %v4931 = vunpack.c.l.b16 %v4798
    %v4932 = vunpack.c.l.b16 %v4799
    %v4933 = vunpack.c.l.b16 %v4800
    %v4934 = vunpack.c.l.b16 %v4801
    %v4935 = vunpack.c.l.b16 %v4802
    %v4936 = vunpack.c.l.b16 %v4803
    %v4937 = vunpack.c.l.b16 %v4804
    %v4938 = vunpack.c.l.b16 %v4805
    %v4939 = vunpack.c.l.b16 %v4806
    %v4940 = vunpack.c.l.b16 %v4807
    %v4941 = vunpack.c.l.b16 %v4808
    %v4942 = vunpack.c.l.b16 %v4809
    %v4943 = vunpack.c.l.b16 %v4810
    %v4944 = vunpack.c.l.b16 %v4811
    %v4945 = vunpack.c.l.b16 %v4812
    %v4946 = vunpack.c.l.b16 %v4813
    %v4947 = vunpack.c.l.b16 %v4814
    %v4948 = vunpack.c.l.b16 %v4815
    %v4949 = vunpack.c.l.b16 %v4816
    %v4950 = vunpack.c.l.b16 %v4817
    %v4951 = vunpack.c.l.b16 %v4818
    %v4952 = vunpack.c.l.b16 %v4819
    %v4953 = vunpack.c.l.b16 %v4820
    %v4954 = vunpack.c.l.b16 %v4821
    %v4955 = vunpack.c.l.b16 %v4822
    %v4956 = vunpack.c.l.b16 %v4823
    %v4957 = vunpack.c.l.b16 %v4824
    %v4958 = vunpack.c.l.b16 %v4825
    %v4959 = vunpack.c.l.b16 %v4826
    %v4960 = vunpack.c.l.b16 %v4827
    %v4961 = vunpack.c.l.b16 %v4828
    %v4962 = vunpack.c.l.b16 %v4829
    %v4963 = vunpack.c.l.b16 %v4830
    %v4964 = vunpack.c.l.b16 %v4831
    %v4965 = vunpack.c.l.b16 %v4832
    %v4966 = vunpack.c.l.b16 %v4833
    %v4967 = vunpack.c.l.b16 %v4834
    %v4968 = vunpack.c.l.b16 %v4835
    %v4969 = vunpack.c.l.b16 %v4836
    %v4970 = vunpack.c.l.b16 %v4837
    %v4971 = vunpack.c.l.b16 %v4838
    %v4972 = vunpack.c.l.b16 %v4839
    %v4973 = vunpack.c.l.b16 %v4840
    %v4974 = vunpack.c.l.b16 %v4841
    %v4975 = vunpack.c.l.b16 %v4842
    %v4976 = vunpack.c.l.b16 %v4843
    %v4977 = vunpack.c.l.b16 %v4844
    %v4978 = vunpack.c.l.b16 %v4845
    %v4979 = vunpack.c.l.b16 %v4846
    %v4980 = vunpack.c.l.b16 %v4847
    %v4981 = vunpack.c.l.b16 %v4848
    %v4982 = vunpack.c.l.b16 %v4849
    %v4983 = vunpack.c.l.b16 %v4850
    %v4984 = vunpack.c.l.b16 %v4851
    %v4985 = vunpack.c.l.b16 %v4852
    %v4986 = vunpack.c.l.b16 %v4853
    %v4987 = vpack.c.b16 %v4925, %v4924
    %v4988 = vpack.c.b16 %v4927, %v4926
    %v4989 = vpack.c.b16 %v4929, %v4928
    %v4990 = vpack.c.b16 %v4931, %v4930
    %v4991 = vpack.c.b16 %v4933, %v4932
    %v4992 = vpack.c.b16 %v4935, %v4934
    %v4993 = vpack.c.b16 %v4937, %v4936
    %v4994 = vpack.c.b16 %v4939, %v4938
    %v4995 = vpack.c.b16 %v4941, %v4940
    %v4996 = vpack.c.b16 %v4943, %v4942
    %v4997 = vpack.c.b16 %v4945, %v4944
    %v4998 = vpack.c.b16 %v4947, %v4946
    %v4999 = vpack.c.b16 %v4949, %v4948
    %v5000 = vpack.c.b16 %v4951, %v4950
    %v5001 = vpack.c.b16 %v4953, %v4952
    %v5002 = vpack.c.b16 %v4955, %v4954
    %v5003 = vpack.c.b16 %v4957, %v4956
    %v5004 = vpack.c.b16 %v4959, %v4958
    %v5005 = vpack.c.b16 %v4961, %v4960
    %v5006 = vpack.c.b16 %v4963, %v4962
    %v5007 = vpack.c.b16 %v4965, %v4964
    %v5008 = vpack.c.b16 %v4967, %v4966
    %v5009 = vpack.c.b16 %v4969, %v4968
    %v5010 = vpack.c.b16 %v4971, %v4970
    %v5011 = vpack.c.b16 %v4973, %v4972
    %v5012 = vpack.c.b16 %v4975, %v4974
    %v5013 = vpack.c.b16 %v4977, %v4976
    %v5014 = vpack.c.b16 %v4979, %v4978
    %v5015 = vpack.c.b16 %v4981, %v4980
    %v5016 = vpack.c.b16 %v4983, %v4982
    %v5017 = vpack.c.b16 %v4985, %v4984
    %v5018 = vpack.c.b16 %v4986, %v4986
    %vm5050 = vcmask 949248
    %v5052 = vsel %vm5050, %v4790, 0
    %vm5054 = vcmask 1041408
    %v5056 = vsel %vm5054, %v5018, 0
    %5058 = vmatprep.subr.bf16.mxu0 0
    %5059 = vmatpush1.bf16.msra.mxu0 %v4994
    %5060 = vmatprep.subr.bf16.mxu0 0
    %5061 = vmatpush1.bf16.msra.mxu0 %v4993
    %5062 = vmatprep.subr.bf16.mxu0 0
    %5063 = vmatpush1.bf16.msra.mxu0 %v4992
    %5064 = vmatprep.subr.bf16.mxu0 0
    %5065 = vmatpush1.bf16.msra.mxu0 %v4991
    %5066 = vmatprep.subr.bf16.mxu0 0
    %5067 = vmatpush1.bf16.msra.mxu0 %v4990
    %5068 = vmatprep.subr.bf16.mxu0 0
    %5069 = vmatpush1.bf16.msra.mxu0 %v4989
    %5070 = vmatprep.subr.bf16.mxu0 0
    %5071 = vmatpush1.bf16.msra.mxu0 %v4988
    %5072 = vmatprep.subr.bf16.mxu0 0
    %5073 = vmatpush1.bf16.msra.mxu0 %v4987
    %5074 = vmatprep.subr.bf16.mxu0 0
    %5075 = vmatpush2.bf16.msra.mxu0 %v5002
    %5076 = vmatprep.subr.bf16.mxu0 0
    %5077 = vmatpush2.bf16.msra.mxu0 %v5001
    %5078 = vmatprep.subr.bf16.mxu0 0
    %5079 = vmatpush2.bf16.msra.mxu0 %v5000
    %5080 = vmatprep.subr.bf16.mxu0 0
    %5081 = vmatpush2.bf16.msra.mxu0 %v4999
    %5082 = vmatprep.subr.bf16.mxu0 0
    %5083 = vmatpush2.bf16.msra.mxu0 %v4998
    %5084 = vmatprep.subr.bf16.mxu0 0
    %5085 = vmatpush2.bf16.msra.mxu0 %v4997
    %5086 = vmatprep.subr.bf16.mxu0 0
    %5087 = vmatpush2.bf16.msra.mxu0 %v4996
    %5088 = vmatprep.subr.bf16.mxu0 0
    %5089 = vmatpush2.bf16.msra.mxu0 %v4995
    %5090 = vmatprep.mubr.bf16.mxu0 %v4788
    %5091 = vmatmul.mubr.bf16.gmra.mxu0 %v4787
    %v5092 = vpop.f32.mrf.mxu0
    %v5093 = vadd.f32 %v4859, %v5092
    %v5094 = vpop.f32.mrf.mxu0
    %v5095 = vpop.f32.mrf.mxu0
    %v5096 = vpop.f32.mrf.mxu0
    %5097 = vdwg.mxu0
    %5098 = vmatprep.subr.bf16.mxu0 0
    %5099 = vmatpush1.bf16.msra.mxu0 %v5010
    %5100 = vmatprep.subr.bf16.mxu0 0
    %5101 = vmatpush1.bf16.msra.mxu0 %v5009
    %5102 = vmatprep.subr.bf16.mxu0 0
    %5103 = vmatpush1.bf16.msra.mxu0 %v5008
    %5104 = vmatprep.subr.bf16.mxu0 0
    %5105 = vmatpush1.bf16.msra.mxu0 %v5007
    %5106 = vmatprep.subr.bf16.mxu0 0
    %5107 = vmatpush1.bf16.msra.mxu0 %v5006
    %5108 = vmatprep.subr.bf16.mxu0 0
    %5109 = vmatpush1.bf16.msra.mxu0 %v5005
    %5110 = vmatprep.subr.bf16.mxu0 0
    %5111 = vmatpush1.bf16.msra.mxu0 %v5004
    %5112 = vmatprep.subr.bf16.mxu0 0
    %5113 = vmatpush1.bf16.msra.mxu0 %v5003
    %5114 = vmatprep.subr.bf16.mxu0 0
    %5115 = vmatpush2.bf16.msra.mxu0 %v5056
    %5116 = vmatprep.subr.bf16.mxu0 0
    %5117 = vmatpush2.bf16.msra.mxu0 %v5017
    %5118 = vmatprep.subr.bf16.mxu0 0
    %5119 = vmatpush2.bf16.msra.mxu0 %v5016
    %5120 = vmatprep.subr.bf16.mxu0 0
    %5121 = vmatpush2.bf16.msra.mxu0 %v5015
    %5122 = vmatprep.subr.bf16.mxu0 0
    %5123 = vmatpush2.bf16.msra.mxu0 %v5014
    %5124 = vmatprep.subr.bf16.mxu0 0
    %5125 = vmatpush2.bf16.msra.mxu0 %v5013
    %5126 = vmatprep.subr.bf16.mxu0 0
    %5127 = vmatpush2.bf16.msra.mxu0 %v5012
    %5128 = vmatprep.subr.bf16.mxu0 0
    %5129 = vmatpush2.bf16.msra.mxu0 %v5011
    %5130 = vmatprep.mubr.bf16.mxu0 %v5052
    %5131 = vmatmul.mubr.bf16.gmra.mxu0 %v4789
    %v5132 = vpop.f32.mrf.mxu0
    %v5133 = vadd.f32 %v5093, %v5132
    %v5134 = vpop.f32.mrf.mxu0
    %v5135 = vpop.f32.mrf.mxu0
    %v5136 = vpop.f32.mrf.mxu0
    %5137 = vdwg.mxu0
    %vm5138 = vcmask 74752
    %5139 = vst.msk [vmem:[#allocation2] sm:$0x3] %vm5138, %v5133
    // Predicated region
    $region46: #{lenet_forward.1} parent=1 // pred_check
      _
    $region47: #{lenet_forward.1} parent=1 // pred_check_branch
      %5141 = sbr.rel (0) target = $region49
    $region48: #{lenet_forward.1} parent=1 // pred_region
      %s5143 = ssub.s32 32, 32
      %5144 = vsyncadd [#allocation3], %s5143
      %s5146 = sshll.u32 [#allocation2], 4
      %s5147 = int_to_ptr.vmem [resolvable:$true] %s5146
      %5149 = dma.vmem_to_hbm [thread:$0]  %s5147, 32, %s11, [#allocation3]
    $region49: #{lenet_forward.1} parent=1 // pred_fallthru
      _
    // Predicated region
    $region50: #{lenet_forward.1} parent=1 // pred_check
      _
    $region51: #{lenet_forward.1} parent=1 // pred_check_branch
      %5151 = sbr.rel (0) target = $region53
    $region52: #{lenet_forward.1} parent=1 // pred_region
      %5152 = dma.done [#allocation3], 32
    $region53: #{lenet_forward.1} parent=1 // pred_fallthru
      _
    %5153 = vsyncpa [#allocation3], 1

</llo_original>
